<compile_context>
chip_gen: v7x
topology: tpu7x:2x2x1
jax: 0.10.0
libtpu: 0.0.40
codegen_flags: <defaults>
</compile_context>

<pallas_src>
import jax
import jax.numpy as jnp
from jax.experimental import pallas as pl
from jax.experimental.pallas import tpu as pltpu


def _round_up(x, m):
    return ((x + m - 1) // m) * m


def bilstm_kernel(x_ref, maskf_ref, maski_ref,
                  wih_f_ref, wih_b_ref, b_f_ref, b_b_ref,
                  whh_ref, w_top_ref, w_bot_ref, b_tag_ref,
                  out_ref,
                  gf_ref, gb_ref, fh_ref, bh_ref):
    """Whole-sequence bidirectional LSTM + hidden2tag + masked argmax decode.

    x_ref      : (S, TB, D)   bf16 time-major embeddings (batch tile)
    maskf_ref  : (S, TB, 1)   f32  sequence mask (carry gating)
    maski_ref  : (TB, S)      i32  sequence mask (decode masking, batch-major)
    wih_f/b    : (D, 4H)      bf16 input->gate weights per direction
    b_f/b_b    : (1, 4H)      f32  gate biases per direction
    whh_ref    : (2H, 8H)     f32  block-diagonal [whh_f, 0; 0, whh_b]
    w_top/bot  : (H, Lp)      bf16 hidden2tag split (fwd half / bwd half)
    b_tag_ref  : (1, Lp)      f32  (padded label columns hold -1e30)
    out_ref    : (TB, S)      i32  masked argmax tag ids (batch-major)
    gf/gb_ref  : (S, TB, 4H)  f32  scratch: precomputed input projections
    fh/bh_ref  : (S, TB, H)   bf16 scratch: per-direction hidden sequences
    """
    S, B, D = x_ref.shape
    H4 = wih_f_ref.shape[1]
    H = H4 // 4
    Lp = w_top_ref.shape[1]

    # ---- hoisted input projection: two bf16 matmuls straight into scratches ----
    x2d = x_ref[...].reshape(S * B, D)
    gf_ref[...] = (jnp.dot(x2d, wih_f_ref[...], preferred_element_type=jnp.float32)
                   + b_f_ref[...]).reshape(S, B, H4)
    gb_ref[...] = (jnp.dot(x2d, wih_b_ref[...], preferred_element_type=jnp.float32)
                   + b_b_ref[...]).reshape(S, B, H4)

    whh = whh_ref[...]                                   # (2H, 8H) block-diagonal

    def gates_to_hc(gates, c):
        # gates: (B, 4H) in PyTorch LSTM order [i, f, g, o]
        i = jax.nn.sigmoid(gates[:, 0 * H:1 * H])
        f = jax.nn.sigmoid(gates[:, 1 * H:2 * H])
        g = jnp.tanh(gates[:, 2 * H:3 * H])
        o = jax.nn.sigmoid(gates[:, 3 * H:4 * H])
        c_new = f * c + i * g
        return o * jnp.tanh(c_new), c_new

    h0 = jnp.zeros((B, H), jnp.float32)
    c0 = jnp.zeros((B, H), jnp.float32)

    # ---- interleaved fwd/bwd recurrence: ONE fused MXU push per step ----
    def body(t, carry):
        h_f, c_f, h_b, c_b = carry
        tb = S - 1 - t

        h_cat = jnp.concatenate([h_f, h_b], axis=-1)                      # (B, 2H)
        g_rec = jnp.dot(h_cat, whh, preferred_element_type=jnp.float32)   # (B, 8H)

        hf_new, cf_new = gates_to_hc(gf_ref[t] + g_rec[:, :H4], c_f)
        hb_new, cb_new = gates_to_hc(gb_ref[tb] + g_rec[:, H4:], c_b)

        m_f = maskf_ref[t] > 0.0                          # (B, 1) bool -> single select
        m_b = maskf_ref[tb] > 0.0
        h_f = jnp.where(m_f, hf_new, h_f)
        c_f = jnp.where(m_f, cf_new, c_f)
        h_b = jnp.where(m_b, hb_new, h_b)
        c_b = jnp.where(m_b, cb_new, c_b)

        fh_ref[t] = h_f.astype(fh_ref.dtype)
        bh_ref[tb] = h_b.astype(bh_ref.dtype)
        return (h_f, c_f, h_b, c_b)

    unroll = True if S <= 32 else 8
    jax.lax.fori_loop(0, S, body, (h0, c0, h0, c0), unroll=unroll)

    # ---- hidden2tag (split weight, bf16 operands, f32 logits) + argmax decode ----
    fh2d = fh_ref[...].reshape(S * B, H)
    bh2d = bh_ref[...].reshape(S * B, H)
    logits = (jnp.dot(fh2d, w_top_ref[...], preferred_element_type=jnp.float32)
              + jnp.dot(bh2d, w_bot_ref[...], preferred_element_type=jnp.float32)
              + b_tag_ref[...]).reshape(S, B, Lp)

    # first-index argmax (matches torch.max tie-breaking); padded labels never win
    lane_idx = jax.lax.broadcasted_iota(jnp.int32, logits.shape, dimension=2)
    is_max = logits == jnp.max(logits, axis=-1, keepdims=True)
    tags = jnp.min(jnp.where(is_max, lane_idx, jnp.int32(Lp)), axis=-1)    # (S, B)

    out_ref[...] = maski_ref[...] * jnp.transpose(tags)                    # (B, S)


def _pad_gates(w, H, H_pad):
    """Zero-pad each [i|f|g|o] gate slab of a (..., 4H) weight/bias to (..., 4*H_pad)."""
    pads = [(0, 0)] * (w.ndim - 1) + [(0, H_pad - H)]
    return jnp.concatenate(
        [jnp.pad(w[..., k * H:(k + 1) * H], pads) for k in range(4)], axis=-1)


def bilstm_forward(params, char_inputs, bichar_inputs, mask):
    """Glue: padding, time-major embedding gather, batch-tiled pallas_call."""
    B, S = char_inputs.shape
    D = params["char_emb"].shape[1] + params["bichar_emb"].shape[1]
    H = params["whh_f"].shape[0]
    L = params["w_tag"].shape[1]

    # lane-density padding: 4*H_pad % 128 == 0, label dim padded to a full vreg.
    # Zero-padded hidden channels stay exactly 0 through the recurrence; -1e30 bias
    # columns never win the argmax.
    H_pad = _round_up(max(H, 32), 32)
    L_pad = _round_up(max(L, 128), 128)

    # ---- batch tile from VMEM budget (2x-buffered I/O + per-tile scratches) ----
    VMEM_BUDGET = 40 << 20           # conservative: fits v7x 64 MiB with headroom
    def tile_bytes(tb):
        io = 2 * (S * tb * D * 2 + S * tb * 4 + 2 * tb * S * 4)           # x + masks + out
        scratch = 2 * S * tb * 4 * H_pad * 4 + 2 * S * tb * H_pad * 2      # gf+gb f32, fh+bh bf16
        return io + scratch
    TB = 256
    while TB > 8 and tile_bytes(TB) > VMEM_BUDGET:
        TB //= 2
    TB = min(TB, _round_up(B, 8))
    B_pad = _round_up(max(B, TB), TB)
    pad = B_pad - B

    char_p = jnp.pad(char_inputs, ((0, pad), (0, 0)))
    bichar_p = jnp.pad(bichar_inputs, ((0, pad), (0, 0)))
    mask_p = jnp.pad(mask, ((0, pad), (0, 0))).astype(jnp.int32)            # (B_pad, S)

    # gather embeddings directly in time-major (S, B) order: transpose the tiny
    # int32 id tensors instead of the (B, S, D) activations.
    char_embs = jnp.take(params["char_emb"], jnp.transpose(char_p), axis=0)
    bichar_embs = jnp.take(params["bichar_emb"], jnp.transpose(bichar_p), axis=0)
    x_sbd = jnp.concatenate([char_embs, bichar_embs], axis=-1).astype(jnp.bfloat16)
    # drop / droplstm == identity (inference semantics of forward())

    maskf = jnp.transpose(mask_p).astype(jnp.float32)[..., None]            # (S, B_pad, 1)
    maski = mask_p                                                           # (B_pad, S)

    # ---- weight prep (per-gate padding, bf16 for the big matmuls) ----
    wih_f = _pad_gates(params["wih_f"], H, H_pad).astype(jnp.bfloat16)       # (D, 4H_pad)
    wih_b = _pad_gates(params["wih_b"], H, H_pad).astype(jnp.bfloat16)
    b_f = _pad_gates(params["b_f"], H, H_pad)                                # (1, 4H_pad) f32
    b_b = _pad_gates(params["b_b"], H, H_pad)

    whh_f = _pad_gates(jnp.pad(params["whh_f"], ((0, H_pad - H), (0, 0))), H, H_pad)
    whh_b = _pad_gates(jnp.pad(params["whh_b"], ((0, H_pad - H), (0, 0))), H, H_pad)
    zero = jnp.zeros((H_pad, 4 * H_pad), jnp.float32)
    whh = jnp.block([[whh_f, zero], [zero, whh_b]])                          # (2H_pad, 8H_pad)

    w_top = jnp.pad(params["w_tag"][:H], ((0, H_pad - H), (0, L_pad - L))).astype(jnp.bfloat16)
    w_bot = jnp.pad(params["w_tag"][H:], ((0, H_pad - H), (0, L_pad - L))).astype(jnp.bfloat16)
    b_tag = jnp.pad(params["b_tag"], ((0, 0), (0, L_pad - L)), constant_values=-1e30)

    # ---- pallas_call: batch-tiled parallel grid ----
    weight_vmem = pl.BlockSpec(memory_space=pltpu.MemorySpace.VMEM)
    grid = (B_pad // TB,)

    flops = int(2 * S * B_pad * D * 8 * H_pad              # input projection (both dirs)
                + 2 * S * B_pad * 2 * H_pad * 8 * H_pad    # fused recurrent matmul
                + 2 * S * B_pad * 2 * H_pad * L_pad)       # hidden2tag
    transcend = int(10 * S * B_pad * H_pad)
    bytes_acc = int(x_sbd.size * 2 + maskf.size * 4 + maski.size * 4 + B_pad * S * 4
                    + (wih_f.size + wih_b.size + w_top.size + w_bot.size) * 2
                    + (whh.size + b_f.size + b_b.size + b_tag.size) * 4)

    out = pl.pallas_call(
        bilstm_kernel,
        out_shape=jax.ShapeDtypeStruct((B_pad, S), jnp.int32),
        grid=grid,
        in_specs=[
            pl.BlockSpec((S, TB, D), lambda b: (0, b, 0)),    # x (bf16)
            pl.BlockSpec((S, TB, 1), lambda b: (0, b, 0)),    # mask for gating (f32)
            pl.BlockSpec((TB, S), lambda b: (b, 0)),          # mask for decode (i32)
            weight_vmem, weight_vmem, weight_vmem, weight_vmem,   # wih_f, wih_b, b_f, b_b
            weight_vmem,                                           # whh (block-diagonal)
            weight_vmem, weight_vmem, weight_vmem,                 # w_top, w_bot, b_tag
        ],
        out_specs=pl.BlockSpec((TB, S), lambda b: (b, 0)),
        scratch_shapes=[
            pltpu.VMEM((S, TB, 4 * H_pad), jnp.float32),      # gf: precomputed fwd gates
            pltpu.VMEM((S, TB, 4 * H_pad), jnp.float32),      # gb: precomputed bwd gates
            pltpu.VMEM((S, TB, H_pad), jnp.bfloat16),         # fh: fwd hidden sequence
            pltpu.VMEM((S, TB, H_pad), jnp.bfloat16),         # bh: bwd hidden sequence
        ],
        compiler_params=pltpu.CompilerParams(
            dimension_semantics=("parallel",),
            vmem_limit_bytes=48 << 20),
        cost_estimate=pl.CostEstimate(flops=flops, transcendentals=transcend,
                                      bytes_accessed=bytes_acc),
    )(x_sbd, maskf, maski, wih_f, wih_b, b_f, b_b, whh, w_top, w_bot, b_tag)

    return out[:B]                                            # (B, S) int32


def init_params(key, char_vocab, bichar_vocab, char_emb_dim, bichar_emb_dim,
                hidden_dim, label_size):
    """Deterministic synthetic parameters mirroring the module's __init__ shapes."""
    lstm_input = char_emb_dim + bichar_emb_dim      # use_bichar=True
    H = hidden_dim // 2                             # bilstm_flag=True -> lstm_hidden
    ks = jax.random.split(key, 12)

    def u(k, shape, scale):
        return jax.random.uniform(k, shape, jnp.float32, -scale, scale)

    emb_scale_c = (3.0 / char_emb_dim) ** 0.5
    emb_scale_b = (3.0 / bichar_emb_dim) ** 0.5
    lstm_scale = 1.0 / (H ** 0.5)
    tag_scale = 1.0 / (hidden_dim ** 0.5)

    return {
        "char_emb": u(ks[0], (char_vocab, char_emb_dim), emb_scale_c),
        "bichar_emb": u(ks[1], (bichar_vocab, bichar_emb_dim), emb_scale_b),
        "wih_f": u(ks[2], (lstm_input, 4 * H), lstm_scale),
        "whh_f": u(ks[3], (H, 4 * H), lstm_scale),
        "b_f": u(ks[4], (1, 4 * H), lstm_scale),
        "wih_b": u(ks[5], (lstm_input, 4 * H), lstm_scale),
        "whh_b": u(ks[6], (H, 4 * H), lstm_scale),
        "b_b": u(ks[7], (1, 4 * H), lstm_scale),
        "w_tag": u(ks[8], (hidden_dim, label_size), tag_scale),
        "b_tag": u(ks[9], (1, label_size), tag_scale),
    }


if __name__ == "__main__":
    # small, deterministic example shapes
    B, S = 2, 8
    CHAR_VOCAB, BICHAR_VOCAB = 100, 200
    CHAR_EMB, BICHAR_EMB = 24, 8          # lstm_input = 32
    HIDDEN_DIM = 32                       # per-direction H = 16 (padded to 32 in-kernel)
    LABEL_SIZE = 8

    key = jax.random.PRNGKey(0)
    kp, kc, kb = jax.random.split(key, 3)

    params = init_params(kp, CHAR_VOCAB, BICHAR_VOCAB, CHAR_EMB, BICHAR_EMB,
                         HIDDEN_DIM, LABEL_SIZE)

    char_inputs = jax.random.randint(kc, (B, S), 1, CHAR_VOCAB, dtype=jnp.int32)
    bichar_inputs = jax.random.randint(kb, (B, S), 1, BICHAR_VOCAB, dtype=jnp.int32)

    char_seq_lengths = jnp.array([S, 5], dtype=jnp.int32)
    mask = (jnp.arange(S)[None, :] < char_seq_lengths[:, None]).astype(jnp.int32)  # (B,S)

    decode_seq = bilstm_forward(params, char_inputs, bichar_inputs, mask)
    decode_seq = jax.block_until_ready(decode_seq)

    assert decode_seq.shape == (B, S) and decode_seq.dtype == jnp.int32
    # masked (padded) positions must decode to 0, like mask.long() * tag_seq
    assert bool(jnp.all(decode_seq[1, 5:] == 0))
    print("KERNEL_OK")
</pallas_src>

<mosaic_0001>
module attributes {stable_mosaic.version = 11 : i64} {
  func.func @bilstm_kernel(%arg0: i32, %arg1: memref<8x8x32xbf16, #tpu.memory_space<vmem>>, %arg2: memref<8x8x1xf32, #tpu.memory_space<vmem>>, %arg3: memref<8x8xi32, #tpu.memory_space<vmem>>, %arg4: memref<32x128xbf16, #tpu.memory_space<vmem>>, %arg5: memref<32x128xbf16, #tpu.memory_space<vmem>>, %arg6: memref<1x128xf32, #tpu.memory_space<vmem>>, %arg7: memref<1x128xf32, #tpu.memory_space<vmem>>, %arg8: memref<64x256xf32, #tpu.memory_space<vmem>>, %arg9: memref<32x128xbf16, #tpu.memory_space<vmem>>, %arg10: memref<32x128xbf16, #tpu.memory_space<vmem>>, %arg11: memref<1x128xf32, #tpu.memory_space<vmem>>, %arg12: memref<8x8xi32, #tpu.memory_space<vmem>>, %arg13: memref<8x8x128xf32, #tpu.memory_space<vmem>>, %arg14: memref<8x8x128xf32, #tpu.memory_space<vmem>>, %arg15: memref<8x8x32xbf16, #tpu.memory_space<vmem>>, %arg16: memref<8x8x32xbf16, #tpu.memory_space<vmem>>) attributes {dimension_semantics = [#tpu.dimension_semantics<parallel>], iteration_bounds = array<i64: 1>, scalar_prefetch = 0 : i64, scratch_operands = 4 : i64, tpu.core_type = #tpu.core_type<tc>, window_params = [{transform_indices = @transform_0, window_bounds = array<i64: 8, 8, 32>}, {transform_indices = @transform_1, window_bounds = array<i64: 8, 8, 1>}, {transform_indices = @transform_2, window_bounds = array<i64: 8, 8>}, {pipeline_mode = #tpu.pipeline_mode<synchronous>, transform_indices = @transform_3, window_bounds = array<i64: 32, 128>}, {pipeline_mode = #tpu.pipeline_mode<synchronous>, transform_indices = @transform_4, window_bounds = array<i64: 32, 128>}, {pipeline_mode = #tpu.pipeline_mode<synchronous>, transform_indices = @transform_5, window_bounds = array<i64: 1, 128>}, {pipeline_mode = #tpu.pipeline_mode<synchronous>, transform_indices = @transform_6, window_bounds = array<i64: 1, 128>}, {pipeline_mode = #tpu.pipeline_mode<synchronous>, transform_indices = @transform_7, window_bounds = array<i64: 64, 256>}, {pipeline_mode = #tpu.pipeline_mode<synchronous>, transform_indices = @transform_8, window_bounds = array<i64: 32, 128>}, {pipeline_mode = #tpu.pipeline_mode<synchronous>, transform_indices = @transform_9, window_bounds = array<i64: 32, 128>}, {pipeline_mode = #tpu.pipeline_mode<synchronous>, transform_indices = @transform_10, window_bounds = array<i64: 1, 128>}, {transform_indices = @transform_11, window_bounds = array<i64: 8, 8>}]} {
    %c0 = arith.constant 0 : index
    %c0_0 = arith.constant 0 : index
    %c0_1 = arith.constant 0 : index
    %0 = vector.load %arg1[%c0, %c0_0, %c0_1] : memref<8x8x32xbf16, #tpu.memory_space<vmem>>, vector<8x8x32xbf16>
    %1 = vector.shape_cast %0 : vector<8x8x32xbf16> to vector<64x32xbf16>
    %c0_2 = arith.constant 0 : index
    %c0_3 = arith.constant 0 : index
    %2 = vector.load %arg4[%c0_2, %c0_3] : memref<32x128xbf16, #tpu.memory_space<vmem>>, vector<32x128xbf16>
    %cst = arith.constant dense<0.000000e+00> : vector<64x128xf32>
    %3 = tpu.matmul %1, %2, %cst {dimension_numbers = #tpu.dot_dimension_numbers<[1], [0], [0], [1], [0, 0, 1, 1], [], []>} : vector<64x32xbf16>, vector<32x128xbf16>, vector<64x128xf32> -> vector<64x128xf32>
    %c0_4 = arith.constant 0 : index
    %c0_5 = arith.constant 0 : index
    %4 = vector.load %arg6[%c0_4, %c0_5] : memref<1x128xf32, #tpu.memory_space<vmem>>, vector<1x128xf32>
    %5 = vector.broadcast %4 : vector<1x128xf32> to vector<64x128xf32>
    %6 = arith.addf %3, %5 : vector<64x128xf32>
    %7 = vector.shape_cast %6 : vector<64x128xf32> to vector<8x8x128xf32>
    %c0_6 = arith.constant 0 : index
    %c0_7 = arith.constant 0 : index
    %c0_8 = arith.constant 0 : index
    %8 = vector.load %arg13[%c0_6, %c0_7, %c0_8] : memref<8x8x128xf32, #tpu.memory_space<vmem>>, vector<8x8x128xf32>
    tpu.vector_store %arg13[%c0_6, %c0_7, %c0_8], %7 {strides = array<i32>} : memref<8x8x128xf32, #tpu.memory_space<vmem>>, vector<8x8x128xf32>,
    %c0_9 = arith.constant 0 : index
    %c0_10 = arith.constant 0 : index
    %9 = vector.load %arg5[%c0_9, %c0_10] : memref<32x128xbf16, #tpu.memory_space<vmem>>, vector<32x128xbf16>
    %cst_11 = arith.constant dense<0.000000e+00> : vector<64x128xf32>
    %10 = tpu.matmul %1, %9, %cst_11 {dimension_numbers = #tpu.dot_dimension_numbers<[1], [0], [0], [1], [0, 0, 1, 1], [], []>} : vector<64x32xbf16>, vector<32x128xbf16>, vector<64x128xf32> -> vector<64x128xf32>
    %c0_12 = arith.constant 0 : index
    %c0_13 = arith.constant 0 : index
    %11 = vector.load %arg7[%c0_12, %c0_13] : memref<1x128xf32, #tpu.memory_space<vmem>>, vector<1x128xf32>
    %12 = vector.broadcast %11 : vector<1x128xf32> to vector<64x128xf32>
    %13 = arith.addf %10, %12 : vector<64x128xf32>
    %14 = vector.shape_cast %13 : vector<64x128xf32> to vector<8x8x128xf32>
    %c0_14 = arith.constant 0 : index
    %c0_15 = arith.constant 0 : index
    %c0_16 = arith.constant 0 : index
    %15 = vector.load %arg14[%c0_14, %c0_15, %c0_16] : memref<8x8x128xf32, #tpu.memory_space<vmem>>, vector<8x8x128xf32>
    tpu.vector_store %arg14[%c0_14, %c0_15, %c0_16], %14 {strides = array<i32>} : memref<8x8x128xf32, #tpu.memory_space<vmem>>, vector<8x8x128xf32>,
    %c0_17 = arith.constant 0 : index
    %c0_18 = arith.constant 0 : index
    %16 = vector.load %arg8[%c0_17, %c0_18] : memref<64x256xf32, #tpu.memory_space<vmem>>, vector<64x256xf32>
    %cst_19 = arith.constant 0.000000e+00 : f32
    %17 = vector.broadcast %cst_19 : f32 to vector<8x32xf32>
    %cst_20 = arith.constant 0.000000e+00 : f32
    %18 = vector.broadcast %cst_20 : f32 to vector<8x32xf32>
    %c0_i32 = arith.constant 0 : i32
    %c7_i32 = arith.constant 7 : i32
    %19 = arith.subi %c7_i32, %c0_i32 : i32
    %20 = tpu.concatenate %17, %17 in 1 : vector<8x32xf32>, vector<8x32xf32> -> vector<8x64xf32>
    %cst_21 = arith.constant dense<0.000000e+00> : vector<8x256xf32>
    %21 = tpu.matmul %20, %16, %cst_21 {dimension_numbers = #tpu.dot_dimension_numbers<[1], [0], [0], [1], [0, 0, 1, 1], [], []>} : vector<8x64xf32>, vector<64x256xf32>, vector<8x256xf32> -> vector<8x256xf32>
    %22 = arith.index_cast %c0_i32 : i32 to index
    %c0_22 = arith.constant 0 : index
    %c0_23 = arith.constant 0 : index
    %23 = vector.load %arg13[%22, %c0_22, %c0_23] : memref<8x8x128xf32, #tpu.memory_space<vmem>>, vector<1x8x128xf32>
    %24 = vector.shape_cast %23 : vector<1x8x128xf32> to vector<8x128xf32>
    %25 = vector.extract_strided_slice %21 {offsets = [0, 0], sizes = [8, 128], strides = [1, 1]} : vector<8x256xf32> to vector<8x128xf32>
    %26 = arith.addf %24, %25 : vector<8x128xf32>
    %27 = vector.extract_strided_slice %26 {offsets = [0, 0], sizes = [8, 32], strides = [1, 1]} : vector<8x128xf32> to vector<8x32xf32>
    %28 = arith.negf %27 : vector<8x32xf32>
    %29 = math.exp %28 : vector<8x32xf32>
    %cst_24 = arith.constant 1.000000e+00 : f32
    %30 = vector.broadcast %cst_24 : f32 to vector<8x32xf32>
    %31 = arith.addf %30, %29 : vector<8x32xf32>
    %32 = arith.divf %30, %31 : vector<8x32xf32>
    %33 = vector.extract_strided_slice %26 {offsets = [0, 32], sizes = [8, 32], strides = [1, 1]} : vector<8x128xf32> to vector<8x32xf32>
    %34 = arith.negf %33 : vector<8x32xf32>
    %35 = math.exp %34 : vector<8x32xf32>
    %cst_25 = arith.constant 1.000000e+00 : f32
    %36 = vector.broadcast %cst_25 : f32 to vector<8x32xf32>
    %37 = arith.addf %36, %35 : vector<8x32xf32>
    %38 = arith.divf %36, %37 : vector<8x32xf32>
    %39 = vector.extract_strided_slice %26 {offsets = [0, 64], sizes = [8, 32], strides = [1, 1]} : vector<8x128xf32> to vector<8x32xf32>
    %40 = math.tanh %39 : vector<8x32xf32>
    %41 = vector.extract_strided_slice %26 {offsets = [0, 96], sizes = [8, 32], strides = [1, 1]} : vector<8x128xf32> to vector<8x32xf32>
    %42 = arith.negf %41 : vector<8x32xf32>
    %43 = math.exp %42 : vector<8x32xf32>
    %cst_26 = arith.constant 1.000000e+00 : f32
    %44 = vector.broadcast %cst_26 : f32 to vector<8x32xf32>
    %45 = arith.addf %44, %43 : vector<8x32xf32>
    %46 = arith.divf %44, %45 : vector<8x32xf32>
    %47 = arith.mulf %38, %18 : vector<8x32xf32>
    %48 = arith.mulf %32, %40 : vector<8x32xf32>
    %49 = arith.addf %47, %48 : vector<8x32xf32>
    %50 = math.tanh %49 : vector<8x32xf32>
    %51 = arith.mulf %46, %50 : vector<8x32xf32>
    %52 = arith.index_cast %19 : i32 to index
    %c0_27 = arith.constant 0 : index
    %c0_28 = arith.constant 0 : index
    %53 = vector.load %arg14[%52, %c0_27, %c0_28] : memref<8x8x128xf32, #tpu.memory_space<vmem>>, vector<1x8x128xf32>
    %54 = vector.shape_cast %53 : vector<1x8x128xf32> to vector<8x128xf32>
    %55 = vector.extract_strided_slice %21 {offsets = [0, 128], sizes = [8, 128], strides = [1, 1]} : vector<8x256xf32> to vector<8x128xf32>
    %56 = arith.addf %54, %55 : vector<8x128xf32>
    %57 = vector.extract_strided_slice %56 {offsets = [0, 0], sizes = [8, 32], strides = [1, 1]} : vector<8x128xf32> to vector<8x32xf32>
    %58 = arith.negf %57 : vector<8x32xf32>
    %59 = math.exp %58 : vector<8x32xf32>
    %cst_29 = arith.constant 1.000000e+00 : f32
    %60 = vector.broadcast %cst_29 : f32 to vector<8x32xf32>
    %61 = arith.addf %60, %59 : vector<8x32xf32>
    %62 = arith.divf %60, %61 : vector<8x32xf32>
    %63 = vector.extract_strided_slice %56 {offsets = [0, 32], sizes = [8, 32], strides = [1, 1]} : vector<8x128xf32> to vector<8x32xf32>
    %64 = arith.negf %63 : vector<8x32xf32>
    %65 = math.exp %64 : vector<8x32xf32>
    %cst_30 = arith.constant 1.000000e+00 : f32
    %66 = vector.broadcast %cst_30 : f32 to vector<8x32xf32>
    %67 = arith.addf %66, %65 : vector<8x32xf32>
    %68 = arith.divf %66, %67 : vector<8x32xf32>
    %69 = vector.extract_strided_slice %56 {offsets = [0, 64], sizes = [8, 32], strides = [1, 1]} : vector<8x128xf32> to vector<8x32xf32>
    %70 = math.tanh %69 : vector<8x32xf32>
    %71 = vector.extract_strided_slice %56 {offsets = [0, 96], sizes = [8, 32], strides = [1, 1]} : vector<8x128xf32> to vector<8x32xf32>
    %72 = arith.negf %71 : vector<8x32xf32>
    %73 = math.exp %72 : vector<8x32xf32>
    %cst_31 = arith.constant 1.000000e+00 : f32
    %74 = vector.broadcast %cst_31 : f32 to vector<8x32xf32>
    %75 = arith.addf %74, %73 : vector<8x32xf32>
    %76 = arith.divf %74, %75 : vector<8x32xf32>
    %77 = arith.mulf %68, %18 : vector<8x32xf32>
    %78 = arith.mulf %62, %70 : vector<8x32xf32>
    %79 = arith.addf %77, %78 : vector<8x32xf32>
    %80 = math.tanh %79 : vector<8x32xf32>
    %81 = arith.mulf %76, %80 : vector<8x32xf32>
    %82 = arith.index_cast %c0_i32 : i32 to index
    %c0_32 = arith.constant 0 : index
    %c0_33 = arith.constant 0 : index
    %83 = vector.load %arg2[%82, %c0_32, %c0_33] : memref<8x8x1xf32, #tpu.memory_space<vmem>>, vector<1x8x1xf32>
    %84 = vector.shape_cast %83 : vector<1x8x1xf32> to vector<8x1xf32>
    %cst_34 = arith.constant 0.000000e+00 : f32
    %85 = vector.broadcast %cst_34 : f32 to vector<8x1xf32>
    %86 = arith.cmpf ogt, %84, %85 : vector<8x1xf32>
    %87 = arith.index_cast %19 : i32 to index
    %c0_35 = arith.constant 0 : index
    %c0_36 = arith.constant 0 : index
    %88 = vector.load %arg2[%87, %c0_35, %c0_36] : memref<8x8x1xf32, #tpu.memory_space<vmem>>, vector<1x8x1xf32>
    %89 = vector.shape_cast %88 : vector<1x8x1xf32> to vector<8x1xf32>
    %cst_37 = arith.constant 0.000000e+00 : f32
    %90 = vector.broadcast %cst_37 : f32 to vector<8x1xf32>
    %91 = arith.cmpf ogt, %89, %90 : vector<8x1xf32>
    %92 = vector.shape_cast %86 : vector<8x1xi1> to vector<8x1xi1>
    %93 = vector.broadcast %92 : vector<8x1xi1> to vector<8x32xi1>
    %94 = arith.select %93, %51, %17 : vector<8x32xi1>, vector<8x32xf32>
    %95 = vector.shape_cast %86 : vector<8x1xi1> to vector<8x1xi1>
    %96 = vector.broadcast %95 : vector<8x1xi1> to vector<8x32xi1>
    %97 = arith.select %96, %49, %18 : vector<8x32xi1>, vector<8x32xf32>
    %98 = vector.shape_cast %91 : vector<8x1xi1> to vector<8x1xi1>
    %99 = vector.broadcast %98 : vector<8x1xi1> to vector<8x32xi1>
    %100 = arith.select %99, %81, %17 : vector<8x32xi1>, vector<8x32xf32>
    %101 = vector.shape_cast %91 : vector<8x1xi1> to vector<8x1xi1>
    %102 = vector.broadcast %101 : vector<8x1xi1> to vector<8x32xi1>
    %103 = arith.select %102, %79, %18 : vector<8x32xi1>, vector<8x32xf32>
    %104 = arith.truncf %94 : vector<8x32xf32> to vector<8x32xbf16>
    %105 = arith.index_cast %c0_i32 : i32 to index
    %c0_38 = arith.constant 0 : index
    %c0_39 = arith.constant 0 : index
    %106 = vector.load %arg15[%105, %c0_38, %c0_39] : memref<8x8x32xbf16, #tpu.memory_space<vmem>>, vector<1x8x32xbf16>
    %107 = vector.shape_cast %106 : vector<1x8x32xbf16> to vector<8x32xbf16>
    %108 = vector.shape_cast %104 : vector<8x32xbf16> to vector<1x8x32xbf16>
    tpu.vector_store %arg15[%105, %c0_38, %c0_39], %108 {strides = array<i32>} : memref<8x8x32xbf16, #tpu.memory_space<vmem>>, vector<1x8x32xbf16>,
    %109 = arith.truncf %100 : vector<8x32xf32> to vector<8x32xbf16>
    %110 = arith.index_cast %19 : i32 to index
    %c0_40 = arith.constant 0 : index
    %c0_41 = arith.constant 0 : index
    %111 = vector.load %arg16[%110, %c0_40, %c0_41] : memref<8x8x32xbf16, #tpu.memory_space<vmem>>, vector<1x8x32xbf16>
    %112 = vector.shape_cast %111 : vector<1x8x32xbf16> to vector<8x32xbf16>
    %113 = vector.shape_cast %109 : vector<8x32xbf16> to vector<1x8x32xbf16>
    tpu.vector_store %arg16[%110, %c0_40, %c0_41], %113 {strides = array<i32>} : memref<8x8x32xbf16, #tpu.memory_space<vmem>>, vector<1x8x32xbf16>,
    %c1_i32 = arith.constant 1 : i32
    %c7_i32_42 = arith.constant 7 : i32
    %114 = arith.subi %c7_i32_42, %c1_i32 : i32
    %115 = tpu.concatenate %94, %100 in 1 : vector<8x32xf32>, vector<8x32xf32> -> vector<8x64xf32>
    %cst_43 = arith.constant dense<0.000000e+00> : vector<8x256xf32>
    %116 = tpu.matmul %115, %16, %cst_43 {dimension_numbers = #tpu.dot_dimension_numbers<[1], [0], [0], [1], [0, 0, 1, 1], [], []>} : vector<8x64xf32>, vector<64x256xf32>, vector<8x256xf32> -> vector<8x256xf32>
    %117 = arith.index_cast %c1_i32 : i32 to index
    %c0_44 = arith.constant 0 : index
    %c0_45 = arith.constant 0 : index
    %118 = vector.load %arg13[%117, %c0_44, %c0_45] : memref<8x8x128xf32, #tpu.memory_space<vmem>>, vector<1x8x128xf32>
    %119 = vector.shape_cast %118 : vector<1x8x128xf32> to vector<8x128xf32>
    %120 = vector.extract_strided_slice %116 {offsets = [0, 0], sizes = [8, 128], strides = [1, 1]} : vector<8x256xf32> to vector<8x128xf32>
    %121 = arith.addf %119, %120 : vector<8x128xf32>
    %122 = vector.extract_strided_slice %121 {offsets = [0, 0], sizes = [8, 32], strides = [1, 1]} : vector<8x128xf32> to vector<8x32xf32>
    %123 = arith.negf %122 : vector<8x32xf32>
    %124 = math.exp %123 : vector<8x32xf32>
    %cst_46 = arith.constant 1.000000e+00 : f32
    %125 = vector.broadcast %cst_46 : f32 to vector<8x32xf32>
    %126 = arith.addf %125, %124 : vector<8x32xf32>
    %127 = arith.divf %125, %126 : vector<8x32xf32>
    %128 = vector.extract_strided_slice %121 {offsets = [0, 32], sizes = [8, 32], strides = [1, 1]} : vector<8x128xf32> to vector<8x32xf32>
    %129 = arith.negf %128 : vector<8x32xf32>
    %130 = math.exp %129 : vector<8x32xf32>
    %cst_47 = arith.constant 1.000000e+00 : f32
    %131 = vector.broadcast %cst_47 : f32 to vector<8x32xf32>
    %132 = arith.addf %131, %130 : vector<8x32xf32>
    %133 = arith.divf %131, %132 : vector<8x32xf32>
    %134 = vector.extract_strided_slice %121 {offsets = [0, 64], sizes = [8, 32], strides = [1, 1]} : vector<8x128xf32> to vector<8x32xf32>
    %135 = math.tanh %134 : vector<8x32xf32>
    %136 = vector.extract_strided_slice %121 {offsets = [0, 96], sizes = [8, 32], strides = [1, 1]} : vector<8x128xf32> to vector<8x32xf32>
    %137 = arith.negf %136 : vector<8x32xf32>
    %138 = math.exp %137 : vector<8x32xf32>
    %cst_48 = arith.constant 1.000000e+00 : f32
    %139 = vector.broadcast %cst_48 : f32 to vector<8x32xf32>
    %140 = arith.addf %139, %138 : vector<8x32xf32>
    %141 = arith.divf %139, %140 : vector<8x32xf32>
    %142 = arith.mulf %133, %97 : vector<8x32xf32>
    %143 = arith.mulf %127, %135 : vector<8x32xf32>
    %144 = arith.addf %142, %143 : vector<8x32xf32>
    %145 = math.tanh %144 : vector<8x32xf32>
    %146 = arith.mulf %141, %145 : vector<8x32xf32>
    %147 = arith.index_cast %114 : i32 to index
    %c0_49 = arith.constant 0 : index
    %c0_50 = arith.constant 0 : index
    %148 = vector.load %arg14[%147, %c0_49, %c0_50] : memref<8x8x128xf32, #tpu.memory_space<vmem>>, vector<1x8x128xf32>
    %149 = vector.shape_cast %148 : vector<1x8x128xf32> to vector<8x128xf32>
    %150 = vector.extract_strided_slice %116 {offsets = [0, 128], sizes = [8, 128], strides = [1, 1]} : vector<8x256xf32> to vector<8x128xf32>
    %151 = arith.addf %149, %150 : vector<8x128xf32>
    %152 = vector.extract_strided_slice %151 {offsets = [0, 0], sizes = [8, 32], strides = [1, 1]} : vector<8x128xf32> to vector<8x32xf32>
    %153 = arith.negf %152 : vector<8x32xf32>
    %154 = math.exp %153 : vector<8x32xf32>
    %cst_51 = arith.constant 1.000000e+00 : f32
    %155 = vector.broadcast %cst_51 : f32 to vector<8x32xf32>
    %156 = arith.addf %155, %154 : vector<8x32xf32>
    %157 = arith.divf %155, %156 : vector<8x32xf32>
    %158 = vector.extract_strided_slice %151 {offsets = [0, 32], sizes = [8, 32], strides = [1, 1]} : vector<8x128xf32> to vector<8x32xf32>
    %159 = arith.negf %158 : vector<8x32xf32>
    %160 = math.exp %159 : vector<8x32xf32>
    %cst_52 = arith.constant 1.000000e+00 : f32
    %161 = vector.broadcast %cst_52 : f32 to vector<8x32xf32>
    %162 = arith.addf %161, %160 : vector<8x32xf32>
    %163 = arith.divf %161, %162 : vector<8x32xf32>
    %164 = vector.extract_strided_slice %151 {offsets = [0, 64], sizes = [8, 32], strides = [1, 1]} : vector<8x128xf32> to vector<8x32xf32>
    %165 = math.tanh %164 : vector<8x32xf32>
    %166 = vector.extract_strided_slice %151 {offsets = [0, 96], sizes = [8, 32], strides = [1, 1]} : vector<8x128xf32> to vector<8x32xf32>
    %167 = arith.negf %166 : vector<8x32xf32>
    %168 = math.exp %167 : vector<8x32xf32>
    %cst_53 = arith.constant 1.000000e+00 : f32
    %169 = vector.broadcast %cst_53 : f32 to vector<8x32xf32>
    %170 = arith.addf %169, %168 : vector<8x32xf32>
    %171 = arith.divf %169, %170 : vector<8x32xf32>
    %172 = arith.mulf %163, %103 : vector<8x32xf32>
    %173 = arith.mulf %157, %165 : vector<8x32xf32>
    %174 = arith.addf %172, %173 : vector<8x32xf32>
    %175 = math.tanh %174 : vector<8x32xf32>
    %176 = arith.mulf %171, %175 : vector<8x32xf32>
    %177 = arith.index_cast %c1_i32 : i32 to index
    %c0_54 = arith.constant 0 : index
    %c0_55 = arith.constant 0 : index
    %178 = vector.load %arg2[%177, %c0_54, %c0_55] : memref<8x8x1xf32, #tpu.memory_space<vmem>>, vector<1x8x1xf32>
    %179 = vector.shape_cast %178 : vector<1x8x1xf32> to vector<8x1xf32>
    %cst_56 = arith.constant 0.000000e+00 : f32
    %180 = vector.broadcast %cst_56 : f32 to vector<8x1xf32>
    %181 = arith.cmpf ogt, %179, %180 : vector<8x1xf32>
    %182 = arith.index_cast %114 : i32 to index
    %c0_57 = arith.constant 0 : index
    %c0_58 = arith.constant 0 : index
    %183 = vector.load %arg2[%182, %c0_57, %c0_58] : memref<8x8x1xf32, #tpu.memory_space<vmem>>, vector<1x8x1xf32>
    %184 = vector.shape_cast %183 : vector<1x8x1xf32> to vector<8x1xf32>
    %cst_59 = arith.constant 0.000000e+00 : f32
    %185 = vector.broadcast %cst_59 : f32 to vector<8x1xf32>
    %186 = arith.cmpf ogt, %184, %185 : vector<8x1xf32>
    %187 = vector.shape_cast %181 : vector<8x1xi1> to vector<8x1xi1>
    %188 = vector.broadcast %187 : vector<8x1xi1> to vector<8x32xi1>
    %189 = arith.select %188, %146, %94 : vector<8x32xi1>, vector<8x32xf32>
    %190 = vector.shape_cast %181 : vector<8x1xi1> to vector<8x1xi1>
    %191 = vector.broadcast %190 : vector<8x1xi1> to vector<8x32xi1>
    %192 = arith.select %191, %144, %97 : vector<8x32xi1>, vector<8x32xf32>
    %193 = vector.shape_cast %186 : vector<8x1xi1> to vector<8x1xi1>
    %194 = vector.broadcast %193 : vector<8x1xi1> to vector<8x32xi1>
    %195 = arith.select %194, %176, %100 : vector<8x32xi1>, vector<8x32xf32>
    %196 = vector.shape_cast %186 : vector<8x1xi1> to vector<8x1xi1>
    %197 = vector.broadcast %196 : vector<8x1xi1> to vector<8x32xi1>
    %198 = arith.select %197, %174, %103 : vector<8x32xi1>, vector<8x32xf32>
    %199 = arith.truncf %189 : vector<8x32xf32> to vector<8x32xbf16>
    %200 = arith.index_cast %c1_i32 : i32 to index
    %c0_60 = arith.constant 0 : index
    %c0_61 = arith.constant 0 : index
    %201 = vector.load %arg15[%200, %c0_60, %c0_61] : memref<8x8x32xbf16, #tpu.memory_space<vmem>>, vector<1x8x32xbf16>
    %202 = vector.shape_cast %201 : vector<1x8x32xbf16> to vector<8x32xbf16>
    %203 = vector.shape_cast %199 : vector<8x32xbf16> to vector<1x8x32xbf16>
    tpu.vector_store %arg15[%200, %c0_60, %c0_61], %203 {strides = array<i32>} : memref<8x8x32xbf16, #tpu.memory_space<vmem>>, vector<1x8x32xbf16>,
    %204 = arith.truncf %195 : vector<8x32xf32> to vector<8x32xbf16>
    %205 = arith.index_cast %114 : i32 to index
    %c0_62 = arith.constant 0 : index
    %c0_63 = arith.constant 0 : index
    %206 = vector.load %arg16[%205, %c0_62, %c0_63] : memref<8x8x32xbf16, #tpu.memory_space<vmem>>, vector<1x8x32xbf16>
    %207 = vector.shape_cast %206 : vector<1x8x32xbf16> to vector<8x32xbf16>
    %208 = vector.shape_cast %204 : vector<8x32xbf16> to vector<1x8x32xbf16>
    tpu.vector_store %arg16[%205, %c0_62, %c0_63], %208 {strides = array<i32>} : memref<8x8x32xbf16, #tpu.memory_space<vmem>>, vector<1x8x32xbf16>,
    %c2_i32 = arith.constant 2 : i32
    %c7_i32_64 = arith.constant 7 : i32
    %209 = arith.subi %c7_i32_64, %c2_i32 : i32
    %210 = tpu.concatenate %189, %195 in 1 : vector<8x32xf32>, vector<8x32xf32> -> vector<8x64xf32>
    %cst_65 = arith.constant dense<0.000000e+00> : vector<8x256xf32>
    %211 = tpu.matmul %210, %16, %cst_65 {dimension_numbers = #tpu.dot_dimension_numbers<[1], [0], [0], [1], [0, 0, 1, 1], [], []>} : vector<8x64xf32>, vector<64x256xf32>, vector<8x256xf32> -> vector<8x256xf32>
    %212 = arith.index_cast %c2_i32 : i32 to index
    %c0_66 = arith.constant 0 : index
    %c0_67 = arith.constant 0 : index
    %213 = vector.load %arg13[%212, %c0_66, %c0_67] : memref<8x8x128xf32, #tpu.memory_space<vmem>>, vector<1x8x128xf32>
    %214 = vector.shape_cast %213 : vector<1x8x128xf32> to vector<8x128xf32>
    %215 = vector.extract_strided_slice %211 {offsets = [0, 0], sizes = [8, 128], strides = [1, 1]} : vector<8x256xf32> to vector<8x128xf32>
    %216 = arith.addf %214, %215 : vector<8x128xf32>
    %217 = vector.extract_strided_slice %216 {offsets = [0, 0], sizes = [8, 32], strides = [1, 1]} : vector<8x128xf32> to vector<8x32xf32>
    %218 = arith.negf %217 : vector<8x32xf32>
    %219 = math.exp %218 : vector<8x32xf32>
    %cst_68 = arith.constant 1.000000e+00 : f32
    %220 = vector.broadcast %cst_68 : f32 to vector<8x32xf32>
    %221 = arith.addf %220, %219 : vector<8x32xf32>
    %222 = arith.divf %220, %221 : vector<8x32xf32>
    %223 = vector.extract_strided_slice %216 {offsets = [0, 32], sizes = [8, 32], strides = [1, 1]} : vector<8x128xf32> to vector<8x32xf32>
    %224 = arith.negf %223 : vector<8x32xf32>
    %225 = math.exp %224 : vector<8x32xf32>
    %cst_69 = arith.constant 1.000000e+00 : f32
    %226 = vector.broadcast %cst_69 : f32 to vector<8x32xf32>
    %227 = arith.addf %226, %225 : vector<8x32xf32>
    %228 = arith.divf %226, %227 : vector<8x32xf32>
    %229 = vector.extract_strided_slice %216 {offsets = [0, 64], sizes = [8, 32], strides = [1, 1]} : vector<8x128xf32> to vector<8x32xf32>
    %230 = math.tanh %229 : vector<8x32xf32>
    %231 = vector.extract_strided_slice %216 {offsets = [0, 96], sizes = [8, 32], strides = [1, 1]} : vector<8x128xf32> to vector<8x32xf32>
    %232 = arith.negf %231 : vector<8x32xf32>
    %233 = math.exp %232 : vector<8x32xf32>
    %cst_70 = arith.constant 1.000000e+00 : f32
    %234 = vector.broadcast %cst_70 : f32 to vector<8x32xf32>
    %235 = arith.addf %234, %233 : vector<8x32xf32>
    %236 = arith.divf %234, %235 : vector<8x32xf32>
    %237 = arith.mulf %228, %192 : vector<8x32xf32>
    %238 = arith.mulf %222, %230 : vector<8x32xf32>
    %239 = arith.addf %237, %238 : vector<8x32xf32>
    %240 = math.tanh %239 : vector<8x32xf32>
    %241 = arith.mulf %236, %240 : vector<8x32xf32>
    %242 = arith.index_cast %209 : i32 to index
    %c0_71 = arith.constant 0 : index
    %c0_72 = arith.constant 0 : index
    %243 = vector.load %arg14[%242, %c0_71, %c0_72] : memref<8x8x128xf32, #tpu.memory_space<vmem>>, vector<1x8x128xf32>
    %244 = vector.shape_cast %243 : vector<1x8x128xf32> to vector<8x128xf32>
    %245 = vector.extract_strided_slice %211 {offsets = [0, 128], sizes = [8, 128], strides = [1, 1]} : vector<8x256xf32> to vector<8x128xf32>
    %246 = arith.addf %244, %245 : vector<8x128xf32>
    %247 = vector.extract_strided_slice %246 {offsets = [0, 0], sizes = [8, 32], strides = [1, 1]} : vector<8x128xf32> to vector<8x32xf32>
    %248 = arith.negf %247 : vector<8x32xf32>
    %249 = math.exp %248 : vector<8x32xf32>
    %cst_73 = arith.constant 1.000000e+00 : f32
    %250 = vector.broadcast %cst_73 : f32 to vector<8x32xf32>
    %251 = arith.addf %250, %249 : vector<8x32xf32>
    %252 = arith.divf %250, %251 : vector<8x32xf32>
    %253 = vector.extract_strided_slice %246 {offsets = [0, 32], sizes = [8, 32], strides = [1, 1]} : vector<8x128xf32> to vector<8x32xf32>
    %254 = arith.negf %253 : vector<8x32xf32>
    %255 = math.exp %254 : vector<8x32xf32>
    %cst_74 = arith.constant 1.000000e+00 : f32
    %256 = vector.broadcast %cst_74 : f32 to vector<8x32xf32>
    %257 = arith.addf %256, %255 : vector<8x32xf32>
    %258 = arith.divf %256, %257 : vector<8x32xf32>
    %259 = vector.extract_strided_slice %246 {offsets = [0, 64], sizes = [8, 32], strides = [1, 1]} : vector<8x128xf32> to vector<8x32xf32>
    %260 = math.tanh %259 : vector<8x32xf32>
    %261 = vector.extract_strided_slice %246 {offsets = [0, 96], sizes = [8, 32], strides = [1, 1]} : vector<8x128xf32> to vector<8x32xf32>
    %262 = arith.negf %261 : vector<8x32xf32>
    %263 = math.exp %262 : vector<8x32xf32>
    %cst_75 = arith.constant 1.000000e+00 : f32
    %264 = vector.broadcast %cst_75 : f32 to vector<8x32xf32>
    %265 = arith.addf %264, %263 : vector<8x32xf32>
    %266 = arith.divf %264, %265 : vector<8x32xf32>
    %267 = arith.mulf %258, %198 : vector<8x32xf32>
    %268 = arith.mulf %252, %260 : vector<8x32xf32>
    %269 = arith.addf %267, %268 : vector<8x32xf32>
    %270 = math.tanh %269 : vector<8x32xf32>
    %271 = arith.mulf %266, %270 : vector<8x32xf32>
    %272 = arith.index_cast %c2_i32 : i32 to index
    %c0_76 = arith.constant 0 : index
    %c0_77 = arith.constant 0 : index
    %273 = vector.load %arg2[%272, %c0_76, %c0_77] : memref<8x8x1xf32, #tpu.memory_space<vmem>>, vector<1x8x1xf32>
    %274 = vector.shape_cast %273 : vector<1x8x1xf32> to vector<8x1xf32>
    %cst_78 = arith.constant 0.000000e+00 : f32
    %275 = vector.broadcast %cst_78 : f32 to vector<8x1xf32>
    %276 = arith.cmpf ogt, %274, %275 : vector<8x1xf32>
    %277 = arith.index_cast %209 : i32 to index
    %c0_79 = arith.constant 0 : index
    %c0_80 = arith.constant 0 : index
    %278 = vector.load %arg2[%277, %c0_79, %c0_80] : memref<8x8x1xf32, #tpu.memory_space<vmem>>, vector<1x8x1xf32>
    %279 = vector.shape_cast %278 : vector<1x8x1xf32> to vector<8x1xf32>
    %cst_81 = arith.constant 0.000000e+00 : f32
    %280 = vector.broadcast %cst_81 : f32 to vector<8x1xf32>
    %281 = arith.cmpf ogt, %279, %280 : vector<8x1xf32>
    %282 = vector.shape_cast %276 : vector<8x1xi1> to vector<8x1xi1>
    %283 = vector.broadcast %282 : vector<8x1xi1> to vector<8x32xi1>
    %284 = arith.select %283, %241, %189 : vector<8x32xi1>, vector<8x32xf32>
    %285 = vector.shape_cast %276 : vector<8x1xi1> to vector<8x1xi1>
    %286 = vector.broadcast %285 : vector<8x1xi1> to vector<8x32xi1>
    %287 = arith.select %286, %239, %192 : vector<8x32xi1>, vector<8x32xf32>
    %288 = vector.shape_cast %281 : vector<8x1xi1> to vector<8x1xi1>
    %289 = vector.broadcast %288 : vector<8x1xi1> to vector<8x32xi1>
    %290 = arith.select %289, %271, %195 : vector<8x32xi1>, vector<8x32xf32>
    %291 = vector.shape_cast %281 : vector<8x1xi1> to vector<8x1xi1>
    %292 = vector.broadcast %291 : vector<8x1xi1> to vector<8x32xi1>
    %293 = arith.select %292, %269, %198 : vector<8x32xi1>, vector<8x32xf32>
    %294 = arith.truncf %284 : vector<8x32xf32> to vector<8x32xbf16>
    %295 = arith.index_cast %c2_i32 : i32 to index
    %c0_82 = arith.constant 0 : index
    %c0_83 = arith.constant 0 : index
    %296 = vector.load %arg15[%295, %c0_82, %c0_83] : memref<8x8x32xbf16, #tpu.memory_space<vmem>>, vector<1x8x32xbf16>
    %297 = vector.shape_cast %296 : vector<1x8x32xbf16> to vector<8x32xbf16>
    %298 = vector.shape_cast %294 : vector<8x32xbf16> to vector<1x8x32xbf16>
    tpu.vector_store %arg15[%295, %c0_82, %c0_83], %298 {strides = array<i32>} : memref<8x8x32xbf16, #tpu.memory_space<vmem>>, vector<1x8x32xbf16>,
    %299 = arith.truncf %290 : vector<8x32xf32> to vector<8x32xbf16>
    %300 = arith.index_cast %209 : i32 to index
    %c0_84 = arith.constant 0 : index
    %c0_85 = arith.constant 0 : index
    %301 = vector.load %arg16[%300, %c0_84, %c0_85] : memref<8x8x32xbf16, #tpu.memory_space<vmem>>, vector<1x8x32xbf16>
    %302 = vector.shape_cast %301 : vector<1x8x32xbf16> to vector<8x32xbf16>
    %303 = vector.shape_cast %299 : vector<8x32xbf16> to vector<1x8x32xbf16>
    tpu.vector_store %arg16[%300, %c0_84, %c0_85], %303 {strides = array<i32>} : memref<8x8x32xbf16, #tpu.memory_space<vmem>>, vector<1x8x32xbf16>,
    %c3_i32 = arith.constant 3 : i32
    %c7_i32_86 = arith.constant 7 : i32
    %304 = arith.subi %c7_i32_86, %c3_i32 : i32
    %305 = tpu.concatenate %284, %290 in 1 : vector<8x32xf32>, vector<8x32xf32> -> vector<8x64xf32>
    %cst_87 = arith.constant dense<0.000000e+00> : vector<8x256xf32>
    %306 = tpu.matmul %305, %16, %cst_87 {dimension_numbers = #tpu.dot_dimension_numbers<[1], [0], [0], [1], [0, 0, 1, 1], [], []>} : vector<8x64xf32>, vector<64x256xf32>, vector<8x256xf32> -> vector<8x256xf32>
    %307 = arith.index_cast %c3_i32 : i32 to index
    %c0_88 = arith.constant 0 : index
    %c0_89 = arith.constant 0 : index
    %308 = vector.load %arg13[%307, %c0_88, %c0_89] : memref<8x8x128xf32, #tpu.memory_space<vmem>>, vector<1x8x128xf32>
    %309 = vector.shape_cast %308 : vector<1x8x128xf32> to vector<8x128xf32>
    %310 = vector.extract_strided_slice %306 {offsets = [0, 0], sizes = [8, 128], strides = [1, 1]} : vector<8x256xf32> to vector<8x128xf32>
    %311 = arith.addf %309, %310 : vector<8x128xf32>
    %312 = vector.extract_strided_slice %311 {offsets = [0, 0], sizes = [8, 32], strides = [1, 1]} : vector<8x128xf32> to vector<8x32xf32>
    %313 = arith.negf %312 : vector<8x32xf32>
    %314 = math.exp %313 : vector<8x32xf32>
    %cst_90 = arith.constant 1.000000e+00 : f32
    %315 = vector.broadcast %cst_90 : f32 to vector<8x32xf32>
    %316 = arith.addf %315, %314 : vector<8x32xf32>
    %317 = arith.divf %315, %316 : vector<8x32xf32>
    %318 = vector.extract_strided_slice %311 {offsets = [0, 32], sizes = [8, 32], strides = [1, 1]} : vector<8x128xf32> to vector<8x32xf32>
    %319 = arith.negf %318 : vector<8x32xf32>
    %320 = math.exp %319 : vector<8x32xf32>
    %cst_91 = arith.constant 1.000000e+00 : f32
    %321 = vector.broadcast %cst_91 : f32 to vector<8x32xf32>
    %322 = arith.addf %321, %320 : vector<8x32xf32>
    %323 = arith.divf %321, %322 : vector<8x32xf32>
    %324 = vector.extract_strided_slice %311 {offsets = [0, 64], sizes = [8, 32], strides = [1, 1]} : vector<8x128xf32> to vector<8x32xf32>
    %325 = math.tanh %324 : vector<8x32xf32>
    %326 = vector.extract_strided_slice %311 {offsets = [0, 96], sizes = [8, 32], strides = [1, 1]} : vector<8x128xf32> to vector<8x32xf32>
    %327 = arith.negf %326 : vector<8x32xf32>
    %328 = math.exp %327 : vector<8x32xf32>
    %cst_92 = arith.constant 1.000000e+00 : f32
    %329 = vector.broadcast %cst_92 : f32 to vector<8x32xf32>
    %330 = arith.addf %329, %328 : vector<8x32xf32>
    %331 = arith.divf %329, %330 : vector<8x32xf32>
    %332 = arith.mulf %323, %287 : vector<8x32xf32>
    %333 = arith.mulf %317, %325 : vector<8x32xf32>
    %334 = arith.addf %332, %333 : vector<8x32xf32>
    %335 = math.tanh %334 : vector<8x32xf32>
    %336 = arith.mulf %331, %335 : vector<8x32xf32>
    %337 = arith.index_cast %304 : i32 to index
    %c0_93 = arith.constant 0 : index
    %c0_94 = arith.constant 0 : index
    %338 = vector.load %arg14[%337, %c0_93, %c0_94] : memref<8x8x128xf32, #tpu.memory_space<vmem>>, vector<1x8x128xf32>
    %339 = vector.shape_cast %338 : vector<1x8x128xf32> to vector<8x128xf32>
    %340 = vector.extract_strided_slice %306 {offsets = [0, 128], sizes = [8, 128], strides = [1, 1]} : vector<8x256xf32> to vector<8x128xf32>
    %341 = arith.addf %339, %340 : vector<8x128xf32>
    %342 = vector.extract_strided_slice %341 {offsets = [0, 0], sizes = [8, 32], strides = [1, 1]} : vector<8x128xf32> to vector<8x32xf32>
    %343 = arith.negf %342 : vector<8x32xf32>
    %344 = math.exp %343 : vector<8x32xf32>
    %cst_95 = arith.constant 1.000000e+00 : f32
    %345 = vector.broadcast %cst_95 : f32 to vector<8x32xf32>
    %346 = arith.addf %345, %344 : vector<8x32xf32>
    %347 = arith.divf %345, %346 : vector<8x32xf32>
    %348 = vector.extract_strided_slice %341 {offsets = [0, 32], sizes = [8, 32], strides = [1, 1]} : vector<8x128xf32> to vector<8x32xf32>
    %349 = arith.negf %348 : vector<8x32xf32>
    %350 = math.exp %349 : vector<8x32xf32>
    %cst_96 = arith.constant 1.000000e+00 : f32
    %351 = vector.broadcast %cst_96 : f32 to vector<8x32xf32>
    %352 = arith.addf %351, %350 : vector<8x32xf32>
    %353 = arith.divf %351, %352 : vector<8x32xf32>
    %354 = vector.extract_strided_slice %341 {offsets = [0, 64], sizes = [8, 32], strides = [1, 1]} : vector<8x128xf32> to vector<8x32xf32>
    %355 = math.tanh %354 : vector<8x32xf32>
    %356 = vector.extract_strided_slice %341 {offsets = [0, 96], sizes = [8, 32], strides = [1, 1]} : vector<8x128xf32> to vector<8x32xf32>
    %357 = arith.negf %356 : vector<8x32xf32>
    %358 = math.exp %357 : vector<8x32xf32>
    %cst_97 = arith.constant 1.000000e+00 : f32
    %359 = vector.broadcast %cst_97 : f32 to vector<8x32xf32>
    %360 = arith.addf %359, %358 : vector<8x32xf32>
    %361 = arith.divf %359, %360 : vector<8x32xf32>
    %362 = arith.mulf %353, %293 : vector<8x32xf32>
    %363 = arith.mulf %347, %355 : vector<8x32xf32>
    %364 = arith.addf %362, %363 : vector<8x32xf32>
    %365 = math.tanh %364 : vector<8x32xf32>
    %366 = arith.mulf %361, %365 : vector<8x32xf32>
    %367 = arith.index_cast %c3_i32 : i32 to index
    %c0_98 = arith.constant 0 : index
    %c0_99 = arith.constant 0 : index
    %368 = vector.load %arg2[%367, %c0_98, %c0_99] : memref<8x8x1xf32, #tpu.memory_space<vmem>>, vector<1x8x1xf32>
    %369 = vector.shape_cast %368 : vector<1x8x1xf32> to vector<8x1xf32>
    %cst_100 = arith.constant 0.000000e+00 : f32
    %370 = vector.broadcast %cst_100 : f32 to vector<8x1xf32>
    %371 = arith.cmpf ogt, %369, %370 : vector<8x1xf32>
    %372 = arith.index_cast %304 : i32 to index
    %c0_101 = arith.constant 0 : index
    %c0_102 = arith.constant 0 : index
    %373 = vector.load %arg2[%372, %c0_101, %c0_102] : memref<8x8x1xf32, #tpu.memory_space<vmem>>, vector<1x8x1xf32>
    %374 = vector.shape_cast %373 : vector<1x8x1xf32> to vector<8x1xf32>
    %cst_103 = arith.constant 0.000000e+00 : f32
    %375 = vector.broadcast %cst_103 : f32 to vector<8x1xf32>
    %376 = arith.cmpf ogt, %374, %375 : vector<8x1xf32>
    %377 = vector.shape_cast %371 : vector<8x1xi1> to vector<8x1xi1>
    %378 = vector.broadcast %377 : vector<8x1xi1> to vector<8x32xi1>
    %379 = arith.select %378, %336, %284 : vector<8x32xi1>, vector<8x32xf32>
    %380 = vector.shape_cast %371 : vector<8x1xi1> to vector<8x1xi1>
    %381 = vector.broadcast %380 : vector<8x1xi1> to vector<8x32xi1>
    %382 = arith.select %381, %334, %287 : vector<8x32xi1>, vector<8x32xf32>
    %383 = vector.shape_cast %376 : vector<8x1xi1> to vector<8x1xi1>
    %384 = vector.broadcast %383 : vector<8x1xi1> to vector<8x32xi1>
    %385 = arith.select %384, %366, %290 : vector<8x32xi1>, vector<8x32xf32>
    %386 = vector.shape_cast %376 : vector<8x1xi1> to vector<8x1xi1>
    %387 = vector.broadcast %386 : vector<8x1xi1> to vector<8x32xi1>
    %388 = arith.select %387, %364, %293 : vector<8x32xi1>, vector<8x32xf32>
    %389 = arith.truncf %379 : vector<8x32xf32> to vector<8x32xbf16>
    %390 = arith.index_cast %c3_i32 : i32 to index
    %c0_104 = arith.constant 0 : index
    %c0_105 = arith.constant 0 : index
    %391 = vector.load %arg15[%390, %c0_104, %c0_105] : memref<8x8x32xbf16, #tpu.memory_space<vmem>>, vector<1x8x32xbf16>
    %392 = vector.shape_cast %391 : vector<1x8x32xbf16> to vector<8x32xbf16>
    %393 = vector.shape_cast %389 : vector<8x32xbf16> to vector<1x8x32xbf16>
    tpu.vector_store %arg15[%390, %c0_104, %c0_105], %393 {strides = array<i32>} : memref<8x8x32xbf16, #tpu.memory_space<vmem>>, vector<1x8x32xbf16>,
    %394 = arith.truncf %385 : vector<8x32xf32> to vector<8x32xbf16>
    %395 = arith.index_cast %304 : i32 to index
    %c0_106 = arith.constant 0 : index
    %c0_107 = arith.constant 0 : index
    %396 = vector.load %arg16[%395, %c0_106, %c0_107] : memref<8x8x32xbf16, #tpu.memory_space<vmem>>, vector<1x8x32xbf16>
    %397 = vector.shape_cast %396 : vector<1x8x32xbf16> to vector<8x32xbf16>
    %398 = vector.shape_cast %394 : vector<8x32xbf16> to vector<1x8x32xbf16>
    tpu.vector_store %arg16[%395, %c0_106, %c0_107], %398 {strides = array<i32>} : memref<8x8x32xbf16, #tpu.memory_space<vmem>>, vector<1x8x32xbf16>,
    %c4_i32 = arith.constant 4 : i32
    %c7_i32_108 = arith.constant 7 : i32
    %399 = arith.subi %c7_i32_108, %c4_i32 : i32
    %400 = tpu.concatenate %379, %385 in 1 : vector<8x32xf32>, vector<8x32xf32> -> vector<8x64xf32>
    %cst_109 = arith.constant dense<0.000000e+00> : vector<8x256xf32>
    %401 = tpu.matmul %400, %16, %cst_109 {dimension_numbers = #tpu.dot_dimension_numbers<[1], [0], [0], [1], [0, 0, 1, 1], [], []>} : vector<8x64xf32>, vector<64x256xf32>, vector<8x256xf32> -> vector<8x256xf32>
    %402 = arith.index_cast %c4_i32 : i32 to index
    %c0_110 = arith.constant 0 : index
    %c0_111 = arith.constant 0 : index
    %403 = vector.load %arg13[%402, %c0_110, %c0_111] : memref<8x8x128xf32, #tpu.memory_space<vmem>>, vector<1x8x128xf32>
    %404 = vector.shape_cast %403 : vector<1x8x128xf32> to vector<8x128xf32>
    %405 = vector.extract_strided_slice %401 {offsets = [0, 0], sizes = [8, 128], strides = [1, 1]} : vector<8x256xf32> to vector<8x128xf32>
    %406 = arith.addf %404, %405 : vector<8x128xf32>
    %407 = vector.extract_strided_slice %406 {offsets = [0, 0], sizes = [8, 32], strides = [1, 1]} : vector<8x128xf32> to vector<8x32xf32>
    %408 = arith.negf %407 : vector<8x32xf32>
    %409 = math.exp %408 : vector<8x32xf32>
    %cst_112 = arith.constant 1.000000e+00 : f32
    %410 = vector.broadcast %cst_112 : f32 to vector<8x32xf32>
    %411 = arith.addf %410, %409 : vector<8x32xf32>
    %412 = arith.divf %410, %411 : vector<8x32xf32>
    %413 = vector.extract_strided_slice %406 {offsets = [0, 32], sizes = [8, 32], strides = [1, 1]} : vector<8x128xf32> to vector<8x32xf32>
    %414 = arith.negf %413 : vector<8x32xf32>
    %415 = math.exp %414 : vector<8x32xf32>
    %cst_113 = arith.constant 1.000000e+00 : f32
    %416 = vector.broadcast %cst_113 : f32 to vector<8x32xf32>
    %417 = arith.addf %416, %415 : vector<8x32xf32>
    %418 = arith.divf %416, %417 : vector<8x32xf32>
    %419 = vector.extract_strided_slice %406 {offsets = [0, 64], sizes = [8, 32], strides = [1, 1]} : vector<8x128xf32> to vector<8x32xf32>
    %420 = math.tanh %419 : vector<8x32xf32>
    %421 = vector.extract_strided_slice %406 {offsets = [0, 96], sizes = [8, 32], strides = [1, 1]} : vector<8x128xf32> to vector<8x32xf32>
    %422 = arith.negf %421 : vector<8x32xf32>
    %423 = math.exp %422 : vector<8x32xf32>
    %cst_114 = arith.constant 1.000000e+00 : f32
    %424 = vector.broadcast %cst_114 : f32 to vector<8x32xf32>
    %425 = arith.addf %424, %423 : vector<8x32xf32>
    %426 = arith.divf %424, %425 : vector<8x32xf32>
    %427 = arith.mulf %418, %382 : vector<8x32xf32>
    %428 = arith.mulf %412, %420 : vector<8x32xf32>
    %429 = arith.addf %427, %428 : vector<8x32xf32>
    %430 = math.tanh %429 : vector<8x32xf32>
    %431 = arith.mulf %426, %430 : vector<8x32xf32>
    %432 = arith.index_cast %399 : i32 to index
    %c0_115 = arith.constant 0 : index
    %c0_116 = arith.constant 0 : index
    %433 = vector.load %arg14[%432, %c0_115, %c0_116] : memref<8x8x128xf32, #tpu.memory_space<vmem>>, vector<1x8x128xf32>
    %434 = vector.shape_cast %433 : vector<1x8x128xf32> to vector<8x128xf32>
    %435 = vector.extract_strided_slice %401 {offsets = [0, 128], sizes = [8, 128], strides = [1, 1]} : vector<8x256xf32> to vector<8x128xf32>
    %436 = arith.addf %434, %435 : vector<8x128xf32>
    %437 = vector.extract_strided_slice %436 {offsets = [0, 0], sizes = [8, 32], strides = [1, 1]} : vector<8x128xf32> to vector<8x32xf32>
    %438 = arith.negf %437 : vector<8x32xf32>
    %439 = math.exp %438 : vector<8x32xf32>
    %cst_117 = arith.constant 1.000000e+00 : f32
    %440 = vector.broadcast %cst_117 : f32 to vector<8x32xf32>
    %441 = arith.addf %440, %439 : vector<8x32xf32>
    %442 = arith.divf %440, %441 : vector<8x32xf32>
    %443 = vector.extract_strided_slice %436 {offsets = [0, 32], sizes = [8, 32], strides = [1, 1]} : vector<8x128xf32> to vector<8x32xf32>
    %444 = arith.negf %443 : vector<8x32xf32>
    %445 = math.exp %444 : vector<8x32xf32>
    %cst_118 = arith.constant 1.000000e+00 : f32
    %446 = vector.broadcast %cst_118 : f32 to vector<8x32xf32>
    %447 = arith.addf %446, %445 : vector<8x32xf32>
    %448 = arith.divf %446, %447 : vector<8x32xf32>
    %449 = vector.extract_strided_slice %436 {offsets = [0, 64], sizes = [8, 32], strides = [1, 1]} : vector<8x128xf32> to vector<8x32xf32>
    %450 = math.tanh %449 : vector<8x32xf32>
    %451 = vector.extract_strided_slice %436 {offsets = [0, 96], sizes = [8, 32], strides = [1, 1]} : vector<8x128xf32> to vector<8x32xf32>
    %452 = arith.negf %451 : vector<8x32xf32>
    %453 = math.exp %452 : vector<8x32xf32>
    %cst_119 = arith.constant 1.000000e+00 : f32
    %454 = vector.broadcast %cst_119 : f32 to vector<8x32xf32>
    %455 = arith.addf %454, %453 : vector<8x32xf32>
    %456 = arith.divf %454, %455 : vector<8x32xf32>
    %457 = arith.mulf %448, %388 : vector<8x32xf32>
    %458 = arith.mulf %442, %450 : vector<8x32xf32>
    %459 = arith.addf %457, %458 : vector<8x32xf32>
    %460 = math.tanh %459 : vector<8x32xf32>
    %461 = arith.mulf %456, %460 : vector<8x32xf32>
    %462 = arith.index_cast %c4_i32 : i32 to index
    %c0_120 = arith.constant 0 : index
    %c0_121 = arith.constant 0 : index
    %463 = vector.load %arg2[%462, %c0_120, %c0_121] : memref<8x8x1xf32, #tpu.memory_space<vmem>>, vector<1x8x1xf32>
    %464 = vector.shape_cast %463 : vector<1x8x1xf32> to vector<8x1xf32>
    %cst_122 = arith.constant 0.000000e+00 : f32
    %465 = vector.broadcast %cst_122 : f32 to vector<8x1xf32>
    %466 = arith.cmpf ogt, %464, %465 : vector<8x1xf32>
    %467 = arith.index_cast %399 : i32 to index
    %c0_123 = arith.constant 0 : index
    %c0_124 = arith.constant 0 : index
    %468 = vector.load %arg2[%467, %c0_123, %c0_124] : memref<8x8x1xf32, #tpu.memory_space<vmem>>, vector<1x8x1xf32>
    %469 = vector.shape_cast %468 : vector<1x8x1xf32> to vector<8x1xf32>
    %cst_125 = arith.constant 0.000000e+00 : f32
    %470 = vector.broadcast %cst_125 : f32 to vector<8x1xf32>
    %471 = arith.cmpf ogt, %469, %470 : vector<8x1xf32>
    %472 = vector.shape_cast %466 : vector<8x1xi1> to vector<8x1xi1>
    %473 = vector.broadcast %472 : vector<8x1xi1> to vector<8x32xi1>
    %474 = arith.select %473, %431, %379 : vector<8x32xi1>, vector<8x32xf32>
    %475 = vector.shape_cast %466 : vector<8x1xi1> to vector<8x1xi1>
    %476 = vector.broadcast %475 : vector<8x1xi1> to vector<8x32xi1>
    %477 = arith.select %476, %429, %382 : vector<8x32xi1>, vector<8x32xf32>
    %478 = vector.shape_cast %471 : vector<8x1xi1> to vector<8x1xi1>
    %479 = vector.broadcast %478 : vector<8x1xi1> to vector<8x32xi1>
    %480 = arith.select %479, %461, %385 : vector<8x32xi1>, vector<8x32xf32>
    %481 = vector.shape_cast %471 : vector<8x1xi1> to vector<8x1xi1>
    %482 = vector.broadcast %481 : vector<8x1xi1> to vector<8x32xi1>
    %483 = arith.select %482, %459, %388 : vector<8x32xi1>, vector<8x32xf32>
    %484 = arith.truncf %474 : vector<8x32xf32> to vector<8x32xbf16>
    %485 = arith.index_cast %c4_i32 : i32 to index
    %c0_126 = arith.constant 0 : index
    %c0_127 = arith.constant 0 : index
    %486 = vector.load %arg15[%485, %c0_126, %c0_127] : memref<8x8x32xbf16, #tpu.memory_space<vmem>>, vector<1x8x32xbf16>
    %487 = vector.shape_cast %486 : vector<1x8x32xbf16> to vector<8x32xbf16>
    %488 = vector.shape_cast %484 : vector<8x32xbf16> to vector<1x8x32xbf16>
    tpu.vector_store %arg15[%485, %c0_126, %c0_127], %488 {strides = array<i32>} : memref<8x8x32xbf16, #tpu.memory_space<vmem>>, vector<1x8x32xbf16>,
    %489 = arith.truncf %480 : vector<8x32xf32> to vector<8x32xbf16>
    %490 = arith.index_cast %399 : i32 to index
    %c0_128 = arith.constant 0 : index
    %c0_129 = arith.constant 0 : index
    %491 = vector.load %arg16[%490, %c0_128, %c0_129] : memref<8x8x32xbf16, #tpu.memory_space<vmem>>, vector<1x8x32xbf16>
    %492 = vector.shape_cast %491 : vector<1x8x32xbf16> to vector<8x32xbf16>
    %493 = vector.shape_cast %489 : vector<8x32xbf16> to vector<1x8x32xbf16>
    tpu.vector_store %arg16[%490, %c0_128, %c0_129], %493 {strides = array<i32>} : memref<8x8x32xbf16, #tpu.memory_space<vmem>>, vector<1x8x32xbf16>,
    %c5_i32 = arith.constant 5 : i32
    %c7_i32_130 = arith.constant 7 : i32
    %494 = arith.subi %c7_i32_130, %c5_i32 : i32
    %495 = tpu.concatenate %474, %480 in 1 : vector<8x32xf32>, vector<8x32xf32> -> vector<8x64xf32>
    %cst_131 = arith.constant dense<0.000000e+00> : vector<8x256xf32>
    %496 = tpu.matmul %495, %16, %cst_131 {dimension_numbers = #tpu.dot_dimension_numbers<[1], [0], [0], [1], [0, 0, 1, 1], [], []>} : vector<8x64xf32>, vector<64x256xf32>, vector<8x256xf32> -> vector<8x256xf32>
    %497 = arith.index_cast %c5_i32 : i32 to index
    %c0_132 = arith.constant 0 : index
    %c0_133 = arith.constant 0 : index
    %498 = vector.load %arg13[%497, %c0_132, %c0_133] : memref<8x8x128xf32, #tpu.memory_space<vmem>>, vector<1x8x128xf32>
    %499 = vector.shape_cast %498 : vector<1x8x128xf32> to vector<8x128xf32>
    %500 = vector.extract_strided_slice %496 {offsets = [0, 0], sizes = [8, 128], strides = [1, 1]} : vector<8x256xf32> to vector<8x128xf32>
    %501 = arith.addf %499, %500 : vector<8x128xf32>
    %502 = vector.extract_strided_slice %501 {offsets = [0, 0], sizes = [8, 32], strides = [1, 1]} : vector<8x128xf32> to vector<8x32xf32>
    %503 = arith.negf %502 : vector<8x32xf32>
    %504 = math.exp %503 : vector<8x32xf32>
    %cst_134 = arith.constant 1.000000e+00 : f32
    %505 = vector.broadcast %cst_134 : f32 to vector<8x32xf32>
    %506 = arith.addf %505, %504 : vector<8x32xf32>
    %507 = arith.divf %505, %506 : vector<8x32xf32>
    %508 = vector.extract_strided_slice %501 {offsets = [0, 32], sizes = [8, 32], strides = [1, 1]} : vector<8x128xf32> to vector<8x32xf32>
    %509 = arith.negf %508 : vector<8x32xf32>
    %510 = math.exp %509 : vector<8x32xf32>
    %cst_135 = arith.constant 1.000000e+00 : f32
    %511 = vector.broadcast %cst_135 : f32 to vector<8x32xf32>
    %512 = arith.addf %511, %510 : vector<8x32xf32>
    %513 = arith.divf %511, %512 : vector<8x32xf32>
    %514 = vector.extract_strided_slice %501 {offsets = [0, 64], sizes = [8, 32], strides = [1, 1]} : vector<8x128xf32> to vector<8x32xf32>
    %515 = math.tanh %514 : vector<8x32xf32>
    %516 = vector.extract_strided_slice %501 {offsets = [0, 96], sizes = [8, 32], strides = [1, 1]} : vector<8x128xf32> to vector<8x32xf32>
    %517 = arith.negf %516 : vector<8x32xf32>
    %518 = math.exp %517 : vector<8x32xf32>
    %cst_136 = arith.constant 1.000000e+00 : f32
    %519 = vector.broadcast %cst_136 : f32 to vector<8x32xf32>
    %520 = arith.addf %519, %518 : vector<8x32xf32>
    %521 = arith.divf %519, %520 : vector<8x32xf32>
    %522 = arith.mulf %513, %477 : vector<8x32xf32>
    %523 = arith.mulf %507, %515 : vector<8x32xf32>
    %524 = arith.addf %522, %523 : vector<8x32xf32>
    %525 = math.tanh %524 : vector<8x32xf32>
    %526 = arith.mulf %521, %525 : vector<8x32xf32>
    %527 = arith.index_cast %494 : i32 to index
    %c0_137 = arith.constant 0 : index
    %c0_138 = arith.constant 0 : index
    %528 = vector.load %arg14[%527, %c0_137, %c0_138] : memref<8x8x128xf32, #tpu.memory_space<vmem>>, vector<1x8x128xf32>
    %529 = vector.shape_cast %528 : vector<1x8x128xf32> to vector<8x128xf32>
    %530 = vector.extract_strided_slice %496 {offsets = [0, 128], sizes = [8, 128], strides = [1, 1]} : vector<8x256xf32> to vector<8x128xf32>
    %531 = arith.addf %529, %530 : vector<8x128xf32>
    %532 = vector.extract_strided_slice %531 {offsets = [0, 0], sizes = [8, 32], strides = [1, 1]} : vector<8x128xf32> to vector<8x32xf32>
    %533 = arith.negf %532 : vector<8x32xf32>
    %534 = math.exp %533 : vector<8x32xf32>
    %cst_139 = arith.constant 1.000000e+00 : f32
    %535 = vector.broadcast %cst_139 : f32 to vector<8x32xf32>
    %536 = arith.addf %535, %534 : vector<8x32xf32>
    %537 = arith.divf %535, %536 : vector<8x32xf32>
    %538 = vector.extract_strided_slice %531 {offsets = [0, 32], sizes = [8, 32], strides = [1, 1]} : vector<8x128xf32> to vector<8x32xf32>
    %539 = arith.negf %538 : vector<8x32xf32>
    %540 = math.exp %539 : vector<8x32xf32>
    %cst_140 = arith.constant 1.000000e+00 : f32
    %541 = vector.broadcast %cst_140 : f32 to vector<8x32xf32>
    %542 = arith.addf %541, %540 : vector<8x32xf32>
    %543 = arith.divf %541, %542 : vector<8x32xf32>
    %544 = vector.extract_strided_slice %531 {offsets = [0, 64], sizes = [8, 32], strides = [1, 1]} : vector<8x128xf32> to vector<8x32xf32>
    %545 = math.tanh %544 : vector<8x32xf32>
    %546 = vector.extract_strided_slice %531 {offsets = [0, 96], sizes = [8, 32], strides = [1, 1]} : vector<8x128xf32> to vector<8x32xf32>
    %547 = arith.negf %546 : vector<8x32xf32>
    %548 = math.exp %547 : vector<8x32xf32>
    %cst_141 = arith.constant 1.000000e+00 : f32
    %549 = vector.broadcast %cst_141 : f32 to vector<8x32xf32>
    %550 = arith.addf %549, %548 : vector<8x32xf32>
    %551 = arith.divf %549, %550 : vector<8x32xf32>
    %552 = arith.mulf %543, %483 : vector<8x32xf32>
    %553 = arith.mulf %537, %545 : vector<8x32xf32>
    %554 = arith.addf %552, %553 : vector<8x32xf32>
    %555 = math.tanh %554 : vector<8x32xf32>
    %556 = arith.mulf %551, %555 : vector<8x32xf32>
    %557 = arith.index_cast %c5_i32 : i32 to index
    %c0_142 = arith.constant 0 : index
    %c0_143 = arith.constant 0 : index
    %558 = vector.load %arg2[%557, %c0_142, %c0_143] : memref<8x8x1xf32, #tpu.memory_space<vmem>>, vector<1x8x1xf32>
    %559 = vector.shape_cast %558 : vector<1x8x1xf32> to vector<8x1xf32>
    %cst_144 = arith.constant 0.000000e+00 : f32
    %560 = vector.broadcast %cst_144 : f32 to vector<8x1xf32>
    %561 = arith.cmpf ogt, %559, %560 : vector<8x1xf32>
    %562 = arith.index_cast %494 : i32 to index
    %c0_145 = arith.constant 0 : index
    %c0_146 = arith.constant 0 : index
    %563 = vector.load %arg2[%562, %c0_145, %c0_146] : memref<8x8x1xf32, #tpu.memory_space<vmem>>, vector<1x8x1xf32>
    %564 = vector.shape_cast %563 : vector<1x8x1xf32> to vector<8x1xf32>
    %cst_147 = arith.constant 0.000000e+00 : f32
    %565 = vector.broadcast %cst_147 : f32 to vector<8x1xf32>
    %566 = arith.cmpf ogt, %564, %565 : vector<8x1xf32>
    %567 = vector.shape_cast %561 : vector<8x1xi1> to vector<8x1xi1>
    %568 = vector.broadcast %567 : vector<8x1xi1> to vector<8x32xi1>
    %569 = arith.select %568, %526, %474 : vector<8x32xi1>, vector<8x32xf32>
    %570 = vector.shape_cast %561 : vector<8x1xi1> to vector<8x1xi1>
    %571 = vector.broadcast %570 : vector<8x1xi1> to vector<8x32xi1>
    %572 = arith.select %571, %524, %477 : vector<8x32xi1>, vector<8x32xf32>
    %573 = vector.shape_cast %566 : vector<8x1xi1> to vector<8x1xi1>
    %574 = vector.broadcast %573 : vector<8x1xi1> to vector<8x32xi1>
    %575 = arith.select %574, %556, %480 : vector<8x32xi1>, vector<8x32xf32>
    %576 = vector.shape_cast %566 : vector<8x1xi1> to vector<8x1xi1>
    %577 = vector.broadcast %576 : vector<8x1xi1> to vector<8x32xi1>
    %578 = arith.select %577, %554, %483 : vector<8x32xi1>, vector<8x32xf32>
    %579 = arith.truncf %569 : vector<8x32xf32> to vector<8x32xbf16>
    %580 = arith.index_cast %c5_i32 : i32 to index
    %c0_148 = arith.constant 0 : index
    %c0_149 = arith.constant 0 : index
    %581 = vector.load %arg15[%580, %c0_148, %c0_149] : memref<8x8x32xbf16, #tpu.memory_space<vmem>>, vector<1x8x32xbf16>
    %582 = vector.shape_cast %581 : vector<1x8x32xbf16> to vector<8x32xbf16>
    %583 = vector.shape_cast %579 : vector<8x32xbf16> to vector<1x8x32xbf16>
    tpu.vector_store %arg15[%580, %c0_148, %c0_149], %583 {strides = array<i32>} : memref<8x8x32xbf16, #tpu.memory_space<vmem>>, vector<1x8x32xbf16>,
    %584 = arith.truncf %575 : vector<8x32xf32> to vector<8x32xbf16>
    %585 = arith.index_cast %494 : i32 to index
    %c0_150 = arith.constant 0 : index
    %c0_151 = arith.constant 0 : index
    %586 = vector.load %arg16[%585, %c0_150, %c0_151] : memref<8x8x32xbf16, #tpu.memory_space<vmem>>, vector<1x8x32xbf16>
    %587 = vector.shape_cast %586 : vector<1x8x32xbf16> to vector<8x32xbf16>
    %588 = vector.shape_cast %584 : vector<8x32xbf16> to vector<1x8x32xbf16>
    tpu.vector_store %arg16[%585, %c0_150, %c0_151], %588 {strides = array<i32>} : memref<8x8x32xbf16, #tpu.memory_space<vmem>>, vector<1x8x32xbf16>,
    %c6_i32 = arith.constant 6 : i32
    %c7_i32_152 = arith.constant 7 : i32
    %589 = arith.subi %c7_i32_152, %c6_i32 : i32
    %590 = tpu.concatenate %569, %575 in 1 : vector<8x32xf32>, vector<8x32xf32> -> vector<8x64xf32>
    %cst_153 = arith.constant dense<0.000000e+00> : vector<8x256xf32>
    %591 = tpu.matmul %590, %16, %cst_153 {dimension_numbers = #tpu.dot_dimension_numbers<[1], [0], [0], [1], [0, 0, 1, 1], [], []>} : vector<8x64xf32>, vector<64x256xf32>, vector<8x256xf32> -> vector<8x256xf32>
    %592 = arith.index_cast %c6_i32 : i32 to index
    %c0_154 = arith.constant 0 : index
    %c0_155 = arith.constant 0 : index
    %593 = vector.load %arg13[%592, %c0_154, %c0_155] : memref<8x8x128xf32, #tpu.memory_space<vmem>>, vector<1x8x128xf32>
    %594 = vector.shape_cast %593 : vector<1x8x128xf32> to vector<8x128xf32>
    %595 = vector.extract_strided_slice %591 {offsets = [0, 0], sizes = [8, 128], strides = [1, 1]} : vector<8x256xf32> to vector<8x128xf32>
    %596 = arith.addf %594, %595 : vector<8x128xf32>
    %597 = vector.extract_strided_slice %596 {offsets = [0, 0], sizes = [8, 32], strides = [1, 1]} : vector<8x128xf32> to vector<8x32xf32>
    %598 = arith.negf %597 : vector<8x32xf32>
    %599 = math.exp %598 : vector<8x32xf32>
    %cst_156 = arith.constant 1.000000e+00 : f32
    %600 = vector.broadcast %cst_156 : f32 to vector<8x32xf32>
    %601 = arith.addf %600, %599 : vector<8x32xf32>
    %602 = arith.divf %600, %601 : vector<8x32xf32>
    %603 = vector.extract_strided_slice %596 {offsets = [0, 32], sizes = [8, 32], strides = [1, 1]} : vector<8x128xf32> to vector<8x32xf32>
    %604 = arith.negf %603 : vector<8x32xf32>
    %605 = math.exp %604 : vector<8x32xf32>
    %cst_157 = arith.constant 1.000000e+00 : f32
    %606 = vector.broadcast %cst_157 : f32 to vector<8x32xf32>
    %607 = arith.addf %606, %605 : vector<8x32xf32>
    %608 = arith.divf %606, %607 : vector<8x32xf32>
    %609 = vector.extract_strided_slice %596 {offsets = [0, 64], sizes = [8, 32], strides = [1, 1]} : vector<8x128xf32> to vector<8x32xf32>
    %610 = math.tanh %609 : vector<8x32xf32>
    %611 = vector.extract_strided_slice %596 {offsets = [0, 96], sizes = [8, 32], strides = [1, 1]} : vector<8x128xf32> to vector<8x32xf32>
    %612 = arith.negf %611 : vector<8x32xf32>
    %613 = math.exp %612 : vector<8x32xf32>
    %cst_158 = arith.constant 1.000000e+00 : f32
    %614 = vector.broadcast %cst_158 : f32 to vector<8x32xf32>
    %615 = arith.addf %614, %613 : vector<8x32xf32>
    %616 = arith.divf %614, %615 : vector<8x32xf32>
    %617 = arith.mulf %608, %572 : vector<8x32xf32>
    %618 = arith.mulf %602, %610 : vector<8x32xf32>
    %619 = arith.addf %617, %618 : vector<8x32xf32>
    %620 = math.tanh %619 : vector<8x32xf32>
    %621 = arith.mulf %616, %620 : vector<8x32xf32>
    %622 = arith.index_cast %589 : i32 to index
    %c0_159 = arith.constant 0 : index
    %c0_160 = arith.constant 0 : index
    %623 = vector.load %arg14[%622, %c0_159, %c0_160] : memref<8x8x128xf32, #tpu.memory_space<vmem>>, vector<1x8x128xf32>
    %624 = vector.shape_cast %623 : vector<1x8x128xf32> to vector<8x128xf32>
    %625 = vector.extract_strided_slice %591 {offsets = [0, 128], sizes = [8, 128], strides = [1, 1]} : vector<8x256xf32> to vector<8x128xf32>
    %626 = arith.addf %624, %625 : vector<8x128xf32>
    %627 = vector.extract_strided_slice %626 {offsets = [0, 0], sizes = [8, 32], strides = [1, 1]} : vector<8x128xf32> to vector<8x32xf32>
    %628 = arith.negf %627 : vector<8x32xf32>
    %629 = math.exp %628 : vector<8x32xf32>
    %cst_161 = arith.constant 1.000000e+00 : f32
    %630 = vector.broadcast %cst_161 : f32 to vector<8x32xf32>
    %631 = arith.addf %630, %629 : vector<8x32xf32>
    %632 = arith.divf %630, %631 : vector<8x32xf32>
    %633 = vector.extract_strided_slice %626 {offsets = [0, 32], sizes = [8, 32], strides = [1, 1]} : vector<8x128xf32> to vector<8x32xf32>
    %634 = arith.negf %633 : vector<8x32xf32>
    %635 = math.exp %634 : vector<8x32xf32>
    %cst_162 = arith.constant 1.000000e+00 : f32
    %636 = vector.broadcast %cst_162 : f32 to vector<8x32xf32>
    %637 = arith.addf %636, %635 : vector<8x32xf32>
    %638 = arith.divf %636, %637 : vector<8x32xf32>
    %639 = vector.extract_strided_slice %626 {offsets = [0, 64], sizes = [8, 32], strides = [1, 1]} : vector<8x128xf32> to vector<8x32xf32>
    %640 = math.tanh %639 : vector<8x32xf32>
    %641 = vector.extract_strided_slice %626 {offsets = [0, 96], sizes = [8, 32], strides = [1, 1]} : vector<8x128xf32> to vector<8x32xf32>
    %642 = arith.negf %641 : vector<8x32xf32>
    %643 = math.exp %642 : vector<8x32xf32>
    %cst_163 = arith.constant 1.000000e+00 : f32
    %644 = vector.broadcast %cst_163 : f32 to vector<8x32xf32>
    %645 = arith.addf %644, %643 : vector<8x32xf32>
    %646 = arith.divf %644, %645 : vector<8x32xf32>
    %647 = arith.mulf %638, %578 : vector<8x32xf32>
    %648 = arith.mulf %632, %640 : vector<8x32xf32>
    %649 = arith.addf %647, %648 : vector<8x32xf32>
    %650 = math.tanh %649 : vector<8x32xf32>
    %651 = arith.mulf %646, %650 : vector<8x32xf32>
    %652 = arith.index_cast %c6_i32 : i32 to index
    %c0_164 = arith.constant 0 : index
    %c0_165 = arith.constant 0 : index
    %653 = vector.load %arg2[%652, %c0_164, %c0_165] : memref<8x8x1xf32, #tpu.memory_space<vmem>>, vector<1x8x1xf32>
    %654 = vector.shape_cast %653 : vector<1x8x1xf32> to vector<8x1xf32>
    %cst_166 = arith.constant 0.000000e+00 : f32
    %655 = vector.broadcast %cst_166 : f32 to vector<8x1xf32>
    %656 = arith.cmpf ogt, %654, %655 : vector<8x1xf32>
    %657 = arith.index_cast %589 : i32 to index
    %c0_167 = arith.constant 0 : index
    %c0_168 = arith.constant 0 : index
    %658 = vector.load %arg2[%657, %c0_167, %c0_168] : memref<8x8x1xf32, #tpu.memory_space<vmem>>, vector<1x8x1xf32>
    %659 = vector.shape_cast %658 : vector<1x8x1xf32> to vector<8x1xf32>
    %cst_169 = arith.constant 0.000000e+00 : f32
    %660 = vector.broadcast %cst_169 : f32 to vector<8x1xf32>
    %661 = arith.cmpf ogt, %659, %660 : vector<8x1xf32>
    %662 = vector.shape_cast %656 : vector<8x1xi1> to vector<8x1xi1>
    %663 = vector.broadcast %662 : vector<8x1xi1> to vector<8x32xi1>
    %664 = arith.select %663, %621, %569 : vector<8x32xi1>, vector<8x32xf32>
    %665 = vector.shape_cast %656 : vector<8x1xi1> to vector<8x1xi1>
    %666 = vector.broadcast %665 : vector<8x1xi1> to vector<8x32xi1>
    %667 = arith.select %666, %619, %572 : vector<8x32xi1>, vector<8x32xf32>
    %668 = vector.shape_cast %661 : vector<8x1xi1> to vector<8x1xi1>
    %669 = vector.broadcast %668 : vector<8x1xi1> to vector<8x32xi1>
    %670 = arith.select %669, %651, %575 : vector<8x32xi1>, vector<8x32xf32>
    %671 = vector.shape_cast %661 : vector<8x1xi1> to vector<8x1xi1>
    %672 = vector.broadcast %671 : vector<8x1xi1> to vector<8x32xi1>
    %673 = arith.select %672, %649, %578 : vector<8x32xi1>, vector<8x32xf32>
    %674 = arith.truncf %664 : vector<8x32xf32> to vector<8x32xbf16>
    %675 = arith.index_cast %c6_i32 : i32 to index
    %c0_170 = arith.constant 0 : index
    %c0_171 = arith.constant 0 : index
    %676 = vector.load %arg15[%675, %c0_170, %c0_171] : memref<8x8x32xbf16, #tpu.memory_space<vmem>>, vector<1x8x32xbf16>
    %677 = vector.shape_cast %676 : vector<1x8x32xbf16> to vector<8x32xbf16>
    %678 = vector.shape_cast %674 : vector<8x32xbf16> to vector<1x8x32xbf16>
    tpu.vector_store %arg15[%675, %c0_170, %c0_171], %678 {strides = array<i32>} : memref<8x8x32xbf16, #tpu.memory_space<vmem>>, vector<1x8x32xbf16>,
    %679 = arith.truncf %670 : vector<8x32xf32> to vector<8x32xbf16>
    %680 = arith.index_cast %589 : i32 to index
    %c0_172 = arith.constant 0 : index
    %c0_173 = arith.constant 0 : index
    %681 = vector.load %arg16[%680, %c0_172, %c0_173] : memref<8x8x32xbf16, #tpu.memory_space<vmem>>, vector<1x8x32xbf16>
    %682 = vector.shape_cast %681 : vector<1x8x32xbf16> to vector<8x32xbf16>
    %683 = vector.shape_cast %679 : vector<8x32xbf16> to vector<1x8x32xbf16>
    tpu.vector_store %arg16[%680, %c0_172, %c0_173], %683 {strides = array<i32>} : memref<8x8x32xbf16, #tpu.memory_space<vmem>>, vector<1x8x32xbf16>,
    %c7_i32_174 = arith.constant 7 : i32
    %c7_i32_175 = arith.constant 7 : i32
    %684 = arith.subi %c7_i32_175, %c7_i32_174 : i32
    %685 = tpu.concatenate %664, %670 in 1 : vector<8x32xf32>, vector<8x32xf32> -> vector<8x64xf32>
    %cst_176 = arith.constant dense<0.000000e+00> : vector<8x256xf32>
    %686 = tpu.matmul %685, %16, %cst_176 {dimension_numbers = #tpu.dot_dimension_numbers<[1], [0], [0], [1], [0, 0, 1, 1], [], []>} : vector<8x64xf32>, vector<64x256xf32>, vector<8x256xf32> -> vector<8x256xf32>
    %687 = arith.index_cast %c7_i32_174 : i32 to index
    %c0_177 = arith.constant 0 : index
    %c0_178 = arith.constant 0 : index
    %688 = vector.load %arg13[%687, %c0_177, %c0_178] : memref<8x8x128xf32, #tpu.memory_space<vmem>>, vector<1x8x128xf32>
    %689 = vector.shape_cast %688 : vector<1x8x128xf32> to vector<8x128xf32>
    %690 = vector.extract_strided_slice %686 {offsets = [0, 0], sizes = [8, 128], strides = [1, 1]} : vector<8x256xf32> to vector<8x128xf32>
    %691 = arith.addf %689, %690 : vector<8x128xf32>
    %692 = vector.extract_strided_slice %691 {offsets = [0, 0], sizes = [8, 32], strides = [1, 1]} : vector<8x128xf32> to vector<8x32xf32>
    %693 = arith.negf %692 : vector<8x32xf32>
    %694 = math.exp %693 : vector<8x32xf32>
    %cst_179 = arith.constant 1.000000e+00 : f32
    %695 = vector.broadcast %cst_179 : f32 to vector<8x32xf32>
    %696 = arith.addf %695, %694 : vector<8x32xf32>
    %697 = arith.divf %695, %696 : vector<8x32xf32>
    %698 = vector.extract_strided_slice %691 {offsets = [0, 32], sizes = [8, 32], strides = [1, 1]} : vector<8x128xf32> to vector<8x32xf32>
    %699 = arith.negf %698 : vector<8x32xf32>
    %700 = math.exp %699 : vector<8x32xf32>
    %cst_180 = arith.constant 1.000000e+00 : f32
    %701 = vector.broadcast %cst_180 : f32 to vector<8x32xf32>
    %702 = arith.addf %701, %700 : vector<8x32xf32>
    %703 = arith.divf %701, %702 : vector<8x32xf32>
    %704 = vector.extract_strided_slice %691 {offsets = [0, 64], sizes = [8, 32], strides = [1, 1]} : vector<8x128xf32> to vector<8x32xf32>
    %705 = math.tanh %704 : vector<8x32xf32>
    %706 = vector.extract_strided_slice %691 {offsets = [0, 96], sizes = [8, 32], strides = [1, 1]} : vector<8x128xf32> to vector<8x32xf32>
    %707 = arith.negf %706 : vector<8x32xf32>
    %708 = math.exp %707 : vector<8x32xf32>
    %cst_181 = arith.constant 1.000000e+00 : f32
    %709 = vector.broadcast %cst_181 : f32 to vector<8x32xf32>
    %710 = arith.addf %709, %708 : vector<8x32xf32>
    %711 = arith.divf %709, %710 : vector<8x32xf32>
    %712 = arith.mulf %703, %667 : vector<8x32xf32>
    %713 = arith.mulf %697, %705 : vector<8x32xf32>
    %714 = arith.addf %712, %713 : vector<8x32xf32>
    %715 = math.tanh %714 : vector<8x32xf32>
    %716 = arith.mulf %711, %715 : vector<8x32xf32>
    %717 = arith.index_cast %684 : i32 to index
    %c0_182 = arith.constant 0 : index
    %c0_183 = arith.constant 0 : index
    %718 = vector.load %arg14[%717, %c0_182, %c0_183] : memref<8x8x128xf32, #tpu.memory_space<vmem>>, vector<1x8x128xf32>
    %719 = vector.shape_cast %718 : vector<1x8x128xf32> to vector<8x128xf32>
    %720 = vector.extract_strided_slice %686 {offsets = [0, 128], sizes = [8, 128], strides = [1, 1]} : vector<8x256xf32> to vector<8x128xf32>
    %721 = arith.addf %719, %720 : vector<8x128xf32>
    %722 = vector.extract_strided_slice %721 {offsets = [0, 0], sizes = [8, 32], strides = [1, 1]} : vector<8x128xf32> to vector<8x32xf32>
    %723 = arith.negf %722 : vector<8x32xf32>
    %724 = math.exp %723 : vector<8x32xf32>
    %cst_184 = arith.constant 1.000000e+00 : f32
    %725 = vector.broadcast %cst_184 : f32 to vector<8x32xf32>
    %726 = arith.addf %725, %724 : vector<8x32xf32>
    %727 = arith.divf %725, %726 : vector<8x32xf32>
    %728 = vector.extract_strided_slice %721 {offsets = [0, 32], sizes = [8, 32], strides = [1, 1]} : vector<8x128xf32> to vector<8x32xf32>
    %729 = arith.negf %728 : vector<8x32xf32>
    %730 = math.exp %729 : vector<8x32xf32>
    %cst_185 = arith.constant 1.000000e+00 : f32
    %731 = vector.broadcast %cst_185 : f32 to vector<8x32xf32>
    %732 = arith.addf %731, %730 : vector<8x32xf32>
    %733 = arith.divf %731, %732 : vector<8x32xf32>
    %734 = vector.extract_strided_slice %721 {offsets = [0, 64], sizes = [8, 32], strides = [1, 1]} : vector<8x128xf32> to vector<8x32xf32>
    %735 = math.tanh %734 : vector<8x32xf32>
    %736 = vector.extract_strided_slice %721 {offsets = [0, 96], sizes = [8, 32], strides = [1, 1]} : vector<8x128xf32> to vector<8x32xf32>
    %737 = arith.negf %736 : vector<8x32xf32>
    %738 = math.exp %737 : vector<8x32xf32>
    %cst_186 = arith.constant 1.000000e+00 : f32
    %739 = vector.broadcast %cst_186 : f32 to vector<8x32xf32>
    %740 = arith.addf %739, %738 : vector<8x32xf32>
    %741 = arith.divf %739, %740 : vector<8x32xf32>
    %742 = arith.mulf %733, %673 : vector<8x32xf32>
    %743 = arith.mulf %727, %735 : vector<8x32xf32>
    %744 = arith.addf %742, %743 : vector<8x32xf32>
    %745 = math.tanh %744 : vector<8x32xf32>
    %746 = arith.mulf %741, %745 : vector<8x32xf32>
    %747 = arith.index_cast %c7_i32_174 : i32 to index
    %c0_187 = arith.constant 0 : index
    %c0_188 = arith.constant 0 : index
    %748 = vector.load %arg2[%747, %c0_187, %c0_188] : memref<8x8x1xf32, #tpu.memory_space<vmem>>, vector<1x8x1xf32>
    %749 = vector.shape_cast %748 : vector<1x8x1xf32> to vector<8x1xf32>
    %cst_189 = arith.constant 0.000000e+00 : f32
    %750 = vector.broadcast %cst_189 : f32 to vector<8x1xf32>
    %751 = arith.cmpf ogt, %749, %750 : vector<8x1xf32>
    %752 = arith.index_cast %684 : i32 to index
    %c0_190 = arith.constant 0 : index
    %c0_191 = arith.constant 0 : index
    %753 = vector.load %arg2[%752, %c0_190, %c0_191] : memref<8x8x1xf32, #tpu.memory_space<vmem>>, vector<1x8x1xf32>
    %754 = vector.shape_cast %753 : vector<1x8x1xf32> to vector<8x1xf32>
    %cst_192 = arith.constant 0.000000e+00 : f32
    %755 = vector.broadcast %cst_192 : f32 to vector<8x1xf32>
    %756 = arith.cmpf ogt, %754, %755 : vector<8x1xf32>
    %757 = vector.shape_cast %751 : vector<8x1xi1> to vector<8x1xi1>
    %758 = vector.broadcast %757 : vector<8x1xi1> to vector<8x32xi1>
    %759 = arith.select %758, %716, %664 : vector<8x32xi1>, vector<8x32xf32>
    %760 = vector.shape_cast %751 : vector<8x1xi1> to vector<8x1xi1>
    %761 = vector.broadcast %760 : vector<8x1xi1> to vector<8x32xi1>
    %762 = arith.select %761, %714, %667 : vector<8x32xi1>, vector<8x32xf32>
    %763 = vector.shape_cast %756 : vector<8x1xi1> to vector<8x1xi1>
    %764 = vector.broadcast %763 : vector<8x1xi1> to vector<8x32xi1>
    %765 = arith.select %764, %746, %670 : vector<8x32xi1>, vector<8x32xf32>
    %766 = vector.shape_cast %756 : vector<8x1xi1> to vector<8x1xi1>
    %767 = vector.broadcast %766 : vector<8x1xi1> to vector<8x32xi1>
    %768 = arith.select %767, %744, %673 : vector<8x32xi1>, vector<8x32xf32>
    %769 = arith.truncf %759 : vector<8x32xf32> to vector<8x32xbf16>
    %770 = arith.index_cast %c7_i32_174 : i32 to index
    %c0_193 = arith.constant 0 : index
    %c0_194 = arith.constant 0 : index
    %771 = vector.load %arg15[%770, %c0_193, %c0_194] : memref<8x8x32xbf16, #tpu.memory_space<vmem>>, vector<1x8x32xbf16>
    %772 = vector.shape_cast %771 : vector<1x8x32xbf16> to vector<8x32xbf16>
    %773 = vector.shape_cast %769 : vector<8x32xbf16> to vector<1x8x32xbf16>
    tpu.vector_store %arg15[%770, %c0_193, %c0_194], %773 {strides = array<i32>} : memref<8x8x32xbf16, #tpu.memory_space<vmem>>, vector<1x8x32xbf16>,
    %774 = arith.truncf %765 : vector<8x32xf32> to vector<8x32xbf16>
    %775 = arith.index_cast %684 : i32 to index
    %c0_195 = arith.constant 0 : index
    %c0_196 = arith.constant 0 : index
    %776 = vector.load %arg16[%775, %c0_195, %c0_196] : memref<8x8x32xbf16, #tpu.memory_space<vmem>>, vector<1x8x32xbf16>
    %777 = vector.shape_cast %776 : vector<1x8x32xbf16> to vector<8x32xbf16>
    %778 = vector.shape_cast %774 : vector<8x32xbf16> to vector<1x8x32xbf16>
    tpu.vector_store %arg16[%775, %c0_195, %c0_196], %778 {strides = array<i32>} : memref<8x8x32xbf16, #tpu.memory_space<vmem>>, vector<1x8x32xbf16>,
    %c8_i32 = arith.constant 8 : i32
    %c0_197 = arith.constant 0 : index
    %c0_198 = arith.constant 0 : index
    %c0_199 = arith.constant 0 : index
    %779 = vector.load %arg15[%c0_197, %c0_198, %c0_199] : memref<8x8x32xbf16, #tpu.memory_space<vmem>>, vector<8x8x32xbf16>
    %780 = vector.shape_cast %779 : vector<8x8x32xbf16> to vector<64x32xbf16>
    %c0_200 = arith.constant 0 : index
    %c0_201 = arith.constant 0 : index
    %c0_202 = arith.constant 0 : index
    %781 = vector.load %arg16[%c0_200, %c0_201, %c0_202] : memref<8x8x32xbf16, #tpu.memory_space<vmem>>, vector<8x8x32xbf16>
    %782 = vector.shape_cast %781 : vector<8x8x32xbf16> to vector<64x32xbf16>
    %c0_203 = arith.constant 0 : index
    %c0_204 = arith.constant 0 : index
    %783 = vector.load %arg9[%c0_203, %c0_204] : memref<32x128xbf16, #tpu.memory_space<vmem>>, vector<32x128xbf16>
    %cst_205 = arith.constant dense<0.000000e+00> : vector<64x128xf32>
    %784 = tpu.matmul %780, %783, %cst_205 {dimension_numbers = #tpu.dot_dimension_numbers<[1], [0], [0], [1], [0, 0, 1, 1], [], []>} : vector<64x32xbf16>, vector<32x128xbf16>, vector<64x128xf32> -> vector<64x128xf32>
    %c0_206 = arith.constant 0 : index
    %c0_207 = arith.constant 0 : index
    %785 = vector.load %arg10[%c0_206, %c0_207] : memref<32x128xbf16, #tpu.memory_space<vmem>>, vector<32x128xbf16>
    %cst_208 = arith.constant dense<0.000000e+00> : vector<64x128xf32>
    %786 = tpu.matmul %782, %785, %cst_208 {dimension_numbers = #tpu.dot_dimension_numbers<[1], [0], [0], [1], [0, 0, 1, 1], [], []>} : vector<64x32xbf16>, vector<32x128xbf16>, vector<64x128xf32> -> vector<64x128xf32>
    %787 = arith.addf %784, %786 : vector<64x128xf32>
    %c0_209 = arith.constant 0 : index
    %c0_210 = arith.constant 0 : index
    %788 = vector.load %arg11[%c0_209, %c0_210] : memref<1x128xf32, #tpu.memory_space<vmem>>, vector<1x128xf32>
    %789 = vector.broadcast %788 : vector<1x128xf32> to vector<64x128xf32>
    %790 = arith.addf %787, %789 : vector<64x128xf32>
    %791 = vector.shape_cast %790 : vector<64x128xf32> to vector<8x8x128xf32>
    %792 = tpu.iota {dimensions = array<i32: 2>} : vector<8x8x128xi32>
    %cst_211 = arith.constant dense<0xFF800000> : vector<8x8xf32>
    %793 = vector.multi_reduction <maximumf>, %791, %cst_211 [2] : vector<8x8x128xf32> to vector<8x8xf32>
    %794 = vector.shape_cast %793 : vector<8x8xf32> to vector<8x8x1xf32>
    %795 = vector.broadcast %794 : vector<8x8x1xf32> to vector<8x8x128xf32>
    %796 = arith.cmpf oeq, %791, %795 : vector<8x8x128xf32>
    %c128_i32 = arith.constant 128 : i32
    %797 = vector.broadcast %c128_i32 : i32 to vector<8x8x128xi32>
    %798 = arith.select %796, %792, %797 : vector<8x8x128xi1>, vector<8x8x128xi32>
    %cst_212 = arith.constant dense<2147483647> : vector<8x8xi32>
    %799 = vector.multi_reduction <minsi>, %798, %cst_212 [2] : vector<8x8x128xi32> to vector<8x8xi32>
    %c0_213 = arith.constant 0 : index
    %c0_214 = arith.constant 0 : index
    %800 = vector.load %arg3[%c0_213, %c0_214] : memref<8x8xi32, #tpu.memory_space<vmem>>, vector<8x8xi32>
    %801 = tpu.transpose %799, [1, 0] : vector<8x8xi32> -> vector<8x8xi32>
    %802 = arith.muli %800, %801 : vector<8x8xi32>
    %c0_215 = arith.constant 0 : index
    %c0_216 = arith.constant 0 : index
    %803 = vector.load %arg12[%c0_215, %c0_216] : memref<8x8xi32, #tpu.memory_space<vmem>>, vector<8x8xi32>
    tpu.vector_store %arg12[%c0_215, %c0_216], %802 {strides = array<i32>} : memref<8x8xi32, #tpu.memory_space<vmem>>, vector<8x8xi32>,
    return
  }
  func.func @transform_0(%arg0: i32) -> (i32, i32, i32) {
    %c0_i32 = arith.constant 0 : i32
    %c0_i32_0 = arith.constant 0 : i32
    %c0_i32_1 = arith.constant 0 : i32
    return %c0_i32, %arg0, %c0_i32_0 : i32, i32, i32
  }
  func.func @transform_1(%arg0: i32) -> (i32, i32, i32) {
    %c0_i32 = arith.constant 0 : i32
    %c0_i32_0 = arith.constant 0 : i32
    %c0_i32_1 = arith.constant 0 : i32
    return %c0_i32, %arg0, %c0_i32_0 : i32, i32, i32
  }
  func.func @transform_2(%arg0: i32) -> (i32, i32) {
    %c0_i32 = arith.constant 0 : i32
    %c0_i32_0 = arith.constant 0 : i32
    return %arg0, %c0_i32 : i32, i32
  }
  func.func @transform_3(%arg0: i32) -> (i32, i32) {
    %c0_i32 = arith.constant 0 : i32
    %c0_i32_0 = arith.constant 0 : i32
    %c0_i32_1 = arith.constant 0 : i32
    return %c0_i32, %c0_i32_0 : i32, i32
  }
  func.func @transform_4(%arg0: i32) -> (i32, i32) {
    %c0_i32 = arith.constant 0 : i32
    %c0_i32_0 = arith.constant 0 : i32
    %c0_i32_1 = arith.constant 0 : i32
    return %c0_i32, %c0_i32_0 : i32, i32
  }
  func.func @transform_5(%arg0: i32) -> (i32, i32) {
    %c0_i32 = arith.constant 0 : i32
    %c0_i32_0 = arith.constant 0 : i32
    %c0_i32_1 = arith.constant 0 : i32
    return %c0_i32, %c0_i32_0 : i32, i32
  }
  func.func @transform_6(%arg0: i32) -> (i32, i32) {
    %c0_i32 = arith.constant 0 : i32
    %c0_i32_0 = arith.constant 0 : i32
    %c0_i32_1 = arith.constant 0 : i32
    return %c0_i32, %c0_i32_0 : i32, i32
  }
  func.func @transform_7(%arg0: i32) -> (i32, i32) {
    %c0_i32 = arith.constant 0 : i32
    %c0_i32_0 = arith.constant 0 : i32
    %c0_i32_1 = arith.constant 0 : i32
    return %c0_i32, %c0_i32_0 : i32, i32
  }
  func.func @transform_8(%arg0: i32) -> (i32, i32) {
    %c0_i32 = arith.constant 0 : i32
    %c0_i32_0 = arith.constant 0 : i32
    %c0_i32_1 = arith.constant 0 : i32
    return %c0_i32, %c0_i32_0 : i32, i32
  }
  func.func @transform_9(%arg0: i32) -> (i32, i32) {
    %c0_i32 = arith.constant 0 : i32
    %c0_i32_0 = arith.constant 0 : i32
    %c0_i32_1 = arith.constant 0 : i32
    return %c0_i32, %c0_i32_0 : i32, i32
  }
  func.func @transform_10(%arg0: i32) -> (i32, i32) {
    %c0_i32 = arith.constant 0 : i32
    %c0_i32_0 = arith.constant 0 : i32
    %c0_i32_1 = arith.constant 0 : i32
    return %c0_i32, %c0_i32_0 : i32, i32
  }
  func.func @transform_11(%arg0: i32) -> (i32, i32) {
    %c0_i32 = arith.constant 0 : i32
    %c0_i32_0 = arith.constant 0 : i32
    return %arg0, %c0_i32 : i32, i32
  }
}

</mosaic_0001>

<llo_original>
// kernel: tpu_custom_call.1
$region0: #{tpu_custom_call.1}
  #allocation0 [shape = 'u32[]', space=smem, size = 0x4, offset = 0x4, fixed_abs, tag = 'smem constant byte address 0x4 - core index']
  #allocation1 [shape = 'u32[144,128]{1,0:T(1,128)}', space=vmem, size = 0x12000, scoped, tag = 'internal scratch']
  #allocation2 [shape = 'f32[8,8,128]{2,1,0:T(8,128)}', space=vmem, size = 0x8000, scoped, tag = 'scratch operand']
  #allocation3 [shape = 'f32[8,8,128]{2,1,0:T(8,128)}', space=vmem, size = 0x8000, scoped, tag = 'scratch operand']
  #allocation4 [shape = 'bf16[8,8,32]{2,1,0:T(8,128)(2,1)}', space=vmem, size = 0x4000, scoped, tag = 'scratch operand']
  #allocation5 [shape = 'bf16[8,8,32]{2,1,0:T(8,128)(2,1)}', space=vmem, size = 0x4000, scoped, tag = 'scratch operand']
  %s0 = inlined_call_operand.vmem [shape: bf16[8,8,32], index: 0, kind: input, shape index: {}]
  %s1 = inlined_call_operand.vmem [shape: f32[8,8,1], index: 1, kind: input, shape index: {}]
  %s2 = inlined_call_operand.hbm [shape: s32[8,8], index: 2, kind: input, shape index: {}]
  %s3 = inlined_call_operand.vmem [shape: bf16[32,128], index: 3, kind: input, shape index: {}]
  %s4 = inlined_call_operand.vmem [shape: bf16[32,128], index: 4, kind: input, shape index: {}]
  %s5 = inlined_call_operand.vmem [shape: f32[1,128], index: 5, kind: input, shape index: {}]
  %s6 = inlined_call_operand.vmem [shape: f32[1,128], index: 6, kind: input, shape index: {}]
  %s7 = inlined_call_operand.hbm [shape: f32[64,256], index: 7, kind: input, shape index: {}]
  %s8 = inlined_call_operand.vmem [shape: bf16[32,128], index: 8, kind: input, shape index: {}]
  %s9 = inlined_call_operand.vmem [shape: bf16[32,128], index: 9, kind: input, shape index: {}]
  %s10 = inlined_call_operand.vmem [shape: f32[1,128], index: 10, kind: input, shape index: {}]
  %s11 = inlined_call_operand.hbm [shape: s32[8,8], index: 11, kind: output, shape index: {}]
  %s12 = sld [smem:[#allocation0]]
  $region62: #{tpu_custom_call.1} parent=0
    _
  %s14 = ssub.s32 1, %s12
  %s15 = scalar_select 0, %s14, %s12
  $region1: #{tpu_custom_call.1} parent=0
    #allocation6 [shape = 'u8[4096]{0}', space=vmem, size = 0x1000, scoped, tag = 'input window, operand 2, single buffered']
    #allocation7 [shape = 's32[1]{0}', space=sflag, size = 0x4, scoped, tag = 'scoped memory for tpu_custom_call.1']
    #allocation8 [shape = 's32[1]{0}', space=sflag, size = 0x4, scoped, tag = 'scoped memory for tpu_custom_call.1']
    #allocation9 [shape = 'u8[65536]{0}', space=vmem, size = 0x10000, scoped, tag = 'input window, operand 7, single buffered']
    #allocation10 [shape = 's32[1]{0}', space=sflag, size = 0x4, scoped, tag = 'scoped memory for tpu_custom_call.1']
    #allocation11 [shape = 'u8[4096]{0}', space=vmem, size = 0x1000, scoped, tag = 'output window, operand 0, single buffered']
    %16 = vsyncpa [#allocation7], 0
    %17 = vsyncpa [#allocation10], 0
    %18 = vsyncpa [#allocation8], 0
    // Predicated region
    $region2: #{tpu_custom_call.1} parent=1 // pred_check
      _
    $region3: #{tpu_custom_call.1} parent=1 // pred_check_branch
      %20 = sbr.rel (0) target = $region5
    $region4: #{tpu_custom_call.1} parent=1 // pred_region
      _
    $region5: #{tpu_custom_call.1} parent=1 // pred_fallthru
      _
    // Predicated region
    $region6: #{tpu_custom_call.1} parent=1 // pred_check
      _
    $region7: #{tpu_custom_call.1} parent=1 // pred_check_branch
      %22 = sbr.rel (0) target = $region9
    $region8: #{tpu_custom_call.1} parent=1 // pred_region
      _
    $region9: #{tpu_custom_call.1} parent=1 // pred_fallthru
      _
    // Predicated region
    $region10: #{tpu_custom_call.1} parent=1 // pred_check
      _
    $region11: #{tpu_custom_call.1} parent=1 // pred_check_branch
      %24 = sbr.rel (0) target = $region13
    $region12: #{tpu_custom_call.1} parent=1 // pred_region
      %s26 = ssub.s32 128, 128
      %27 = vsyncadd [#allocation7], %s26
      %s29 = sshll.u32 [#allocation6], 4
      %s30 = int_to_ptr.vmem [resolvable:$true] %s29
      %32 = dma.hbm_to_vmem [thread:$0]  %s2, 128, %s30, [#allocation7]
    $region13: #{tpu_custom_call.1} parent=1 // pred_fallthru
      _
    // Predicated region
    $region14: #{tpu_custom_call.1} parent=1 // pred_check
      _
    $region15: #{tpu_custom_call.1} parent=1 // pred_check_branch
      %34 = sbr.rel (0) target = $region17
    $region16: #{tpu_custom_call.1} parent=1 // pred_region
      _
    $region17: #{tpu_custom_call.1} parent=1 // pred_fallthru
      _
    // Predicated region
    $region18: #{tpu_custom_call.1} parent=1 // pred_check
      _
    $region19: #{tpu_custom_call.1} parent=1 // pred_check_branch
      %36 = sbr.rel (0) target = $region21
    $region20: #{tpu_custom_call.1} parent=1 // pred_region
      _
    $region21: #{tpu_custom_call.1} parent=1 // pred_fallthru
      _
    // Predicated region
    $region22: #{tpu_custom_call.1} parent=1 // pred_check
      _
    $region23: #{tpu_custom_call.1} parent=1 // pred_check_branch
      %38 = sbr.rel (0) target = $region25
    $region24: #{tpu_custom_call.1} parent=1 // pred_region
      _
    $region25: #{tpu_custom_call.1} parent=1 // pred_fallthru
      _
    // Predicated region
    $region26: #{tpu_custom_call.1} parent=1 // pred_check
      _
    $region27: #{tpu_custom_call.1} parent=1 // pred_check_branch
      %40 = sbr.rel (0) target = $region29
    $region28: #{tpu_custom_call.1} parent=1 // pred_region
      _
    $region29: #{tpu_custom_call.1} parent=1 // pred_fallthru
      _
    // Predicated region
    $region30: #{tpu_custom_call.1} parent=1 // pred_check
      _
    $region31: #{tpu_custom_call.1} parent=1 // pred_check_branch
      %42 = sbr.rel (0) target = $region33
    $region32: #{tpu_custom_call.1} parent=1 // pred_region
      %s44 = ssub.s32 2048, 2048
      %45 = vsyncadd [#allocation10], %s44
      %s46 = sshll.u32 [#allocation9], 4
      %s47 = int_to_ptr.vmem [resolvable:$true] %s46
      %52 = dma.hbm_to_vmem [thread:$0]  %s7, 2048, %s47, [#allocation10], 256, 256, 16
    $region33: #{tpu_custom_call.1} parent=1 // pred_fallthru
      _
    // Predicated region
    $region34: #{tpu_custom_call.1} parent=1 // pred_check
      _
    $region35: #{tpu_custom_call.1} parent=1 // pred_check_branch
      %54 = sbr.rel (0) target = $region37
    $region36: #{tpu_custom_call.1} parent=1 // pred_region
      _
    $region37: #{tpu_custom_call.1} parent=1 // pred_fallthru
      _
    // Predicated region
    $region38: #{tpu_custom_call.1} parent=1 // pred_check
      _
    $region39: #{tpu_custom_call.1} parent=1 // pred_check_branch
      %56 = sbr.rel (0) target = $region41
    $region40: #{tpu_custom_call.1} parent=1 // pred_region
      _
    $region41: #{tpu_custom_call.1} parent=1 // pred_fallthru
      _
    // Predicated region
    $region42: #{tpu_custom_call.1} parent=1 // pred_check
      _
    $region43: #{tpu_custom_call.1} parent=1 // pred_check_branch
      %58 = sbr.rel (0) target = $region45
    $region44: #{tpu_custom_call.1} parent=1 // pred_region
      _
    $region45: #{tpu_custom_call.1} parent=1 // pred_fallthru
      _
    // Predicated region
    $region46: #{tpu_custom_call.1} parent=1 // pred_check
      _
    $region47: #{tpu_custom_call.1} parent=1 // pred_check_branch
      %60 = sbr.rel (0) target = $region49
    $region48: #{tpu_custom_call.1} parent=1 // pred_region
      %61 = dma.done [#allocation7], 128
    $region49: #{tpu_custom_call.1} parent=1 // pred_fallthru
      _
    // Predicated region
    $region50: #{tpu_custom_call.1} parent=1 // pred_check
      _
    $region51: #{tpu_custom_call.1} parent=1 // pred_check_branch
      %63 = sbr.rel (0) target = $region53
    $region52: #{tpu_custom_call.1} parent=1 // pred_region
      %64 = dma.done [#allocation10], 2048
    $region53: #{tpu_custom_call.1} parent=1 // pred_fallthru
      _
    %v66 = vld [vmem:[%s0] sm:$0xf]
    %v67 = vld [vmem:[%s0 + $0x4] sm:$0xf]
    %v68 = vld [vmem:[%s0 + $0x8] sm:$0xf]
    %v69 = vld [vmem:[%s0 + $0xc] sm:$0xf]
    %v70 = vld [vmem:[%s0 + $0x10] sm:$0xf]
    %v71 = vld [vmem:[%s0 + $0x14] sm:$0xf]
    %v72 = vld [vmem:[%s0 + $0x18] sm:$0xf]
    %v73 = vld [vmem:[%s0 + $0x1c] sm:$0xf]
    %v74 = vld [vmem:[%s3] sm:$0xf]
    %v75 = vld [vmem:[%s3 + $0x4] sm:$0xf]
    %v76 = vld [vmem:[%s3 + $0x8] sm:$0xf]
    %v77 = vld [vmem:[%s3 + $0xc] sm:$0xf]
    %v78 = vld [vmem:[%s5] sm:$0x1]
    %v80 = vlaneseq
    %v81 = vshrl.u32 %v80, 7
    %v82 = vsub.s32 0, %v81
    %v83 = vrot.slane %v78, %v82
    %v93 = vunpack.c.l.b16 %v66
    %v94 = vunpack.c.l.b16 %v67
    %v95 = vunpack.c.l.b16 %v68
    %v96 = vunpack.c.l.b16 %v69
    %v97 = vunpack.c.l.b16 %v70
    %v98 = vunpack.c.l.b16 %v71
    %v99 = vunpack.c.l.b16 %v72
    %v100 = vunpack.c.l.b16 %v73
    %v101 = vpack.c.b16 %v94, %v93
    %v102 = vpack.c.b16 %v96, %v95
    %v103 = vpack.c.b16 %v98, %v97
    %v104 = vpack.c.b16 %v100, %v99
    %v109 = vunpack.c.l.b16 %v74
    %v110 = vunpack.c.l.b16 %v75
    %v111 = vunpack.c.l.b16 %v76
    %v112 = vunpack.c.l.b16 %v77
    %v113 = vpack.c.b16 %v110, %v109
    %v114 = vpack.c.b16 %v112, %v111
    %vm117 = vcmask 261120
    %v119 = vsel %vm117, %v101, 0
    %v122 = vsel %vm117, %v102, 0
    %v125 = vsel %vm117, %v103, 0
    %v128 = vsel %vm117, %v104, 0
    %130 = vmatprep.subr.bf16.mxu0 0
    %131 = vmatpush1.bf16.msra.mxu0 %v113
    %132 = vmatprep.subr.bf16.mxu0 0
    %133 = vmatpush1.bf16.msra.mxu0 %v114
    %134 = vmatprep.subr.bf16.mxu0 0
    %135 = vmatpush1.bf16.msra.mxu0 0
    %136 = vmatprep.subr.bf16.mxu0 0
    %137 = vmatpush1.bf16.msra.mxu0 0
    %138 = vmatprep.subr.bf16.mxu0 0
    %139 = vmatpush1.bf16.msra.mxu0 0
    %140 = vmatprep.subr.bf16.mxu0 0
    %141 = vmatpush1.bf16.msra.mxu0 0
    %142 = vmatprep.subr.bf16.mxu0 0
    %143 = vmatpush1.bf16.msra.mxu0 0
    %144 = vmatprep.subr.bf16.mxu0 0
    %145 = vmatpush1.bf16.msra.mxu0 0
    %146 = vmatprep.subr.bf16.mxu0 0
    %147 = vmatpush1.bf16.msra.mxu0 0
    %148 = vmatprep.subr.bf16.mxu0 0
    %149 = vmatpush1.bf16.msra.mxu0 0
    %150 = vmatprep.subr.bf16.mxu0 0
    %151 = vmatpush1.bf16.msra.mxu0 0
    %152 = vmatprep.subr.bf16.mxu0 0
    %153 = vmatpush1.bf16.msra.mxu0 0
    %154 = vmatprep.subr.bf16.mxu0 0
    %155 = vmatpush1.bf16.msra.mxu0 0
    %156 = vmatprep.subr.bf16.mxu0 0
    %157 = vmatpush1.bf16.msra.mxu0 0
    %158 = vmatprep.subr.bf16.mxu0 0
    %159 = vmatpush1.bf16.msra.mxu0 0
    %160 = vmatprep.subr.bf16.mxu0 0
    %161 = vmatpush1.bf16.msra.mxu0 0
    %162 = vmatprep.mubr.bf16.mxu0 0
    %163 = vmatmul.mubr.bf16.gmra.mrb[0].mxu0 %v119
    %v164 = vpop.f32.mrb[0].mxu0
    %v165 = vadd.f32 %v83, %v164
    %v166 = vpop.f32.mrb[0].mxu0
    %v167 = vpop.f32.mrb[0].mxu0
    %v168 = vadd.f32 %v83, %v167
    %v169 = vpop.f32.mrb[0].mxu0
    %170 = vmatprep.mubr.bf16.mxu0 0
    %171 = vmatmul.mubr.bf16.gmra.mrb[0].mxu0 %v122
    %v172 = vpop.f32.mrb[0].mxu0
    %v173 = vadd.f32 %v83, %v172
    %v174 = vpop.f32.mrb[0].mxu0
    %v175 = vpop.f32.mrb[0].mxu0
    %v176 = vadd.f32 %v83, %v175
    %v177 = vpop.f32.mrb[0].mxu0
    %178 = vmatprep.mubr.bf16.mxu0 0
    %179 = vmatmul.mubr.bf16.gmra.mrb[0].mxu0 %v125
    %v180 = vpop.f32.mrb[0].mxu0
    %v181 = vadd.f32 %v83, %v180
    %v182 = vpop.f32.mrb[0].mxu0
    %v183 = vpop.f32.mrb[0].mxu0
    %v184 = vadd.f32 %v83, %v183
    %v185 = vpop.f32.mrb[0].mxu0
    %186 = vmatprep.mubr.bf16.mxu0 0
    %187 = vmatmul.mubr.bf16.gmra.mrb[0].mxu0 %v128
    %v188 = vpop.f32.mrb[0].mxu0
    %v189 = vadd.f32 %v83, %v188
    %v190 = vpop.f32.mrb[0].mxu0
    %v191 = vpop.f32.mrb[0].mxu0
    %v192 = vadd.f32 %v83, %v191
    %v193 = vpop.f32.mrb[0].mxu0
    %194 = vdwg.mxu0
    %195 = vst [vmem:[#allocation2] sm:$0xff] %v165
    %196 = vst [vmem:[#allocation2 + $0x8] sm:$0xff] %v168
    %197 = vst [vmem:[#allocation2 + $0x10] sm:$0xff] %v173
    %198 = vst [vmem:[#allocation2 + $0x18] sm:$0xff] %v176
    %199 = vst [vmem:[#allocation2 + $0x20] sm:$0xff] %v181
    %200 = vst [vmem:[#allocation2 + $0x28] sm:$0xff] %v184
    %201 = vst [vmem:[#allocation2 + $0x30] sm:$0xff] %v189
    %202 = vst [vmem:[#allocation2 + $0x38] sm:$0xff] %v192
    %v203 = vld [vmem:[%s4] sm:$0xf]
    %v204 = vld [vmem:[%s4 + $0x4] sm:$0xf]
    %v205 = vld [vmem:[%s4 + $0x8] sm:$0xf]
    %v206 = vld [vmem:[%s4 + $0xc] sm:$0xf]
    %v207 = vld [vmem:[%s6] sm:$0x1]
    %v209 = vlaneseq
    %v210 = vshrl.u32 %v209, 7
    %v211 = vsub.s32 0, %v210
    %v212 = vrot.slane %v207, %v211
    %v218 = vunpack.c.l.b16 %v203
    %v219 = vunpack.c.l.b16 %v204
    %v220 = vunpack.c.l.b16 %v205
    %v221 = vunpack.c.l.b16 %v206
    %v222 = vpack.c.b16 %v219, %v218
    %v223 = vpack.c.b16 %v221, %v220
    %226 = vmatprep.subr.bf16.mxu0 0
    %227 = vmatpush1.bf16.msra.mxu0 %v222
    %228 = vmatprep.subr.bf16.mxu0 0
    %229 = vmatpush1.bf16.msra.mxu0 %v223
    %230 = vmatprep.subr.bf16.mxu0 0
    %231 = vmatpush1.bf16.msra.mxu0 0
    %232 = vmatprep.subr.bf16.mxu0 0
    %233 = vmatpush1.bf16.msra.mxu0 0
    %234 = vmatprep.subr.bf16.mxu0 0
    %235 = vmatpush1.bf16.msra.mxu0 0
    %236 = vmatprep.subr.bf16.mxu0 0
    %237 = vmatpush1.bf16.msra.mxu0 0
    %238 = vmatprep.subr.bf16.mxu0 0
    %239 = vmatpush1.bf16.msra.mxu0 0
    %240 = vmatprep.subr.bf16.mxu0 0
    %241 = vmatpush1.bf16.msra.mxu0 0
    %242 = vmatprep.subr.bf16.mxu0 0
    %243 = vmatpush1.bf16.msra.mxu0 0
    %244 = vmatprep.subr.bf16.mxu0 0
    %245 = vmatpush1.bf16.msra.mxu0 0
    %246 = vmatprep.subr.bf16.mxu0 0
    %247 = vmatpush1.bf16.msra.mxu0 0
    %248 = vmatprep.subr.bf16.mxu0 0
    %249 = vmatpush1.bf16.msra.mxu0 0
    %250 = vmatprep.subr.bf16.mxu0 0
    %251 = vmatpush1.bf16.msra.mxu0 0
    %252 = vmatprep.subr.bf16.mxu0 0
    %253 = vmatpush1.bf16.msra.mxu0 0
    %254 = vmatprep.subr.bf16.mxu0 0
    %255 = vmatpush1.bf16.msra.mxu0 0
    %256 = vmatprep.subr.bf16.mxu0 0
    %257 = vmatpush1.bf16.msra.mxu0 0
    %258 = vmatprep.mubr.bf16.mxu0 0
    %259 = vmatmul.mubr.bf16.gmra.mrb[0].mxu0 %v119
    %v260 = vpop.f32.mrb[0].mxu0
    %v261 = vadd.f32 %v212, %v260
    %v262 = vpop.f32.mrb[0].mxu0
    %v263 = vpop.f32.mrb[0].mxu0
    %v264 = vadd.f32 %v212, %v263
    %v265 = vpop.f32.mrb[0].mxu0
    %266 = vmatprep.mubr.bf16.mxu0 0
    %267 = vmatmul.mubr.bf16.gmra.mrb[0].mxu0 %v122
    %v268 = vpop.f32.mrb[0].mxu0
    %v269 = vadd.f32 %v212, %v268
    %v270 = vpop.f32.mrb[0].mxu0
    %v271 = vpop.f32.mrb[0].mxu0
    %v272 = vadd.f32 %v212, %v271
    %v273 = vpop.f32.mrb[0].mxu0
    %274 = vmatprep.mubr.bf16.mxu0 0
    %275 = vmatmul.mubr.bf16.gmra.mrb[0].mxu0 %v125
    %v276 = vpop.f32.mrb[0].mxu0
    %v277 = vadd.f32 %v212, %v276
    %v278 = vpop.f32.mrb[0].mxu0
    %v279 = vpop.f32.mrb[0].mxu0
    %v280 = vadd.f32 %v212, %v279
    %v281 = vpop.f32.mrb[0].mxu0
    %282 = vmatprep.mubr.bf16.mxu0 0
    %283 = vmatmul.mubr.bf16.gmra.mrb[0].mxu0 %v128
    %v284 = vpop.f32.mrb[0].mxu0
    %v285 = vadd.f32 %v212, %v284
    %v286 = vpop.f32.mrb[0].mxu0
    %v287 = vpop.f32.mrb[0].mxu0
    %v288 = vadd.f32 %v212, %v287
    %v289 = vpop.f32.mrb[0].mxu0
    %290 = vdwg.mxu0
    %291 = vst [vmem:[#allocation3] sm:$0xff] %v261
    %292 = vst [vmem:[#allocation3 + $0x8] sm:$0xff] %v264
    %293 = vst [vmem:[#allocation3 + $0x10] sm:$0xff] %v269
    %294 = vst [vmem:[#allocation3 + $0x18] sm:$0xff] %v272
    %295 = vst [vmem:[#allocation3 + $0x20] sm:$0xff] %v277
    %296 = vst [vmem:[#allocation3 + $0x28] sm:$0xff] %v280
    %297 = vst [vmem:[#allocation3 + $0x30] sm:$0xff] %v285
    %298 = vst [vmem:[#allocation3 + $0x38] sm:$0xff] %v288
    %v299 = vld [vmem:[#allocation9] sm:$0xff]
    %v300 = vld [vmem:[#allocation9 + $0x8] sm:$0xff]
    %v301 = vld [vmem:[#allocation9 + $0x10] sm:$0xff]
    %v302 = vld [vmem:[#allocation9 + $0x18] sm:$0xff]
    %v303 = vld [vmem:[#allocation9 + $0x20] sm:$0xff]
    %v304 = vld [vmem:[#allocation9 + $0x28] sm:$0xff]
    %v305 = vld [vmem:[#allocation9 + $0x30] sm:$0xff]
    %v306 = vld [vmem:[#allocation9 + $0x38] sm:$0xff]
    %v307 = vld [vmem:[#allocation9 + $0x40] sm:$0xff]
    %v308 = vld [vmem:[#allocation9 + $0x48] sm:$0xff]
    %v309 = vld [vmem:[#allocation9 + $0x50] sm:$0xff]
    %v310 = vld [vmem:[#allocation9 + $0x58] sm:$0xff]
    %v311 = vld [vmem:[#allocation9 + $0x60] sm:$0xff]
    %v312 = vld [vmem:[#allocation9 + $0x68] sm:$0xff]
    %v313 = vld [vmem:[#allocation9 + $0x70] sm:$0xff]
    %v314 = vld [vmem:[#allocation9 + $0x78] sm:$0xff]
    %vm315 = vcmask 523264
    %v317 = vsel %vm315, 0.0, 0
    %319 = vmatprep.subr.mxu0 %v300
    %320 = vmatpush1.msra.mxu0 %v299
    %321 = vmatprep.subr.mxu0 %v302
    %322 = vmatpush1.msra.mxu0 %v301
    %323 = vmatprep.subr.mxu0 %v304
    %324 = vmatpush1.msra.mxu0 %v303
    %325 = vmatprep.subr.mxu0 %v306
    %326 = vmatpush1.msra.mxu0 %v305
    %327 = vmatprep.subr.mxu0 %v308
    %328 = vmatpush1.msra.mxu0 %v307
    %329 = vmatprep.subr.mxu0 %v310
    %330 = vmatpush1.msra.mxu0 %v309
    %331 = vmatprep.subr.mxu0 %v312
    %332 = vmatpush1.msra.mxu0 %v311
    %333 = vmatprep.subr.mxu0 %v314
    %334 = vmatpush1.msra.mxu0 %v313
    %335 = vmatprep.subr.mxu0 0.0
    %336 = vmatpush1.msra.mxu0 0.0
    %337 = vmatprep.subr.mxu0 0.0
    %338 = vmatpush1.msra.mxu0 0.0
    %339 = vmatprep.subr.mxu0 0.0
    %340 = vmatpush1.msra.mxu0 0.0
    %341 = vmatprep.subr.mxu0 0.0
    %342 = vmatpush1.msra.mxu0 0.0
    %343 = vmatprep.subr.mxu0 0.0
    %344 = vmatpush1.msra.mxu0 0.0
    %345 = vmatprep.subr.mxu0 0.0
    %346 = vmatpush1.msra.mxu0 0.0
    %347 = vmatprep.subr.mxu0 0.0
    %348 = vmatpush1.msra.mxu0 0.0
    %349 = vmatprep.subr.mxu0 0.0
    %350 = vmatpush1.msra.mxu0 0.0
    %351 = vmatprep.subr.mxu0 0.0
    %352 = vmatpush1.msra.mxu0 0.0
    %353 = vmatprep.subr.mxu0 0.0
    %354 = vmatpush1.msra.mxu0 0.0
    %355 = vmatprep.subr.mxu0 0.0
    %356 = vmatpush1.msra.mxu0 0.0
    %357 = vmatprep.subr.mxu0 0.0
    %358 = vmatpush1.msra.mxu0 0.0
    %359 = vmatprep.subr.mxu0 0.0
    %360 = vmatpush1.msra.mxu0 0.0
    %361 = vmatprep.subr.mxu0 0.0
    %362 = vmatpush1.msra.mxu0 0.0
    %363 = vmatprep.subr.mxu0 0.0
    %364 = vmatpush1.msra.mxu0 0.0
    %365 = vmatprep.subr.mxu0 0.0
    %366 = vmatpush1.msra.mxu0 0.0
    %367 = vmatprep.subr.mxu0 0.0
    %368 = vmatpush1.msra.mxu0 0.0
    %369 = vmatprep.subr.mxu0 0.0
    %370 = vmatpush1.msra.mxu0 0.0
    %371 = vmatprep.subr.mxu0 0.0
    %372 = vmatpush1.msra.mxu0 0.0
    %373 = vmatprep.subr.mxu0 0.0
    %374 = vmatpush1.msra.mxu0 0.0
    %375 = vmatprep.subr.mxu0 0.0
    %376 = vmatpush1.msra.mxu0 0.0
    %377 = vmatprep.subr.mxu0 0.0
    %378 = vmatpush1.msra.mxu0 0.0
    %379 = vmatprep.subr.mxu0 0.0
    %380 = vmatpush1.msra.mxu0 0.0
    %381 = vmatprep.subr.mxu0 0.0
    %382 = vmatpush1.msra.mxu0 0.0
    %383 = vmatprep.mubr.f32.mxu0 0.0
    %384 = vmatmul.mubr.f32.gmra.mrb[0].mxu0 %v317
    %v385 = vpop.f32.mrb[0].mxu0
    %v386 = vadd.f32 0.0, %v385
    %v387 = vpop.f32.mrb[0].mxu0
    %v388 = vadd.f32 0.0, %v387
    %389 = vdwg.mxu0
    %v390 = vld [vmem:[#allocation2] sm:$0xff]
    %v391 = vadd.f32 %v390, %v386
    %v392 = vxor.u32 %v391, 2147483648
    %v393 = vmul.f32 %v392, 1.442695
    %v394 = vpow.pop %v393
    %v395 = vadd.f32 %v394, 1.0
    %v396 = vrcp.pop %v395
    %v397 = vmul.f32 1.0, %v396
    %v398 = vtanh.pop %v391
    %v399 = vmul.f32 %v397, 0.0
    %401 = vrot.lane.b32.xlu0 %v398, 64
    %v402 = vpop.permute.xlu0 %401
    %v404 = vmul.f32 %v397, %v402
    %406 = vrot.lane.b32.xlu0 %v404, 32
    %v407 = vpop.permute.xlu0 %406
    %v409 = vadd.f32 %v399, %v407
    %v410 = vtanh.pop %v409
    %412 = vrot.lane.b32.xlu0 %v410, 64
    %v413 = vpop.permute.xlu0 %412
    %v415 = vmul.f32 %v397, %v413
    %s416 = scalar_lea.vmem [#allocation3], 56
    %v417 = vld [vmem:[%s416] sm:$0xff]
    %v418 = vadd.f32 %v417, %v388
    %v419 = vxor.u32 %v418, 2147483648
    %v420 = vmul.f32 %v419, 1.442695
    %v421 = vpow.pop %v420
    %v422 = vadd.f32 %v421, 1.0
    %v423 = vrcp.pop %v422
    %v424 = vmul.f32 1.0, %v423
    %v425 = vtanh.pop %v418
    %v426 = vmul.f32 %v424, 0.0
    %428 = vrot.lane.b32.xlu0 %v425, 64
    %v429 = vpop.permute.xlu0 %428
    %v431 = vmul.f32 %v424, %v429
    %433 = vrot.lane.b32.xlu0 %v431, 32
    %v434 = vpop.permute.xlu0 %433
    %v436 = vadd.f32 %v426, %v434
    %v437 = vtanh.pop %v436
    %439 = vrot.lane.b32.xlu0 %v437, 64
    %v440 = vpop.permute.xlu0 %439
    %v442 = vmul.f32 %v424, %v440
    %v443 = vld [vmem:[%s1] sm:$0xff]
    %vm444 = vcmp.gt.f32.partialorder %v443, 0.0
    %s445 = scalar_lea.vmem %s1, 56
    %v446 = vld [vmem:[%s445] sm:$0xff]
    %vm447 = vcmp.gt.f32.partialorder %v446, 0.0
    %v448 = vsel %vm444, 1, 0
    %449 = vset.pattern.permute.xlu0 0
    %450 = vperm.xlu0 %449, %v448
    %v451 = vpop.permute.xlu0 %450
    %vm452 = vcmp.eq.s32.totalorder %v451, 1
    %v453 = vsel %vm452, %v415, 0.0
    %v454 = vsel %vm452, %v409, 0.0
    %v455 = vsel %vm447, 1, 0
    %456 = vset.pattern.permute.xlu0 0
    %457 = vperm.xlu0 %456, %v455
    %v458 = vpop.permute.xlu0 %457
    %vm459 = vcmp.eq.s32.totalorder %v458, 1
    %v460 = vsel %vm459, %v442, 0.0
    %v461 = vsel %vm459, %v436, 0.0
    %v462 = vpack.c.bf16 %v453, %v453
    %v464 = vunpack.c.l.b16 %v462
    %v465 = vpack.c.b16 %v464, %v464
    %466 = vrot.lane.b32.xlu0 %v465, 32
    %v467 = vpop.permute.xlu0 %466
    %vm469 = vcmask 257024
    %470 = vst.msk [vmem:[#allocation4] sm:$0xf] %vm469, %v467
    %v471 = vpack.c.bf16 %v460, %v460
    %v473 = vunpack.c.l.b16 %v471
    %v474 = vpack.c.b16 %v473, %v473
    %475 = vrot.lane.b32.xlu0 %v474, 32
    %v476 = vpop.permute.xlu0 %475
    %s478 = scalar_lea.vmem [#allocation5], 28
    %479 = vst.msk [vmem:[%s478] sm:$0xf] %vm469, %v476
    %481 = vrot.lane.b32.xlu0 %v453, 32
    %v482 = vpop.permute.xlu0 %481
    %485 = vrot.lane.b32.xlu0 %v460, 64
    %v486 = vpop.permute.xlu0 %485
    %v488 = vsel %vm117, %v482, %v486
    %v490 = vsel %vm315, %v488, 0
    %492 = vmatprep.subr.mxu0 %v300
    %493 = vmatpush1.msra.mxu0 %v299
    %494 = vmatprep.subr.mxu0 %v302
    %495 = vmatpush1.msra.mxu0 %v301
    %496 = vmatprep.subr.mxu0 %v304
    %497 = vmatpush1.msra.mxu0 %v303
    %498 = vmatprep.subr.mxu0 %v306
    %499 = vmatpush1.msra.mxu0 %v305
    %500 = vmatprep.subr.mxu0 %v308
    %501 = vmatpush1.msra.mxu0 %v307
    %502 = vmatprep.subr.mxu0 %v310
    %503 = vmatpush1.msra.mxu0 %v309
    %504 = vmatprep.subr.mxu0 %v312
    %505 = vmatpush1.msra.mxu0 %v311
    %506 = vmatprep.subr.mxu0 %v314
    %507 = vmatpush1.msra.mxu0 %v313
    %508 = vmatprep.subr.mxu0 0.0
    %509 = vmatpush1.msra.mxu0 0.0
    %510 = vmatprep.subr.mxu0 0.0
    %511 = vmatpush1.msra.mxu0 0.0
    %512 = vmatprep.subr.mxu0 0.0
    %513 = vmatpush1.msra.mxu0 0.0
    %514 = vmatprep.subr.mxu0 0.0
    %515 = vmatpush1.msra.mxu0 0.0
    %516 = vmatprep.subr.mxu0 0.0
    %517 = vmatpush1.msra.mxu0 0.0
    %518 = vmatprep.subr.mxu0 0.0
    %519 = vmatpush1.msra.mxu0 0.0
    %520 = vmatprep.subr.mxu0 0.0
    %521 = vmatpush1.msra.mxu0 0.0
    %522 = vmatprep.subr.mxu0 0.0
    %523 = vmatpush1.msra.mxu0 0.0
    %524 = vmatprep.subr.mxu0 0.0
    %525 = vmatpush1.msra.mxu0 0.0
    %526 = vmatprep.subr.mxu0 0.0
    %527 = vmatpush1.msra.mxu0 0.0
    %528 = vmatprep.subr.mxu0 0.0
    %529 = vmatpush1.msra.mxu0 0.0
    %530 = vmatprep.subr.mxu0 0.0
    %531 = vmatpush1.msra.mxu0 0.0
    %532 = vmatprep.subr.mxu0 0.0
    %533 = vmatpush1.msra.mxu0 0.0
    %534 = vmatprep.subr.mxu0 0.0
    %535 = vmatpush1.msra.mxu0 0.0
    %536 = vmatprep.subr.mxu0 0.0
    %537 = vmatpush1.msra.mxu0 0.0
    %538 = vmatprep.subr.mxu0 0.0
    %539 = vmatpush1.msra.mxu0 0.0
    %540 = vmatprep.subr.mxu0 0.0
    %541 = vmatpush1.msra.mxu0 0.0
    %542 = vmatprep.subr.mxu0 0.0
    %543 = vmatpush1.msra.mxu0 0.0
    %544 = vmatprep.subr.mxu0 0.0
    %545 = vmatpush1.msra.mxu0 0.0
    %546 = vmatprep.subr.mxu0 0.0
    %547 = vmatpush1.msra.mxu0 0.0
    %548 = vmatprep.subr.mxu0 0.0
    %549 = vmatpush1.msra.mxu0 0.0
    %550 = vmatprep.subr.mxu0 0.0
    %551 = vmatpush1.msra.mxu0 0.0
    %552 = vmatprep.subr.mxu0 0.0
    %553 = vmatpush1.msra.mxu0 0.0
    %554 = vmatprep.subr.mxu0 0.0
    %555 = vmatpush1.msra.mxu0 0.0
    %556 = vmatprep.mubr.f32.mxu0 0.0
    %557 = vmatmul.mubr.f32.gmra.mrb[0].mxu0 %v490
    %v558 = vpop.f32.mrb[0].mxu0
    %v559 = vadd.f32 0.0, %v558
    %v560 = vpop.f32.mrb[0].mxu0
    %v561 = vadd.f32 0.0, %v560
    %562 = vdwg.mxu0
    %s563 = scalar_lea.vmem [#allocation2], 8
    %v564 = vld [vmem:[%s563] sm:$0xff]
    %v565 = vadd.f32 %v564, %v559
    %v566 = vxor.u32 %v565, 2147483648
    %v567 = vmul.f32 %v566, 1.442695
    %v568 = vpow.pop %v567
    %v569 = vadd.f32 %v568, 1.0
    %v570 = vrcp.pop %v569
    %v571 = vmul.f32 1.0, %v570
    %v572 = vtanh.pop %v565
    %v573 = vmul.f32 %v571, %v454
    %575 = vrot.lane.b32.xlu0 %v572, 64
    %v576 = vpop.permute.xlu0 %575
    %v578 = vmul.f32 %v571, %v576
    %580 = vrot.lane.b32.xlu0 %v578, 32
    %v581 = vpop.permute.xlu0 %580
    %v583 = vadd.f32 %v573, %v581
    %v584 = vtanh.pop %v583
    %586 = vrot.lane.b32.xlu0 %v584, 64
    %v587 = vpop.permute.xlu0 %586
    %v589 = vmul.f32 %v571, %v587
    %s590 = scalar_lea.vmem [#allocation3], 48
    %v591 = vld [vmem:[%s590] sm:$0xff]
    %v592 = vadd.f32 %v591, %v561
    %v593 = vxor.u32 %v592, 2147483648
    %v594 = vmul.f32 %v593, 1.442695
    %v595 = vpow.pop %v594
    %v596 = vadd.f32 %v595, 1.0
    %v597 = vrcp.pop %v596
    %v598 = vmul.f32 1.0, %v597
    %v599 = vtanh.pop %v592
    %v600 = vmul.f32 %v598, %v461
    %602 = vrot.lane.b32.xlu0 %v599, 64
    %v603 = vpop.permute.xlu0 %602
    %v605 = vmul.f32 %v598, %v603
    %607 = vrot.lane.b32.xlu0 %v605, 32
    %v608 = vpop.permute.xlu0 %607
    %v610 = vadd.f32 %v600, %v608
    %v611 = vtanh.pop %v610
    %613 = vrot.lane.b32.xlu0 %v611, 64
    %v614 = vpop.permute.xlu0 %613
    %v616 = vmul.f32 %v598, %v614
    %s617 = scalar_lea.vmem %s1, 8
    %v618 = vld [vmem:[%s617] sm:$0xff]
    %vm619 = vcmp.gt.f32.partialorder %v618, 0.0
    %s620 = scalar_lea.vmem %s1, 48
    %v621 = vld [vmem:[%s620] sm:$0xff]
    %vm622 = vcmp.gt.f32.partialorder %v621, 0.0
    %v623 = vsel %vm619, 1, 0
    %624 = vset.pattern.permute.xlu0 0
    %625 = vperm.xlu0 %624, %v623
    %v626 = vpop.permute.xlu0 %625
    %vm627 = vcmp.eq.s32.totalorder %v626, 1
    %v628 = vsel %vm627, %v589, %v453
    %v629 = vsel %vm627, %v583, %v454
    %v630 = vsel %vm622, 1, 0
    %631 = vset.pattern.permute.xlu0 0
    %632 = vperm.xlu0 %631, %v630
    %v633 = vpop.permute.xlu0 %632
    %vm634 = vcmp.eq.s32.totalorder %v633, 1
    %v635 = vsel %vm634, %v616, %v460
    %v636 = vsel %vm634, %v610, %v461
    %v637 = vpack.c.bf16 %v628, %v628
    %v639 = vunpack.c.l.b16 %v637
    %v640 = vpack.c.b16 %v639, %v639
    %641 = vrot.lane.b32.xlu0 %v640, 32
    %v642 = vpop.permute.xlu0 %641
    %s644 = scalar_lea.vmem [#allocation4], 4
    %645 = vst.msk [vmem:[%s644] sm:$0xf] %vm469, %v642
    %v646 = vpack.c.bf16 %v635, %v635
    %v648 = vunpack.c.l.b16 %v646
    %v649 = vpack.c.b16 %v648, %v648
    %650 = vrot.lane.b32.xlu0 %v649, 32
    %v651 = vpop.permute.xlu0 %650
    %s653 = scalar_lea.vmem [#allocation5], 24
    %654 = vst.msk [vmem:[%s653] sm:$0xf] %vm469, %v651
    %656 = vrot.lane.b32.xlu0 %v628, 32
    %v657 = vpop.permute.xlu0 %656
    %660 = vrot.lane.b32.xlu0 %v635, 64
    %v661 = vpop.permute.xlu0 %660
    %v663 = vsel %vm117, %v657, %v661
    %v665 = vsel %vm315, %v663, 0
    %667 = vmatprep.subr.mxu0 %v300
    %668 = vmatpush1.msra.mxu0 %v299
    %669 = vmatprep.subr.mxu0 %v302
    %670 = vmatpush1.msra.mxu0 %v301
    %671 = vmatprep.subr.mxu0 %v304
    %672 = vmatpush1.msra.mxu0 %v303
    %673 = vmatprep.subr.mxu0 %v306
    %674 = vmatpush1.msra.mxu0 %v305
    %675 = vmatprep.subr.mxu0 %v308
    %676 = vmatpush1.msra.mxu0 %v307
    %677 = vmatprep.subr.mxu0 %v310
    %678 = vmatpush1.msra.mxu0 %v309
    %679 = vmatprep.subr.mxu0 %v312
    %680 = vmatpush1.msra.mxu0 %v311
    %681 = vmatprep.subr.mxu0 %v314
    %682 = vmatpush1.msra.mxu0 %v313
    %683 = vmatprep.subr.mxu0 0.0
    %684 = vmatpush1.msra.mxu0 0.0
    %685 = vmatprep.subr.mxu0 0.0
    %686 = vmatpush1.msra.mxu0 0.0
    %687 = vmatprep.subr.mxu0 0.0
    %688 = vmatpush1.msra.mxu0 0.0
    %689 = vmatprep.subr.mxu0 0.0
    %690 = vmatpush1.msra.mxu0 0.0
    %691 = vmatprep.subr.mxu0 0.0
    %692 = vmatpush1.msra.mxu0 0.0
    %693 = vmatprep.subr.mxu0 0.0
    %694 = vmatpush1.msra.mxu0 0.0
    %695 = vmatprep.subr.mxu0 0.0
    %696 = vmatpush1.msra.mxu0 0.0
    %697 = vmatprep.subr.mxu0 0.0
    %698 = vmatpush1.msra.mxu0 0.0
    %699 = vmatprep.subr.mxu0 0.0
    %700 = vmatpush1.msra.mxu0 0.0
    %701 = vmatprep.subr.mxu0 0.0
    %702 = vmatpush1.msra.mxu0 0.0
    %703 = vmatprep.subr.mxu0 0.0
    %704 = vmatpush1.msra.mxu0 0.0
    %705 = vmatprep.subr.mxu0 0.0
    %706 = vmatpush1.msra.mxu0 0.0
    %707 = vmatprep.subr.mxu0 0.0
    %708 = vmatpush1.msra.mxu0 0.0
    %709 = vmatprep.subr.mxu0 0.0
    %710 = vmatpush1.msra.mxu0 0.0
    %711 = vmatprep.subr.mxu0 0.0
    %712 = vmatpush1.msra.mxu0 0.0
    %713 = vmatprep.subr.mxu0 0.0
    %714 = vmatpush1.msra.mxu0 0.0
    %715 = vmatprep.subr.mxu0 0.0
    %716 = vmatpush1.msra.mxu0 0.0
    %717 = vmatprep.subr.mxu0 0.0
    %718 = vmatpush1.msra.mxu0 0.0
    %719 = vmatprep.subr.mxu0 0.0
    %720 = vmatpush1.msra.mxu0 0.0
    %721 = vmatprep.subr.mxu0 0.0
    %722 = vmatpush1.msra.mxu0 0.0
    %723 = vmatprep.subr.mxu0 0.0
    %724 = vmatpush1.msra.mxu0 0.0
    %725 = vmatprep.subr.mxu0 0.0
    %726 = vmatpush1.msra.mxu0 0.0
    %727 = vmatprep.subr.mxu0 0.0
    %728 = vmatpush1.msra.mxu0 0.0
    %729 = vmatprep.subr.mxu0 0.0
    %730 = vmatpush1.msra.mxu0 0.0
    %731 = vmatprep.mubr.f32.mxu0 0.0
    %732 = vmatmul.mubr.f32.gmra.mrb[0].mxu0 %v665
    %v733 = vpop.f32.mrb[0].mxu0
    %v734 = vadd.f32 0.0, %v733
    %v735 = vpop.f32.mrb[0].mxu0
    %v736 = vadd.f32 0.0, %v735
    %737 = vdwg.mxu0
    %s738 = scalar_lea.vmem [#allocation2], 16
    %v739 = vld [vmem:[%s738] sm:$0xff]
    %v740 = vadd.f32 %v739, %v734
    %v741 = vxor.u32 %v740, 2147483648
    %v742 = vmul.f32 %v741, 1.442695
    %v743 = vpow.pop %v742
    %v744 = vadd.f32 %v743, 1.0
    %v745 = vrcp.pop %v744
    %v746 = vmul.f32 1.0, %v745
    %v747 = vtanh.pop %v740
    %v748 = vmul.f32 %v746, %v629
    %750 = vrot.lane.b32.xlu0 %v747, 64
    %v751 = vpop.permute.xlu0 %750
    %v753 = vmul.f32 %v746, %v751
    %755 = vrot.lane.b32.xlu0 %v753, 32
    %v756 = vpop.permute.xlu0 %755
    %v758 = vadd.f32 %v748, %v756
    %v759 = vtanh.pop %v758
    %761 = vrot.lane.b32.xlu0 %v759, 64
    %v762 = vpop.permute.xlu0 %761
    %v764 = vmul.f32 %v746, %v762
    %s765 = scalar_lea.vmem [#allocation3], 40
    %v766 = vld [vmem:[%s765] sm:$0xff]
    %v767 = vadd.f32 %v766, %v736
    %v768 = vxor.u32 %v767, 2147483648
    %v769 = vmul.f32 %v768, 1.442695
    %v770 = vpow.pop %v769
    %v771 = vadd.f32 %v770, 1.0
    %v772 = vrcp.pop %v771
    %v773 = vmul.f32 1.0, %v772
    %v774 = vtanh.pop %v767
    %v775 = vmul.f32 %v773, %v636
    %777 = vrot.lane.b32.xlu0 %v774, 64
    %v778 = vpop.permute.xlu0 %777
    %v780 = vmul.f32 %v773, %v778
    %782 = vrot.lane.b32.xlu0 %v780, 32
    %v783 = vpop.permute.xlu0 %782
    %v785 = vadd.f32 %v775, %v783
    %v786 = vtanh.pop %v785
    %788 = vrot.lane.b32.xlu0 %v786, 64
    %v789 = vpop.permute.xlu0 %788
    %v791 = vmul.f32 %v773, %v789
    %s792 = scalar_lea.vmem %s1, 16
    %v793 = vld [vmem:[%s792] sm:$0xff]
    %vm794 = vcmp.gt.f32.partialorder %v793, 0.0
    %s795 = scalar_lea.vmem %s1, 40
    %v796 = vld [vmem:[%s795] sm:$0xff]
    %vm797 = vcmp.gt.f32.partialorder %v796, 0.0
    %v798 = vsel %vm794, 1, 0
    %799 = vset.pattern.permute.xlu0 0
    %800 = vperm.xlu0 %799, %v798
    %v801 = vpop.permute.xlu0 %800
    %vm802 = vcmp.eq.s32.totalorder %v801, 1
    %v803 = vsel %vm802, %v764, %v628
    %v804 = vsel %vm802, %v758, %v629
    %v805 = vsel %vm797, 1, 0
    %806 = vset.pattern.permute.xlu0 0
    %807 = vperm.xlu0 %806, %v805
    %v808 = vpop.permute.xlu0 %807
    %vm809 = vcmp.eq.s32.totalorder %v808, 1
    %v810 = vsel %vm809, %v791, %v635
    %v811 = vsel %vm809, %v785, %v636
    %v812 = vpack.c.bf16 %v803, %v803
    %v814 = vunpack.c.l.b16 %v812
    %v815 = vpack.c.b16 %v814, %v814
    %816 = vrot.lane.b32.xlu0 %v815, 32
    %v817 = vpop.permute.xlu0 %816
    %s819 = scalar_lea.vmem [#allocation4], 8
    %820 = vst.msk [vmem:[%s819] sm:$0xf] %vm469, %v817
    %v821 = vpack.c.bf16 %v810, %v810
    %v823 = vunpack.c.l.b16 %v821
    %v824 = vpack.c.b16 %v823, %v823
    %825 = vrot.lane.b32.xlu0 %v824, 32
    %v826 = vpop.permute.xlu0 %825
    %s828 = scalar_lea.vmem [#allocation5], 20
    %829 = vst.msk [vmem:[%s828] sm:$0xf] %vm469, %v826
    %831 = vrot.lane.b32.xlu0 %v803, 32
    %v832 = vpop.permute.xlu0 %831
    %835 = vrot.lane.b32.xlu0 %v810, 64
    %v836 = vpop.permute.xlu0 %835
    %v838 = vsel %vm117, %v832, %v836
    %v840 = vsel %vm315, %v838, 0
    %842 = vmatprep.subr.mxu0 %v300
    %843 = vmatpush1.msra.mxu0 %v299
    %844 = vmatprep.subr.mxu0 %v302
    %845 = vmatpush1.msra.mxu0 %v301
    %846 = vmatprep.subr.mxu0 %v304
    %847 = vmatpush1.msra.mxu0 %v303
    %848 = vmatprep.subr.mxu0 %v306
    %849 = vmatpush1.msra.mxu0 %v305
    %850 = vmatprep.subr.mxu0 %v308
    %851 = vmatpush1.msra.mxu0 %v307
    %852 = vmatprep.subr.mxu0 %v310
    %853 = vmatpush1.msra.mxu0 %v309
    %854 = vmatprep.subr.mxu0 %v312
    %855 = vmatpush1.msra.mxu0 %v311
    %856 = vmatprep.subr.mxu0 %v314
    %857 = vmatpush1.msra.mxu0 %v313
    %858 = vmatprep.subr.mxu0 0.0
    %859 = vmatpush1.msra.mxu0 0.0
    %860 = vmatprep.subr.mxu0 0.0
    %861 = vmatpush1.msra.mxu0 0.0
    %862 = vmatprep.subr.mxu0 0.0
    %863 = vmatpush1.msra.mxu0 0.0
    %864 = vmatprep.subr.mxu0 0.0
    %865 = vmatpush1.msra.mxu0 0.0
    %866 = vmatprep.subr.mxu0 0.0
    %867 = vmatpush1.msra.mxu0 0.0
    %868 = vmatprep.subr.mxu0 0.0
    %869 = vmatpush1.msra.mxu0 0.0
    %870 = vmatprep.subr.mxu0 0.0
    %871 = vmatpush1.msra.mxu0 0.0
    %872 = vmatprep.subr.mxu0 0.0
    %873 = vmatpush1.msra.mxu0 0.0
    %874 = vmatprep.subr.mxu0 0.0
    %875 = vmatpush1.msra.mxu0 0.0
    %876 = vmatprep.subr.mxu0 0.0
    %877 = vmatpush1.msra.mxu0 0.0
    %878 = vmatprep.subr.mxu0 0.0
    %879 = vmatpush1.msra.mxu0 0.0
    %880 = vmatprep.subr.mxu0 0.0
    %881 = vmatpush1.msra.mxu0 0.0
    %882 = vmatprep.subr.mxu0 0.0
    %883 = vmatpush1.msra.mxu0 0.0
    %884 = vmatprep.subr.mxu0 0.0
    %885 = vmatpush1.msra.mxu0 0.0
    %886 = vmatprep.subr.mxu0 0.0
    %887 = vmatpush1.msra.mxu0 0.0
    %888 = vmatprep.subr.mxu0 0.0
    %889 = vmatpush1.msra.mxu0 0.0
    %890 = vmatprep.subr.mxu0 0.0
    %891 = vmatpush1.msra.mxu0 0.0
    %892 = vmatprep.subr.mxu0 0.0
    %893 = vmatpush1.msra.mxu0 0.0
    %894 = vmatprep.subr.mxu0 0.0
    %895 = vmatpush1.msra.mxu0 0.0
    %896 = vmatprep.subr.mxu0 0.0
    %897 = vmatpush1.msra.mxu0 0.0
    %898 = vmatprep.subr.mxu0 0.0
    %899 = vmatpush1.msra.mxu0 0.0
    %900 = vmatprep.subr.mxu0 0.0
    %901 = vmatpush1.msra.mxu0 0.0
    %902 = vmatprep.subr.mxu0 0.0
    %903 = vmatpush1.msra.mxu0 0.0
    %904 = vmatprep.subr.mxu0 0.0
    %905 = vmatpush1.msra.mxu0 0.0
    %906 = vmatprep.mubr.f32.mxu0 0.0
    %907 = vmatmul.mubr.f32.gmra.mrb[0].mxu0 %v840
    %v908 = vpop.f32.mrb[0].mxu0
    %v909 = vadd.f32 0.0, %v908
    %v910 = vpop.f32.mrb[0].mxu0
    %v911 = vadd.f32 0.0, %v910
    %912 = vdwg.mxu0
    %s913 = scalar_lea.vmem [#allocation2], 24
    %v914 = vld [vmem:[%s913] sm:$0xff]
    %v915 = vadd.f32 %v914, %v909
    %v916 = vxor.u32 %v915, 2147483648
    %v917 = vmul.f32 %v916, 1.442695
    %v918 = vpow.pop %v917
    %v919 = vadd.f32 %v918, 1.0
    %v920 = vrcp.pop %v919
    %v921 = vmul.f32 1.0, %v920
    %v922 = vtanh.pop %v915
    %v923 = vmul.f32 %v921, %v804
    %925 = vrot.lane.b32.xlu0 %v922, 64
    %v926 = vpop.permute.xlu0 %925
    %v928 = vmul.f32 %v921, %v926
    %930 = vrot.lane.b32.xlu0 %v928, 32
    %v931 = vpop.permute.xlu0 %930
    %v933 = vadd.f32 %v923, %v931
    %v934 = vtanh.pop %v933
    %936 = vrot.lane.b32.xlu0 %v934, 64
    %v937 = vpop.permute.xlu0 %936
    %v939 = vmul.f32 %v921, %v937
    %s940 = scalar_lea.vmem [#allocation3], 32
    %v941 = vld [vmem:[%s940] sm:$0xff]
    %v942 = vadd.f32 %v941, %v911
    %v943 = vxor.u32 %v942, 2147483648
    %v944 = vmul.f32 %v943, 1.442695
    %v945 = vpow.pop %v944
    %v946 = vadd.f32 %v945, 1.0
    %v947 = vrcp.pop %v946
    %v948 = vmul.f32 1.0, %v947
    %v949 = vtanh.pop %v942
    %v950 = vmul.f32 %v948, %v811
    %952 = vrot.lane.b32.xlu0 %v949, 64
    %v953 = vpop.permute.xlu0 %952
    %v955 = vmul.f32 %v948, %v953
    %957 = vrot.lane.b32.xlu0 %v955, 32
    %v958 = vpop.permute.xlu0 %957
    %v960 = vadd.f32 %v950, %v958
    %v961 = vtanh.pop %v960
    %963 = vrot.lane.b32.xlu0 %v961, 64
    %v964 = vpop.permute.xlu0 %963
    %v966 = vmul.f32 %v948, %v964
    %s967 = scalar_lea.vmem %s1, 24
    %v968 = vld [vmem:[%s967] sm:$0xff]
    %vm969 = vcmp.gt.f32.partialorder %v968, 0.0
    %s970 = scalar_lea.vmem %s1, 32
    %v971 = vld [vmem:[%s970] sm:$0xff]
    %vm972 = vcmp.gt.f32.partialorder %v971, 0.0
    %v973 = vsel %vm969, 1, 0
    %974 = vset.pattern.permute.xlu0 0
    %975 = vperm.xlu0 %974, %v973
    %v976 = vpop.permute.xlu0 %975
    %vm977 = vcmp.eq.s32.totalorder %v976, 1
    %v978 = vsel %vm977, %v939, %v803
    %v979 = vsel %vm977, %v933, %v804
    %v980 = vsel %vm972, 1, 0
    %981 = vset.pattern.permute.xlu0 0
    %982 = vperm.xlu0 %981, %v980
    %v983 = vpop.permute.xlu0 %982
    %vm984 = vcmp.eq.s32.totalorder %v983, 1
    %v985 = vsel %vm984, %v966, %v810
    %v986 = vsel %vm984, %v960, %v811
    %v987 = vpack.c.bf16 %v978, %v978
    %v989 = vunpack.c.l.b16 %v987
    %v990 = vpack.c.b16 %v989, %v989
    %991 = vrot.lane.b32.xlu0 %v990, 32
    %v992 = vpop.permute.xlu0 %991
    %s994 = scalar_lea.vmem [#allocation4], 12
    %995 = vst.msk [vmem:[%s994] sm:$0xf] %vm469, %v992
    %v996 = vpack.c.bf16 %v985, %v985
    %v998 = vunpack.c.l.b16 %v996
    %v999 = vpack.c.b16 %v998, %v998
    %1000 = vrot.lane.b32.xlu0 %v999, 32
    %v1001 = vpop.permute.xlu0 %1000
    %s1003 = scalar_lea.vmem [#allocation5], 16
    %1004 = vst.msk [vmem:[%s1003] sm:$0xf] %vm469, %v1001
    %1006 = vrot.lane.b32.xlu0 %v978, 32
    %v1007 = vpop.permute.xlu0 %1006
    %1010 = vrot.lane.b32.xlu0 %v985, 64
    %v1011 = vpop.permute.xlu0 %1010
    %v1013 = vsel %vm117, %v1007, %v1011
    %v1015 = vsel %vm315, %v1013, 0
    %1017 = vmatprep.subr.mxu0 %v300
    %1018 = vmatpush1.msra.mxu0 %v299
    %1019 = vmatprep.subr.mxu0 %v302
    %1020 = vmatpush1.msra.mxu0 %v301
    %1021 = vmatprep.subr.mxu0 %v304
    %1022 = vmatpush1.msra.mxu0 %v303
    %1023 = vmatprep.subr.mxu0 %v306
    %1024 = vmatpush1.msra.mxu0 %v305
    %1025 = vmatprep.subr.mxu0 %v308
    %1026 = vmatpush1.msra.mxu0 %v307
    %1027 = vmatprep.subr.mxu0 %v310
    %1028 = vmatpush1.msra.mxu0 %v309
    %1029 = vmatprep.subr.mxu0 %v312
    %1030 = vmatpush1.msra.mxu0 %v311
    %1031 = vmatprep.subr.mxu0 %v314
    %1032 = vmatpush1.msra.mxu0 %v313
    %1033 = vmatprep.subr.mxu0 0.0
    %1034 = vmatpush1.msra.mxu0 0.0
    %1035 = vmatprep.subr.mxu0 0.0
    %1036 = vmatpush1.msra.mxu0 0.0
    %1037 = vmatprep.subr.mxu0 0.0
    %1038 = vmatpush1.msra.mxu0 0.0
    %1039 = vmatprep.subr.mxu0 0.0
    %1040 = vmatpush1.msra.mxu0 0.0
    %1041 = vmatprep.subr.mxu0 0.0
    %1042 = vmatpush1.msra.mxu0 0.0
    %1043 = vmatprep.subr.mxu0 0.0
    %1044 = vmatpush1.msra.mxu0 0.0
    %1045 = vmatprep.subr.mxu0 0.0
    %1046 = vmatpush1.msra.mxu0 0.0
    %1047 = vmatprep.subr.mxu0 0.0
    %1048 = vmatpush1.msra.mxu0 0.0
    %1049 = vmatprep.subr.mxu0 0.0
    %1050 = vmatpush1.msra.mxu0 0.0
    %1051 = vmatprep.subr.mxu0 0.0
    %1052 = vmatpush1.msra.mxu0 0.0
    %1053 = vmatprep.subr.mxu0 0.0
    %1054 = vmatpush1.msra.mxu0 0.0
    %1055 = vmatprep.subr.mxu0 0.0
    %1056 = vmatpush1.msra.mxu0 0.0
    %1057 = vmatprep.subr.mxu0 0.0
    %1058 = vmatpush1.msra.mxu0 0.0
    %1059 = vmatprep.subr.mxu0 0.0
    %1060 = vmatpush1.msra.mxu0 0.0
    %1061 = vmatprep.subr.mxu0 0.0
    %1062 = vmatpush1.msra.mxu0 0.0
    %1063 = vmatprep.subr.mxu0 0.0
    %1064 = vmatpush1.msra.mxu0 0.0
    %1065 = vmatprep.subr.mxu0 0.0
    %1066 = vmatpush1.msra.mxu0 0.0
    %1067 = vmatprep.subr.mxu0 0.0
    %1068 = vmatpush1.msra.mxu0 0.0
    %1069 = vmatprep.subr.mxu0 0.0
    %1070 = vmatpush1.msra.mxu0 0.0
    %1071 = vmatprep.subr.mxu0 0.0
    %1072 = vmatpush1.msra.mxu0 0.0
    %1073 = vmatprep.subr.mxu0 0.0
    %1074 = vmatpush1.msra.mxu0 0.0
    %1075 = vmatprep.subr.mxu0 0.0
    %1076 = vmatpush1.msra.mxu0 0.0
    %1077 = vmatprep.subr.mxu0 0.0
    %1078 = vmatpush1.msra.mxu0 0.0
    %1079 = vmatprep.subr.mxu0 0.0
    %1080 = vmatpush1.msra.mxu0 0.0
    %1081 = vmatprep.mubr.f32.mxu0 0.0
    %1082 = vmatmul.mubr.f32.gmra.mrb[0].mxu0 %v1015
    %v1083 = vpop.f32.mrb[0].mxu0
    %v1084 = vadd.f32 0.0, %v1083
    %v1085 = vpop.f32.mrb[0].mxu0
    %v1086 = vadd.f32 0.0, %v1085
    %1087 = vdwg.mxu0
    %s1088 = scalar_lea.vmem [#allocation2], 32
    %v1089 = vld [vmem:[%s1088] sm:$0xff]
    %v1090 = vadd.f32 %v1089, %v1084
    %v1091 = vxor.u32 %v1090, 2147483648
    %v1092 = vmul.f32 %v1091, 1.442695
    %v1093 = vpow.pop %v1092
    %v1094 = vadd.f32 %v1093, 1.0
    %v1095 = vrcp.pop %v1094
    %v1096 = vmul.f32 1.0, %v1095
    %v1097 = vtanh.pop %v1090
    %v1098 = vmul.f32 %v1096, %v979
    %1100 = vrot.lane.b32.xlu0 %v1097, 64
    %v1101 = vpop.permute.xlu0 %1100
    %v1103 = vmul.f32 %v1096, %v1101
    %1105 = vrot.lane.b32.xlu0 %v1103, 32
    %v1106 = vpop.permute.xlu0 %1105
    %v1108 = vadd.f32 %v1098, %v1106
    %v1109 = vtanh.pop %v1108
    %1111 = vrot.lane.b32.xlu0 %v1109, 64
    %v1112 = vpop.permute.xlu0 %1111
    %v1114 = vmul.f32 %v1096, %v1112
    %s1115 = scalar_lea.vmem [#allocation3], 24
    %v1116 = vld [vmem:[%s1115] sm:$0xff]
    %v1117 = vadd.f32 %v1116, %v1086
    %v1118 = vxor.u32 %v1117, 2147483648
    %v1119 = vmul.f32 %v1118, 1.442695
    %v1120 = vpow.pop %v1119
    %v1121 = vadd.f32 %v1120, 1.0
    %v1122 = vrcp.pop %v1121
    %v1123 = vmul.f32 1.0, %v1122
    %v1124 = vtanh.pop %v1117
    %v1125 = vmul.f32 %v1123, %v986
    %1127 = vrot.lane.b32.xlu0 %v1124, 64
    %v1128 = vpop.permute.xlu0 %1127
    %v1130 = vmul.f32 %v1123, %v1128
    %1132 = vrot.lane.b32.xlu0 %v1130, 32
    %v1133 = vpop.permute.xlu0 %1132
    %v1135 = vadd.f32 %v1125, %v1133
    %v1136 = vtanh.pop %v1135
    %1138 = vrot.lane.b32.xlu0 %v1136, 64
    %v1139 = vpop.permute.xlu0 %1138
    %v1141 = vmul.f32 %v1123, %v1139
    %v1142 = vld [vmem:[%s970] sm:$0xff]
    %vm1143 = vcmp.gt.f32.partialorder %v1142, 0.0
    %v1144 = vld [vmem:[%s967] sm:$0xff]
    %vm1145 = vcmp.gt.f32.partialorder %v1144, 0.0
    %v1146 = vsel %vm1143, 1, 0
    %1147 = vset.pattern.permute.xlu0 0
    %1148 = vperm.xlu0 %1147, %v1146
    %v1149 = vpop.permute.xlu0 %1148
    %vm1150 = vcmp.eq.s32.totalorder %v1149, 1
    %v1151 = vsel %vm1150, %v1114, %v978
    %v1152 = vsel %vm1150, %v1108, %v979
    %v1153 = vsel %vm1145, 1, 0
    %1154 = vset.pattern.permute.xlu0 0
    %1155 = vperm.xlu0 %1154, %v1153
    %v1156 = vpop.permute.xlu0 %1155
    %vm1157 = vcmp.eq.s32.totalorder %v1156, 1
    %v1158 = vsel %vm1157, %v1141, %v985
    %v1159 = vsel %vm1157, %v1135, %v986
    %v1160 = vpack.c.bf16 %v1151, %v1151
    %v1162 = vunpack.c.l.b16 %v1160
    %v1163 = vpack.c.b16 %v1162, %v1162
    %1164 = vrot.lane.b32.xlu0 %v1163, 32
    %v1165 = vpop.permute.xlu0 %1164
    %s1167 = scalar_lea.vmem [#allocation4], 16
    %1168 = vst.msk [vmem:[%s1167] sm:$0xf] %vm469, %v1165
    %v1169 = vpack.c.bf16 %v1158, %v1158
    %v1171 = vunpack.c.l.b16 %v1169
    %v1172 = vpack.c.b16 %v1171, %v1171
    %1173 = vrot.lane.b32.xlu0 %v1172, 32
    %v1174 = vpop.permute.xlu0 %1173
    %s1176 = scalar_lea.vmem [#allocation5], 12
    %1177 = vst.msk [vmem:[%s1176] sm:$0xf] %vm469, %v1174
    %1179 = vrot.lane.b32.xlu0 %v1151, 32
    %v1180 = vpop.permute.xlu0 %1179
    %1183 = vrot.lane.b32.xlu0 %v1158, 64
    %v1184 = vpop.permute.xlu0 %1183
    %v1186 = vsel %vm117, %v1180, %v1184
    %v1188 = vsel %vm315, %v1186, 0
    %1190 = vmatprep.subr.mxu0 %v300
    %1191 = vmatpush1.msra.mxu0 %v299
    %1192 = vmatprep.subr.mxu0 %v302
    %1193 = vmatpush1.msra.mxu0 %v301
    %1194 = vmatprep.subr.mxu0 %v304
    %1195 = vmatpush1.msra.mxu0 %v303
    %1196 = vmatprep.subr.mxu0 %v306
    %1197 = vmatpush1.msra.mxu0 %v305
    %1198 = vmatprep.subr.mxu0 %v308
    %1199 = vmatpush1.msra.mxu0 %v307
    %1200 = vmatprep.subr.mxu0 %v310
    %1201 = vmatpush1.msra.mxu0 %v309
    %1202 = vmatprep.subr.mxu0 %v312
    %1203 = vmatpush1.msra.mxu0 %v311
    %1204 = vmatprep.subr.mxu0 %v314
    %1205 = vmatpush1.msra.mxu0 %v313
    %1206 = vmatprep.subr.mxu0 0.0
    %1207 = vmatpush1.msra.mxu0 0.0
    %1208 = vmatprep.subr.mxu0 0.0
    %1209 = vmatpush1.msra.mxu0 0.0
    %1210 = vmatprep.subr.mxu0 0.0
    %1211 = vmatpush1.msra.mxu0 0.0
    %1212 = vmatprep.subr.mxu0 0.0
    %1213 = vmatpush1.msra.mxu0 0.0
    %1214 = vmatprep.subr.mxu0 0.0
    %1215 = vmatpush1.msra.mxu0 0.0
    %1216 = vmatprep.subr.mxu0 0.0
    %1217 = vmatpush1.msra.mxu0 0.0
    %1218 = vmatprep.subr.mxu0 0.0
    %1219 = vmatpush1.msra.mxu0 0.0
    %1220 = vmatprep.subr.mxu0 0.0
    %1221 = vmatpush1.msra.mxu0 0.0
    %1222 = vmatprep.subr.mxu0 0.0
    %1223 = vmatpush1.msra.mxu0 0.0
    %1224 = vmatprep.subr.mxu0 0.0
    %1225 = vmatpush1.msra.mxu0 0.0
    %1226 = vmatprep.subr.mxu0 0.0
    %1227 = vmatpush1.msra.mxu0 0.0
    %1228 = vmatprep.subr.mxu0 0.0
    %1229 = vmatpush1.msra.mxu0 0.0
    %1230 = vmatprep.subr.mxu0 0.0
    %1231 = vmatpush1.msra.mxu0 0.0
    %1232 = vmatprep.subr.mxu0 0.0
    %1233 = vmatpush1.msra.mxu0 0.0
    %1234 = vmatprep.subr.mxu0 0.0
    %1235 = vmatpush1.msra.mxu0 0.0
    %1236 = vmatprep.subr.mxu0 0.0
    %1237 = vmatpush1.msra.mxu0 0.0
    %1238 = vmatprep.subr.mxu0 0.0
    %1239 = vmatpush1.msra.mxu0 0.0
    %1240 = vmatprep.subr.mxu0 0.0
    %1241 = vmatpush1.msra.mxu0 0.0
    %1242 = vmatprep.subr.mxu0 0.0
    %1243 = vmatpush1.msra.mxu0 0.0
    %1244 = vmatprep.subr.mxu0 0.0
    %1245 = vmatpush1.msra.mxu0 0.0
    %1246 = vmatprep.subr.mxu0 0.0
    %1247 = vmatpush1.msra.mxu0 0.0
    %1248 = vmatprep.subr.mxu0 0.0
    %1249 = vmatpush1.msra.mxu0 0.0
    %1250 = vmatprep.subr.mxu0 0.0
    %1251 = vmatpush1.msra.mxu0 0.0
    %1252 = vmatprep.subr.mxu0 0.0
    %1253 = vmatpush1.msra.mxu0 0.0
    %1254 = vmatprep.mubr.f32.mxu0 0.0
    %1255 = vmatmul.mubr.f32.gmra.mrb[0].mxu0 %v1188
    %v1256 = vpop.f32.mrb[0].mxu0
    %v1257 = vadd.f32 0.0, %v1256
    %v1258 = vpop.f32.mrb[0].mxu0
    %v1259 = vadd.f32 0.0, %v1258
    %1260 = vdwg.mxu0
    %s1261 = scalar_lea.vmem [#allocation2], 40
    %v1262 = vld [vmem:[%s1261] sm:$0xff]
    %v1263 = vadd.f32 %v1262, %v1257
    %v1264 = vxor.u32 %v1263, 2147483648
    %v1265 = vmul.f32 %v1264, 1.442695
    %v1266 = vpow.pop %v1265
    %v1267 = vadd.f32 %v1266, 1.0
    %v1268 = vrcp.pop %v1267
    %v1269 = vmul.f32 1.0, %v1268
    %v1270 = vtanh.pop %v1263
    %v1271 = vmul.f32 %v1269, %v1152
    %1273 = vrot.lane.b32.xlu0 %v1270, 64
    %v1274 = vpop.permute.xlu0 %1273
    %v1276 = vmul.f32 %v1269, %v1274
    %1278 = vrot.lane.b32.xlu0 %v1276, 32
    %v1279 = vpop.permute.xlu0 %1278
    %v1281 = vadd.f32 %v1271, %v1279
    %v1282 = vtanh.pop %v1281
    %1284 = vrot.lane.b32.xlu0 %v1282, 64
    %v1285 = vpop.permute.xlu0 %1284
    %v1287 = vmul.f32 %v1269, %v1285
    %s1288 = scalar_lea.vmem [#allocation3], 16
    %v1289 = vld [vmem:[%s1288] sm:$0xff]
    %v1290 = vadd.f32 %v1289, %v1259
    %v1291 = vxor.u32 %v1290, 2147483648
    %v1292 = vmul.f32 %v1291, 1.442695
    %v1293 = vpow.pop %v1292
    %v1294 = vadd.f32 %v1293, 1.0
    %v1295 = vrcp.pop %v1294
    %v1296 = vmul.f32 1.0, %v1295
    %v1297 = vtanh.pop %v1290
    %v1298 = vmul.f32 %v1296, %v1159
    %1300 = vrot.lane.b32.xlu0 %v1297, 64
    %v1301 = vpop.permute.xlu0 %1300
    %v1303 = vmul.f32 %v1296, %v1301
    %1305 = vrot.lane.b32.xlu0 %v1303, 32
    %v1306 = vpop.permute.xlu0 %1305
    %v1308 = vadd.f32 %v1298, %v1306
    %v1309 = vtanh.pop %v1308
    %1311 = vrot.lane.b32.xlu0 %v1309, 64
    %v1312 = vpop.permute.xlu0 %1311
    %v1314 = vmul.f32 %v1296, %v1312
    %v1315 = vld [vmem:[%s795] sm:$0xff]
    %vm1316 = vcmp.gt.f32.partialorder %v1315, 0.0
    %v1317 = vld [vmem:[%s792] sm:$0xff]
    %vm1318 = vcmp.gt.f32.partialorder %v1317, 0.0
    %v1319 = vsel %vm1316, 1, 0
    %1320 = vset.pattern.permute.xlu0 0
    %1321 = vperm.xlu0 %1320, %v1319
    %v1322 = vpop.permute.xlu0 %1321
    %vm1323 = vcmp.eq.s32.totalorder %v1322, 1
    %v1324 = vsel %vm1323, %v1287, %v1151
    %v1325 = vsel %vm1323, %v1281, %v1152
    %v1326 = vsel %vm1318, 1, 0
    %1327 = vset.pattern.permute.xlu0 0
    %1328 = vperm.xlu0 %1327, %v1326
    %v1329 = vpop.permute.xlu0 %1328
    %vm1330 = vcmp.eq.s32.totalorder %v1329, 1
    %v1331 = vsel %vm1330, %v1314, %v1158
    %v1332 = vsel %vm1330, %v1308, %v1159
    %v1333 = vpack.c.bf16 %v1324, %v1324
    %v1335 = vunpack.c.l.b16 %v1333
    %v1336 = vpack.c.b16 %v1335, %v1335
    %1337 = vrot.lane.b32.xlu0 %v1336, 32
    %v1338 = vpop.permute.xlu0 %1337
    %s1340 = scalar_lea.vmem [#allocation4], 20
    %1341 = vst.msk [vmem:[%s1340] sm:$0xf] %vm469, %v1338
    %v1342 = vpack.c.bf16 %v1331, %v1331
    %v1344 = vunpack.c.l.b16 %v1342
    %v1345 = vpack.c.b16 %v1344, %v1344
    %1346 = vrot.lane.b32.xlu0 %v1345, 32
    %v1347 = vpop.permute.xlu0 %1346
    %s1349 = scalar_lea.vmem [#allocation5], 8
    %1350 = vst.msk [vmem:[%s1349] sm:$0xf] %vm469, %v1347
    %1352 = vrot.lane.b32.xlu0 %v1324, 32
    %v1353 = vpop.permute.xlu0 %1352
    %1356 = vrot.lane.b32.xlu0 %v1331, 64
    %v1357 = vpop.permute.xlu0 %1356
    %v1359 = vsel %vm117, %v1353, %v1357
    %v1361 = vsel %vm315, %v1359, 0
    %1363 = vmatprep.subr.mxu0 %v300
    %1364 = vmatpush1.msra.mxu0 %v299
    %1365 = vmatprep.subr.mxu0 %v302
    %1366 = vmatpush1.msra.mxu0 %v301
    %1367 = vmatprep.subr.mxu0 %v304
    %1368 = vmatpush1.msra.mxu0 %v303
    %1369 = vmatprep.subr.mxu0 %v306
    %1370 = vmatpush1.msra.mxu0 %v305
    %1371 = vmatprep.subr.mxu0 %v308
    %1372 = vmatpush1.msra.mxu0 %v307
    %1373 = vmatprep.subr.mxu0 %v310
    %1374 = vmatpush1.msra.mxu0 %v309
    %1375 = vmatprep.subr.mxu0 %v312
    %1376 = vmatpush1.msra.mxu0 %v311
    %1377 = vmatprep.subr.mxu0 %v314
    %1378 = vmatpush1.msra.mxu0 %v313
    %1379 = vmatprep.subr.mxu0 0.0
    %1380 = vmatpush1.msra.mxu0 0.0
    %1381 = vmatprep.subr.mxu0 0.0
    %1382 = vmatpush1.msra.mxu0 0.0
    %1383 = vmatprep.subr.mxu0 0.0
    %1384 = vmatpush1.msra.mxu0 0.0
    %1385 = vmatprep.subr.mxu0 0.0
    %1386 = vmatpush1.msra.mxu0 0.0
    %1387 = vmatprep.subr.mxu0 0.0
    %1388 = vmatpush1.msra.mxu0 0.0
    %1389 = vmatprep.subr.mxu0 0.0
    %1390 = vmatpush1.msra.mxu0 0.0
    %1391 = vmatprep.subr.mxu0 0.0
    %1392 = vmatpush1.msra.mxu0 0.0
    %1393 = vmatprep.subr.mxu0 0.0
    %1394 = vmatpush1.msra.mxu0 0.0
    %1395 = vmatprep.subr.mxu0 0.0
    %1396 = vmatpush1.msra.mxu0 0.0
    %1397 = vmatprep.subr.mxu0 0.0
    %1398 = vmatpush1.msra.mxu0 0.0
    %1399 = vmatprep.subr.mxu0 0.0
    %1400 = vmatpush1.msra.mxu0 0.0
    %1401 = vmatprep.subr.mxu0 0.0
    %1402 = vmatpush1.msra.mxu0 0.0
    %1403 = vmatprep.subr.mxu0 0.0
    %1404 = vmatpush1.msra.mxu0 0.0
    %1405 = vmatprep.subr.mxu0 0.0
    %1406 = vmatpush1.msra.mxu0 0.0
    %1407 = vmatprep.subr.mxu0 0.0
    %1408 = vmatpush1.msra.mxu0 0.0
    %1409 = vmatprep.subr.mxu0 0.0
    %1410 = vmatpush1.msra.mxu0 0.0
    %1411 = vmatprep.subr.mxu0 0.0
    %1412 = vmatpush1.msra.mxu0 0.0
    %1413 = vmatprep.subr.mxu0 0.0
    %1414 = vmatpush1.msra.mxu0 0.0
    %1415 = vmatprep.subr.mxu0 0.0
    %1416 = vmatpush1.msra.mxu0 0.0
    %1417 = vmatprep.subr.mxu0 0.0
    %1418 = vmatpush1.msra.mxu0 0.0
    %1419 = vmatprep.subr.mxu0 0.0
    %1420 = vmatpush1.msra.mxu0 0.0
    %1421 = vmatprep.subr.mxu0 0.0
    %1422 = vmatpush1.msra.mxu0 0.0
    %1423 = vmatprep.subr.mxu0 0.0
    %1424 = vmatpush1.msra.mxu0 0.0
    %1425 = vmatprep.subr.mxu0 0.0
    %1426 = vmatpush1.msra.mxu0 0.0
    %1427 = vmatprep.mubr.f32.mxu0 0.0
    %1428 = vmatmul.mubr.f32.gmra.mrb[0].mxu0 %v1361
    %v1429 = vpop.f32.mrb[0].mxu0
    %v1430 = vadd.f32 0.0, %v1429
    %v1431 = vpop.f32.mrb[0].mxu0
    %v1432 = vadd.f32 0.0, %v1431
    %1433 = vdwg.mxu0
    %s1434 = scalar_lea.vmem [#allocation2], 48
    %v1435 = vld [vmem:[%s1434] sm:$0xff]
    %v1436 = vadd.f32 %v1435, %v1430
    %v1437 = vxor.u32 %v1436, 2147483648
    %v1438 = vmul.f32 %v1437, 1.442695
    %v1439 = vpow.pop %v1438
    %v1440 = vadd.f32 %v1439, 1.0
    %v1441 = vrcp.pop %v1440
    %v1442 = vmul.f32 1.0, %v1441
    %v1443 = vtanh.pop %v1436
    %v1444 = vmul.f32 %v1442, %v1325
    %1446 = vrot.lane.b32.xlu0 %v1443, 64
    %v1447 = vpop.permute.xlu0 %1446
    %v1449 = vmul.f32 %v1442, %v1447
    %1451 = vrot.lane.b32.xlu0 %v1449, 32
    %v1452 = vpop.permute.xlu0 %1451
    %v1454 = vadd.f32 %v1444, %v1452
    %v1455 = vtanh.pop %v1454
    %1457 = vrot.lane.b32.xlu0 %v1455, 64
    %v1458 = vpop.permute.xlu0 %1457
    %v1460 = vmul.f32 %v1442, %v1458
    %s1461 = scalar_lea.vmem [#allocation3], 8
    %v1462 = vld [vmem:[%s1461] sm:$0xff]
    %v1463 = vadd.f32 %v1462, %v1432
    %v1464 = vxor.u32 %v1463, 2147483648
    %v1465 = vmul.f32 %v1464, 1.442695
    %v1466 = vpow.pop %v1465
    %v1467 = vadd.f32 %v1466, 1.0
    %v1468 = vrcp.pop %v1467
    %v1469 = vmul.f32 1.0, %v1468
    %v1470 = vtanh.pop %v1463
    %v1471 = vmul.f32 %v1469, %v1332
    %1473 = vrot.lane.b32.xlu0 %v1470, 64
    %v1474 = vpop.permute.xlu0 %1473
    %v1476 = vmul.f32 %v1469, %v1474
    %1478 = vrot.lane.b32.xlu0 %v1476, 32
    %v1479 = vpop.permute.xlu0 %1478
    %v1481 = vadd.f32 %v1471, %v1479
    %v1482 = vtanh.pop %v1481
    %1484 = vrot.lane.b32.xlu0 %v1482, 64
    %v1485 = vpop.permute.xlu0 %1484
    %v1487 = vmul.f32 %v1469, %v1485
    %v1488 = vld [vmem:[%s620] sm:$0xff]
    %vm1489 = vcmp.gt.f32.partialorder %v1488, 0.0
    %v1490 = vld [vmem:[%s617] sm:$0xff]
    %vm1491 = vcmp.gt.f32.partialorder %v1490, 0.0
    %v1492 = vsel %vm1489, 1, 0
    %1493 = vset.pattern.permute.xlu0 0
    %1494 = vperm.xlu0 %1493, %v1492
    %v1495 = vpop.permute.xlu0 %1494
    %vm1496 = vcmp.eq.s32.totalorder %v1495, 1
    %v1497 = vsel %vm1496, %v1460, %v1324
    %v1498 = vsel %vm1496, %v1454, %v1325
    %v1499 = vsel %vm1491, 1, 0
    %1500 = vset.pattern.permute.xlu0 0
    %1501 = vperm.xlu0 %1500, %v1499
    %v1502 = vpop.permute.xlu0 %1501
    %vm1503 = vcmp.eq.s32.totalorder %v1502, 1
    %v1504 = vsel %vm1503, %v1487, %v1331
    %v1505 = vsel %vm1503, %v1481, %v1332
    %v1506 = vpack.c.bf16 %v1497, %v1497
    %v1508 = vunpack.c.l.b16 %v1506
    %v1509 = vpack.c.b16 %v1508, %v1508
    %1510 = vrot.lane.b32.xlu0 %v1509, 32
    %v1511 = vpop.permute.xlu0 %1510
    %s1513 = scalar_lea.vmem [#allocation4], 24
    %1514 = vst.msk [vmem:[%s1513] sm:$0xf] %vm469, %v1511
    %v1515 = vpack.c.bf16 %v1504, %v1504
    %v1517 = vunpack.c.l.b16 %v1515
    %v1518 = vpack.c.b16 %v1517, %v1517
    %1519 = vrot.lane.b32.xlu0 %v1518, 32
    %v1520 = vpop.permute.xlu0 %1519
    %s1522 = scalar_lea.vmem [#allocation5], 4
    %1523 = vst.msk [vmem:[%s1522] sm:$0xf] %vm469, %v1520
    %1525 = vrot.lane.b32.xlu0 %v1497, 32
    %v1526 = vpop.permute.xlu0 %1525
    %1529 = vrot.lane.b32.xlu0 %v1504, 64
    %v1530 = vpop.permute.xlu0 %1529
    %v1532 = vsel %vm117, %v1526, %v1530
    %v1534 = vsel %vm315, %v1532, 0
    %1536 = vmatprep.subr.mxu0 %v300
    %1537 = vmatpush1.msra.mxu0 %v299
    %1538 = vmatprep.subr.mxu0 %v302
    %1539 = vmatpush1.msra.mxu0 %v301
    %1540 = vmatprep.subr.mxu0 %v304
    %1541 = vmatpush1.msra.mxu0 %v303
    %1542 = vmatprep.subr.mxu0 %v306
    %1543 = vmatpush1.msra.mxu0 %v305
    %1544 = vmatprep.subr.mxu0 %v308
    %1545 = vmatpush1.msra.mxu0 %v307
    %1546 = vmatprep.subr.mxu0 %v310
    %1547 = vmatpush1.msra.mxu0 %v309
    %1548 = vmatprep.subr.mxu0 %v312
    %1549 = vmatpush1.msra.mxu0 %v311
    %1550 = vmatprep.subr.mxu0 %v314
    %1551 = vmatpush1.msra.mxu0 %v313
    %1552 = vmatprep.subr.mxu0 0.0
    %1553 = vmatpush1.msra.mxu0 0.0
    %1554 = vmatprep.subr.mxu0 0.0
    %1555 = vmatpush1.msra.mxu0 0.0
    %1556 = vmatprep.subr.mxu0 0.0
    %1557 = vmatpush1.msra.mxu0 0.0
    %1558 = vmatprep.subr.mxu0 0.0
    %1559 = vmatpush1.msra.mxu0 0.0
    %1560 = vmatprep.subr.mxu0 0.0
    %1561 = vmatpush1.msra.mxu0 0.0
    %1562 = vmatprep.subr.mxu0 0.0
    %1563 = vmatpush1.msra.mxu0 0.0
    %1564 = vmatprep.subr.mxu0 0.0
    %1565 = vmatpush1.msra.mxu0 0.0
    %1566 = vmatprep.subr.mxu0 0.0
    %1567 = vmatpush1.msra.mxu0 0.0
    %1568 = vmatprep.subr.mxu0 0.0
    %1569 = vmatpush1.msra.mxu0 0.0
    %1570 = vmatprep.subr.mxu0 0.0
    %1571 = vmatpush1.msra.mxu0 0.0
    %1572 = vmatprep.subr.mxu0 0.0
    %1573 = vmatpush1.msra.mxu0 0.0
    %1574 = vmatprep.subr.mxu0 0.0
    %1575 = vmatpush1.msra.mxu0 0.0
    %1576 = vmatprep.subr.mxu0 0.0
    %1577 = vmatpush1.msra.mxu0 0.0
    %1578 = vmatprep.subr.mxu0 0.0
    %1579 = vmatpush1.msra.mxu0 0.0
    %1580 = vmatprep.subr.mxu0 0.0
    %1581 = vmatpush1.msra.mxu0 0.0
    %1582 = vmatprep.subr.mxu0 0.0
    %1583 = vmatpush1.msra.mxu0 0.0
    %1584 = vmatprep.subr.mxu0 0.0
    %1585 = vmatpush1.msra.mxu0 0.0
    %1586 = vmatprep.subr.mxu0 0.0
    %1587 = vmatpush1.msra.mxu0 0.0
    %1588 = vmatprep.subr.mxu0 0.0
    %1589 = vmatpush1.msra.mxu0 0.0
    %1590 = vmatprep.subr.mxu0 0.0
    %1591 = vmatpush1.msra.mxu0 0.0
    %1592 = vmatprep.subr.mxu0 0.0
    %1593 = vmatpush1.msra.mxu0 0.0
    %1594 = vmatprep.subr.mxu0 0.0
    %1595 = vmatpush1.msra.mxu0 0.0
    %1596 = vmatprep.subr.mxu0 0.0
    %1597 = vmatpush1.msra.mxu0 0.0
    %1598 = vmatprep.subr.mxu0 0.0
    %1599 = vmatpush1.msra.mxu0 0.0
    %1600 = vmatprep.mubr.f32.mxu0 0.0
    %1601 = vmatmul.mubr.f32.gmra.mrb[0].mxu0 %v1534
    %v1602 = vpop.f32.mrb[0].mxu0
    %v1603 = vadd.f32 0.0, %v1602
    %v1604 = vpop.f32.mrb[0].mxu0
    %v1605 = vadd.f32 0.0, %v1604
    %1606 = vdwg.mxu0
    %s1607 = scalar_lea.vmem [#allocation2], 56
    %v1608 = vld [vmem:[%s1607] sm:$0xff]
    %v1609 = vadd.f32 %v1608, %v1603
    %v1610 = vxor.u32 %v1609, 2147483648
    %v1611 = vmul.f32 %v1610, 1.442695
    %v1612 = vpow.pop %v1611
    %v1613 = vadd.f32 %v1612, 1.0
    %v1614 = vrcp.pop %v1613
    %v1615 = vmul.f32 1.0, %v1614
    %v1616 = vtanh.pop %v1609
    %v1617 = vmul.f32 %v1615, %v1498
    %1619 = vrot.lane.b32.xlu0 %v1616, 64
    %v1620 = vpop.permute.xlu0 %1619
    %v1622 = vmul.f32 %v1615, %v1620
    %1624 = vrot.lane.b32.xlu0 %v1622, 32
    %v1625 = vpop.permute.xlu0 %1624
    %v1627 = vadd.f32 %v1617, %v1625
    %v1628 = vtanh.pop %v1627
    %1630 = vrot.lane.b32.xlu0 %v1628, 64
    %v1631 = vpop.permute.xlu0 %1630
    %v1633 = vmul.f32 %v1615, %v1631
    %v1634 = vld [vmem:[#allocation3] sm:$0xff]
    %v1635 = vadd.f32 %v1634, %v1605
    %v1636 = vxor.u32 %v1635, 2147483648
    %v1637 = vmul.f32 %v1636, 1.442695
    %v1638 = vpow.pop %v1637
    %v1639 = vadd.f32 %v1638, 1.0
    %v1640 = vrcp.pop %v1639
    %v1641 = vmul.f32 1.0, %v1640
    %v1642 = vtanh.pop %v1635
    %v1643 = vmul.f32 %v1641, %v1505
    %1645 = vrot.lane.b32.xlu0 %v1642, 64
    %v1646 = vpop.permute.xlu0 %1645
    %v1648 = vmul.f32 %v1641, %v1646
    %1650 = vrot.lane.b32.xlu0 %v1648, 32
    %v1651 = vpop.permute.xlu0 %1650
    %v1653 = vadd.f32 %v1643, %v1651
    %v1654 = vtanh.pop %v1653
    %1656 = vrot.lane.b32.xlu0 %v1654, 64
    %v1657 = vpop.permute.xlu0 %1656
    %v1659 = vmul.f32 %v1641, %v1657
    %v1660 = vld [vmem:[%s445] sm:$0xff]
    %vm1661 = vcmp.gt.f32.partialorder %v1660, 0.0
    %v1662 = vld [vmem:[%s1] sm:$0xff]
    %vm1663 = vcmp.gt.f32.partialorder %v1662, 0.0
    %v1664 = vsel %vm1661, 1, 0
    %1665 = vset.pattern.permute.xlu0 0
    %1666 = vperm.xlu0 %1665, %v1664
    %v1667 = vpop.permute.xlu0 %1666
    %vm1668 = vcmp.eq.s32.totalorder %v1667, 1
    %v1669 = vsel %vm1668, %v1633, %v1497
    %v1670 = vsel %vm1663, 1, 0
    %1671 = vset.pattern.permute.xlu0 0
    %1672 = vperm.xlu0 %1671, %v1670
    %v1673 = vpop.permute.xlu0 %1672
    %vm1674 = vcmp.eq.s32.totalorder %v1673, 1
    %v1675 = vsel %vm1674, %v1659, %v1504
    %v1676 = vpack.c.bf16 %v1669, %v1669
    %v1678 = vunpack.c.l.b16 %v1676
    %v1679 = vpack.c.b16 %v1678, %v1678
    %1680 = vrot.lane.b32.xlu0 %v1679, 32
    %v1681 = vpop.permute.xlu0 %1680
    %s1683 = scalar_lea.vmem [#allocation4], 28
    %1684 = vst.msk [vmem:[%s1683] sm:$0xf] %vm469, %v1681
    %v1685 = vpack.c.bf16 %v1675, %v1675
    %v1687 = vunpack.c.l.b16 %v1685
    %v1688 = vpack.c.b16 %v1687, %v1687
    %1689 = vrot.lane.b32.xlu0 %v1688, 32
    %v1690 = vpop.permute.xlu0 %1689
    %1692 = vst.msk [vmem:[#allocation5] sm:$0xf] %vm469, %v1690
    %v1693 = vld [vmem:[#allocation4] sm:$0xf]
    %v1694 = vld [vmem:[#allocation4 + $0x4] sm:$0xf]
    %v1695 = vld [vmem:[#allocation4 + $0x8] sm:$0xf]
    %v1696 = vld [vmem:[#allocation4 + $0xc] sm:$0xf]
    %v1697 = vld [vmem:[#allocation4 + $0x10] sm:$0xf]
    %v1698 = vld [vmem:[#allocation4 + $0x14] sm:$0xf]
    %v1699 = vld [vmem:[#allocation4 + $0x18] sm:$0xf]
    %v1700 = vld [vmem:[#allocation4 + $0x1c] sm:$0xf]
    %v1701 = vld [vmem:[#allocation5] sm:$0xf]
    %v1702 = vld [vmem:[#allocation5 + $0x4] sm:$0xf]
    %v1703 = vld [vmem:[#allocation5 + $0x8] sm:$0xf]
    %v1704 = vld [vmem:[#allocation5 + $0xc] sm:$0xf]
    %v1705 = vld [vmem:[#allocation5 + $0x10] sm:$0xf]
    %v1706 = vld [vmem:[#allocation5 + $0x14] sm:$0xf]
    %v1707 = vld [vmem:[#allocation5 + $0x18] sm:$0xf]
    %v1708 = vld [vmem:[#allocation5 + $0x1c] sm:$0xf]
    %v1709 = vld [vmem:[%s8] sm:$0xf]
    %v1710 = vld [vmem:[%s8 + $0x4] sm:$0xf]
    %v1711 = vld [vmem:[%s8 + $0x8] sm:$0xf]
    %v1712 = vld [vmem:[%s8 + $0xc] sm:$0xf]
    %v1713 = vld [vmem:[%s9] sm:$0xf]
    %v1714 = vld [vmem:[%s9 + $0x4] sm:$0xf]
    %v1715 = vld [vmem:[%s9 + $0x8] sm:$0xf]
    %v1716 = vld [vmem:[%s9 + $0xc] sm:$0xf]
    %v1725 = vunpack.c.l.b16 %v1701
    %v1726 = vunpack.c.l.b16 %v1702
    %v1727 = vunpack.c.l.b16 %v1703
    %v1728 = vunpack.c.l.b16 %v1704
    %v1729 = vunpack.c.l.b16 %v1705
    %v1730 = vunpack.c.l.b16 %v1706
    %v1731 = vunpack.c.l.b16 %v1707
    %v1732 = vunpack.c.l.b16 %v1708
    %v1733 = vpack.c.b16 %v1726, %v1725
    %v1734 = vpack.c.b16 %v1728, %v1727
    %v1735 = vpack.c.b16 %v1730, %v1729
    %v1736 = vpack.c.b16 %v1732, %v1731
    %v1741 = vunpack.c.l.b16 %v1713
    %v1742 = vunpack.c.l.b16 %v1714
    %v1743 = vunpack.c.l.b16 %v1715
    %v1744 = vunpack.c.l.b16 %v1716
    %v1745 = vpack.c.b16 %v1742, %v1741
    %v1746 = vpack.c.b16 %v1744, %v1743
    %v1750 = vsel %vm117, %v1733, 0
    %v1753 = vsel %vm117, %v1734, 0
    %v1756 = vsel %vm117, %v1735, 0
    %v1759 = vsel %vm117, %v1736, 0
    %1761 = vmatprep.subr.bf16.mxu0 0
    %1762 = vmatpush1.bf16.msra.mxu0 %v1745
    %1763 = vmatprep.subr.bf16.mxu0 0
    %1764 = vmatpush1.bf16.msra.mxu0 %v1746
    %1765 = vmatprep.subr.bf16.mxu0 0
    %1766 = vmatpush1.bf16.msra.mxu0 0
    %1767 = vmatprep.subr.bf16.mxu0 0
    %1768 = vmatpush1.bf16.msra.mxu0 0
    %1769 = vmatprep.subr.bf16.mxu0 0
    %1770 = vmatpush1.bf16.msra.mxu0 0
    %1771 = vmatprep.subr.bf16.mxu0 0
    %1772 = vmatpush1.bf16.msra.mxu0 0
    %1773 = vmatprep.subr.bf16.mxu0 0
    %1774 = vmatpush1.bf16.msra.mxu0 0
    %1775 = vmatprep.subr.bf16.mxu0 0
    %1776 = vmatpush1.bf16.msra.mxu0 0
    %1777 = vmatprep.subr.bf16.mxu0 0
    %1778 = vmatpush1.bf16.msra.mxu0 0
    %1779 = vmatprep.subr.bf16.mxu0 0
    %1780 = vmatpush1.bf16.msra.mxu0 0
    %1781 = vmatprep.subr.bf16.mxu0 0
    %1782 = vmatpush1.bf16.msra.mxu0 0
    %1783 = vmatprep.subr.bf16.mxu0 0
    %1784 = vmatpush1.bf16.msra.mxu0 0
    %1785 = vmatprep.subr.bf16.mxu0 0
    %1786 = vmatpush1.bf16.msra.mxu0 0
    %1787 = vmatprep.subr.bf16.mxu0 0
    %1788 = vmatpush1.bf16.msra.mxu0 0
    %1789 = vmatprep.subr.bf16.mxu0 0
    %1790 = vmatpush1.bf16.msra.mxu0 0
    %1791 = vmatprep.subr.bf16.mxu0 0
    %1792 = vmatpush1.bf16.msra.mxu0 0
    %1793 = vmatprep.mubr.bf16.mxu0 0
    %1794 = vmatmul.mubr.bf16.gmra.mrb[0].mxu0 %v1750
    %v1795 = vpop.f32.mrb[0].mxu0
    %v1796 = vadd.f32 0.0, %v1795
    %v1797 = vpop.f32.mrb[0].mxu0
    %v1798 = vpop.f32.mrb[0].mxu0
    %v1799 = vadd.f32 0.0, %v1798
    %v1800 = vpop.f32.mrb[0].mxu0
    %1801 = vmatprep.mubr.bf16.mxu0 0
    %1802 = vmatmul.mubr.bf16.gmra.mrb[0].mxu0 %v1753
    %v1803 = vpop.f32.mrb[0].mxu0
    %v1804 = vadd.f32 0.0, %v1803
    %v1805 = vpop.f32.mrb[0].mxu0
    %v1806 = vpop.f32.mrb[0].mxu0
    %v1807 = vadd.f32 0.0, %v1806
    %v1808 = vpop.f32.mrb[0].mxu0
    %1809 = vmatprep.mubr.bf16.mxu0 0
    %1810 = vmatmul.mubr.bf16.gmra.mrb[0].mxu0 %v1756
    %v1811 = vpop.f32.mrb[0].mxu0
    %v1812 = vadd.f32 0.0, %v1811
    %v1813 = vpop.f32.mrb[0].mxu0
    %v1814 = vpop.f32.mrb[0].mxu0
    %v1815 = vadd.f32 0.0, %v1814
    %v1816 = vpop.f32.mrb[0].mxu0
    %1817 = vmatprep.mubr.bf16.mxu0 0
    %1818 = vmatmul.mubr.bf16.gmra.mrb[0].mxu0 %v1759
    %v1819 = vpop.f32.mrb[0].mxu0
    %v1820 = vadd.f32 0.0, %v1819
    %v1821 = vpop.f32.mrb[0].mxu0
    %v1822 = vpop.f32.mrb[0].mxu0
    %v1823 = vadd.f32 0.0, %v1822
    %v1824 = vpop.f32.mrb[0].mxu0
    %1825 = vdwg.mxu0
    %v1834 = vunpack.c.l.b16 %v1693
    %v1835 = vunpack.c.l.b16 %v1694
    %v1836 = vunpack.c.l.b16 %v1695
    %v1837 = vunpack.c.l.b16 %v1696
    %v1838 = vunpack.c.l.b16 %v1697
    %v1839 = vunpack.c.l.b16 %v1698
    %v1840 = vunpack.c.l.b16 %v1699
    %v1841 = vunpack.c.l.b16 %v1700
    %v1842 = vpack.c.b16 %v1835, %v1834
    %v1843 = vpack.c.b16 %v1837, %v1836
    %v1844 = vpack.c.b16 %v1839, %v1838
    %v1845 = vpack.c.b16 %v1841, %v1840
    %v1850 = vunpack.c.l.b16 %v1709
    %v1851 = vunpack.c.l.b16 %v1710
    %v1852 = vunpack.c.l.b16 %v1711
    %v1853 = vunpack.c.l.b16 %v1712
    %v1854 = vpack.c.b16 %v1851, %v1850
    %v1855 = vpack.c.b16 %v1853, %v1852
    %v1859 = vsel %vm117, %v1842, 0
    %v1862 = vsel %vm117, %v1843, 0
    %v1865 = vsel %vm117, %v1844, 0
    %v1868 = vsel %vm117, %v1845, 0
    %1870 = vmatprep.subr.bf16.mxu0 0
    %1871 = vmatpush1.bf16.msra.mxu0 %v1854
    %1872 = vmatprep.subr.bf16.mxu0 0
    %1873 = vmatpush1.bf16.msra.mxu0 %v1855
    %1874 = vmatprep.subr.bf16.mxu0 0
    %1875 = vmatpush1.bf16.msra.mxu0 0
    %1876 = vmatprep.subr.bf16.mxu0 0
    %1877 = vmatpush1.bf16.msra.mxu0 0
    %1878 = vmatprep.subr.bf16.mxu0 0
    %1879 = vmatpush1.bf16.msra.mxu0 0
    %1880 = vmatprep.subr.bf16.mxu0 0
    %1881 = vmatpush1.bf16.msra.mxu0 0
    %1882 = vmatprep.subr.bf16.mxu0 0
    %1883 = vmatpush1.bf16.msra.mxu0 0
    %1884 = vmatprep.subr.bf16.mxu0 0
    %1885 = vmatpush1.bf16.msra.mxu0 0
    %1886 = vmatprep.subr.bf16.mxu0 0
    %1887 = vmatpush1.bf16.msra.mxu0 0
    %1888 = vmatprep.subr.bf16.mxu0 0
    %1889 = vmatpush1.bf16.msra.mxu0 0
    %1890 = vmatprep.subr.bf16.mxu0 0
    %1891 = vmatpush1.bf16.msra.mxu0 0
    %1892 = vmatprep.subr.bf16.mxu0 0
    %1893 = vmatpush1.bf16.msra.mxu0 0
    %1894 = vmatprep.subr.bf16.mxu0 0
    %1895 = vmatpush1.bf16.msra.mxu0 0
    %1896 = vmatprep.subr.bf16.mxu0 0
    %1897 = vmatpush1.bf16.msra.mxu0 0
    %1898 = vmatprep.subr.bf16.mxu0 0
    %1899 = vmatpush1.bf16.msra.mxu0 0
    %1900 = vmatprep.subr.bf16.mxu0 0
    %1901 = vmatpush1.bf16.msra.mxu0 0
    %1902 = vmatprep.mubr.bf16.mxu0 0
    %1903 = vmatmul.mubr.bf16.gmra.mrb[0].mxu0 %v1859
    %v1904 = vpop.f32.mrb[0].mxu0
    %v1905 = vadd.f32 %v1796, %v1904
    %v1906 = vpop.f32.mrb[0].mxu0
    %v1907 = vpop.f32.mrb[0].mxu0
    %v1908 = vadd.f32 %v1799, %v1907
    %v1909 = vpop.f32.mrb[0].mxu0
    %1910 = vmatprep.mubr.bf16.mxu0 0
    %1911 = vmatmul.mubr.bf16.gmra.mrb[0].mxu0 %v1862
    %v1912 = vpop.f32.mrb[0].mxu0
    %v1913 = vadd.f32 %v1804, %v1912
    %v1914 = vpop.f32.mrb[0].mxu0
    %v1915 = vpop.f32.mrb[0].mxu0
    %v1916 = vadd.f32 %v1807, %v1915
    %v1917 = vpop.f32.mrb[0].mxu0
    %1918 = vmatprep.mubr.bf16.mxu0 0
    %1919 = vmatmul.mubr.bf16.gmra.mrb[0].mxu0 %v1865
    %v1920 = vpop.f32.mrb[0].mxu0
    %v1921 = vadd.f32 %v1812, %v1920
    %v1922 = vpop.f32.mrb[0].mxu0
    %v1923 = vpop.f32.mrb[0].mxu0
    %v1924 = vadd.f32 %v1815, %v1923
    %v1925 = vpop.f32.mrb[0].mxu0
    %1926 = vmatprep.mubr.bf16.mxu0 0
    %1927 = vmatmul.mubr.bf16.gmra.mrb[0].mxu0 %v1868
    %v1928 = vpop.f32.mrb[0].mxu0
    %v1929 = vadd.f32 %v1820, %v1928
    %v1930 = vpop.f32.mrb[0].mxu0
    %v1931 = vpop.f32.mrb[0].mxu0
    %v1932 = vadd.f32 %v1823, %v1931
    %v1933 = vpop.f32.mrb[0].mxu0
    %1934 = vdwg.mxu0
    %v1935 = vld [vmem:[%s10] sm:$0x1]
    %v1937 = vlaneseq
    %v1938 = vshrl.u32 %v1937, 7
    %v1939 = vsub.s32 0, %v1938
    %v1940 = vrot.slane %v1935, %v1939
    %v1942 = vadd.f32 %v1905, %v1940
    %v1943 = vadd.f32 %v1908, %v1940
    %v1944 = vadd.f32 %v1913, %v1940
    %v1945 = vadd.f32 %v1916, %v1940
    %v1946 = vadd.f32 %v1921, %v1940
    %v1947 = vadd.f32 %v1924, %v1940
    %v1948 = vadd.f32 %v1929, %v1940
    %v1949 = vadd.f32 %v1932, %v1940
    %v1950 = vlaneseq
    %v1951 = vand.u32 %v1950, 127
    %1952 = vmax.xlane.f32.xlu0 %v1942
    %v1953 = vpop.xlane.xlu0 %1952
    %1954 = vmax.xlane.f32.xlu0 %v1943
    %v1955 = vpop.xlane.xlu0 %1954
    %1956 = vmax.xlane.f32.xlu0 %v1944
    %v1957 = vpop.xlane.xlu0 %1956
    %1958 = vmax.xlane.f32.xlu0 %v1945
    %v1959 = vpop.xlane.xlu0 %1958
    %1960 = vmax.xlane.f32.xlu0 %v1946
    %v1961 = vpop.xlane.xlu0 %1960
    %1962 = vmax.xlane.f32.xlu0 %v1947
    %v1963 = vpop.xlane.xlu0 %1962
    %1964 = vmax.xlane.f32.xlu0 %v1948
    %v1965 = vpop.xlane.xlu0 %1964
    %1966 = vmax.xlane.f32.xlu0 %v1949
    %v1967 = vpop.xlane.xlu0 %1966
    %vm1968 = vcmp.eq.f32.partialorder %v1942, %v1953
    %vm1969 = vcmp.eq.f32.partialorder %v1943, %v1955
    %vm1970 = vcmp.eq.f32.partialorder %v1944, %v1957
    %vm1971 = vcmp.eq.f32.partialorder %v1945, %v1959
    %vm1972 = vcmp.eq.f32.partialorder %v1946, %v1961
    %vm1973 = vcmp.eq.f32.partialorder %v1947, %v1963
    %vm1974 = vcmp.eq.f32.partialorder %v1948, %v1965
    %vm1975 = vcmp.eq.f32.partialorder %v1949, %v1967
    %v1976 = vsel %vm1968, %v1951, 128
    %v1977 = vsel %vm1969, %v1951, 128
    %v1978 = vsel %vm1970, %v1951, 128
    %v1979 = vsel %vm1971, %v1951, 128
    %v1980 = vsel %vm1972, %v1951, 128
    %v1981 = vsel %vm1973, %v1951, 128
    %v1982 = vsel %vm1974, %v1951, 128
    %v1983 = vsel %vm1975, %v1951, 128
    %v1984 = vand.u32 %v1976, 65535
    %v1985 = vshra.s32 %v1976, 16
    %v1986 = vcvt.s32.f32 %v1984
    %v1987 = vcvt.s32.f32 %v1985
    %1988 = vmin.xlane.f32.xlu0 %v1987
    %v1989 = vpop.xlane.xlu0 %1988
    %vm1990 = vcmp.eq.f32.partialorder %v1987, %v1989
    %v1991 = vsel %vm1990, %v1986, inf
    %1992 = vmin.xlane.f32.xlu0 %v1991
    %v1993 = vpop.xlane.xlu0 %1992
    %v1994 = vcvt.f32.s32 %v1993
    %v1995 = vcvt.f32.s32 %v1989
    %v1996 = vshll.u32 %v1995, 16
    %v1997 = vadd.s32 %v1996, %v1994
    %v1998 = vand.u32 %v1977, 65535
    %v1999 = vshra.s32 %v1977, 16
    %v2000 = vcvt.s32.f32 %v1998
    %v2001 = vcvt.s32.f32 %v1999
    %2002 = vmin.xlane.f32.xlu0 %v2001
    %v2003 = vpop.xlane.xlu0 %2002
    %vm2004 = vcmp.eq.f32.partialorder %v2001, %v2003
    %v2005 = vsel %vm2004, %v2000, inf
    %2006 = vmin.xlane.f32.xlu0 %v2005
    %v2007 = vpop.xlane.xlu0 %2006
    %v2008 = vcvt.f32.s32 %v2007
    %v2009 = vcvt.f32.s32 %v2003
    %v2010 = vshll.u32 %v2009, 16
    %v2011 = vadd.s32 %v2010, %v2008
    %v2012 = vand.u32 %v1978, 65535
    %v2013 = vshra.s32 %v1978, 16
    %v2014 = vcvt.s32.f32 %v2012
    %v2015 = vcvt.s32.f32 %v2013
    %2016 = vmin.xlane.f32.xlu0 %v2015
    %v2017 = vpop.xlane.xlu0 %2016
    %vm2018 = vcmp.eq.f32.partialorder %v2015, %v2017
    %v2019 = vsel %vm2018, %v2014, inf
    %2020 = vmin.xlane.f32.xlu0 %v2019
    %v2021 = vpop.xlane.xlu0 %2020
    %v2022 = vcvt.f32.s32 %v2021
    %v2023 = vcvt.f32.s32 %v2017
    %v2024 = vshll.u32 %v2023, 16
    %v2025 = vadd.s32 %v2024, %v2022
    %v2026 = vand.u32 %v1979, 65535
    %v2027 = vshra.s32 %v1979, 16
    %v2028 = vcvt.s32.f32 %v2026
    %v2029 = vcvt.s32.f32 %v2027
    %2030 = vmin.xlane.f32.xlu0 %v2029
    %v2031 = vpop.xlane.xlu0 %2030
    %vm2032 = vcmp.eq.f32.partialorder %v2029, %v2031
    %v2033 = vsel %vm2032, %v2028, inf
    %2034 = vmin.xlane.f32.xlu0 %v2033
    %v2035 = vpop.xlane.xlu0 %2034
    %v2036 = vcvt.f32.s32 %v2035
    %v2037 = vcvt.f32.s32 %v2031
    %v2038 = vshll.u32 %v2037, 16
    %v2039 = vadd.s32 %v2038, %v2036
    %v2040 = vand.u32 %v1980, 65535
    %v2041 = vshra.s32 %v1980, 16
    %v2042 = vcvt.s32.f32 %v2040
    %v2043 = vcvt.s32.f32 %v2041
    %2044 = vmin.xlane.f32.xlu0 %v2043
    %v2045 = vpop.xlane.xlu0 %2044
    %vm2046 = vcmp.eq.f32.partialorder %v2043, %v2045
    %v2047 = vsel %vm2046, %v2042, inf
    %2048 = vmin.xlane.f32.xlu0 %v2047
    %v2049 = vpop.xlane.xlu0 %2048
    %v2050 = vcvt.f32.s32 %v2049
    %v2051 = vcvt.f32.s32 %v2045
    %v2052 = vshll.u32 %v2051, 16
    %v2053 = vadd.s32 %v2052, %v2050
    %v2054 = vand.u32 %v1981, 65535
    %v2055 = vshra.s32 %v1981, 16
    %v2056 = vcvt.s32.f32 %v2054
    %v2057 = vcvt.s32.f32 %v2055
    %2058 = vmin.xlane.f32.xlu0 %v2057
    %v2059 = vpop.xlane.xlu0 %2058
    %vm2060 = vcmp.eq.f32.partialorder %v2057, %v2059
    %v2061 = vsel %vm2060, %v2056, inf
    %2062 = vmin.xlane.f32.xlu0 %v2061
    %v2063 = vpop.xlane.xlu0 %2062
    %v2064 = vcvt.f32.s32 %v2063
    %v2065 = vcvt.f32.s32 %v2059
    %v2066 = vshll.u32 %v2065, 16
    %v2067 = vadd.s32 %v2066, %v2064
    %v2068 = vand.u32 %v1982, 65535
    %v2069 = vshra.s32 %v1982, 16
    %v2070 = vcvt.s32.f32 %v2068
    %v2071 = vcvt.s32.f32 %v2069
    %2072 = vmin.xlane.f32.xlu0 %v2071
    %v2073 = vpop.xlane.xlu0 %2072
    %vm2074 = vcmp.eq.f32.partialorder %v2071, %v2073
    %v2075 = vsel %vm2074, %v2070, inf
    %2076 = vmin.xlane.f32.xlu0 %v2075
    %v2077 = vpop.xlane.xlu0 %2076
    %v2078 = vcvt.f32.s32 %v2077
    %v2079 = vcvt.f32.s32 %v2073
    %v2080 = vshll.u32 %v2079, 16
    %v2081 = vadd.s32 %v2080, %v2078
    %v2082 = vand.u32 %v1983, 65535
    %v2083 = vshra.s32 %v1983, 16
    %v2084 = vcvt.s32.f32 %v2082
    %v2085 = vcvt.s32.f32 %v2083
    %2086 = vmin.xlane.f32.xlu0 %v2085
    %v2087 = vpop.xlane.xlu0 %2086
    %vm2088 = vcmp.eq.f32.partialorder %v2085, %v2087
    %v2089 = vsel %vm2088, %v2084, inf
    %2090 = vmin.xlane.f32.xlu0 %v2089
    %v2091 = vpop.xlane.xlu0 %2090
    %v2092 = vcvt.f32.s32 %v2091
    %v2093 = vcvt.f32.s32 %v2087
    %v2094 = vshll.u32 %v2093, 16
    %v2095 = vadd.s32 %v2094, %v2092
    %v2096 = vld [vmem:[#allocation6] sm:$0xff]
    %v2097 = vlaneseq
    %v2098 = vshrl.u32 %v2097, 7
    %v2099 = vsub.s32 %v1951, %v2098
    %v2100 = vrot.slane %v1997, %v2099
    %v2101 = vlaneseq
    %v2102 = vshrl.u32 %v2101, 7
    %v2103 = vsub.s32 %v1951, %v2102
    %v2104 = vrot.slane %v2011, %v2103
    %v2105 = vlaneseq
    %v2106 = vshrl.u32 %v2105, 7
    %v2107 = vsub.s32 %v1951, %v2106
    %v2108 = vrot.slane %v2025, %v2107
    %v2109 = vlaneseq
    %v2110 = vshrl.u32 %v2109, 7
    %v2111 = vsub.s32 %v1951, %v2110
    %v2112 = vrot.slane %v2039, %v2111
    %v2113 = vlaneseq
    %v2114 = vshrl.u32 %v2113, 7
    %v2115 = vsub.s32 %v1951, %v2114
    %v2116 = vrot.slane %v2053, %v2115
    %v2117 = vlaneseq
    %v2118 = vshrl.u32 %v2117, 7
    %v2119 = vsub.s32 %v1951, %v2118
    %v2120 = vrot.slane %v2067, %v2119
    %v2121 = vlaneseq
    %v2122 = vshrl.u32 %v2121, 7
    %v2123 = vsub.s32 %v1951, %v2122
    %v2124 = vrot.slane %v2081, %v2123
    %v2125 = vlaneseq
    %v2126 = vshrl.u32 %v2125, 7
    %v2127 = vsub.s32 %v1951, %v2126
    %v2128 = vrot.slane %v2095, %v2127
    %vm2129 = vcmask 1041409
    %v2130 = vsel %vm2129, %v2104, %v2100
    %vm2131 = vcmask 1042434
    %v2132 = vsel %vm2131, %v2108, %v2130
    %vm2133 = vcmask 1043459
    %v2134 = vsel %vm2133, %v2112, %v2132
    %vm2135 = vcmask 1044484
    %v2136 = vsel %vm2135, %v2116, %v2134
    %vm2137 = vcmask 1045509
    %v2138 = vsel %vm2137, %v2120, %v2136
    %vm2139 = vcmask 1046534
    %v2140 = vsel %vm2139, %v2124, %v2138
    %vm2141 = vcmask 1047559
    %v2142 = vsel %vm2141, %v2128, %v2140
    %2143 = vxpose.xlu0.b32.start [1/16] %v2142, 128
    %2144 = vxpose.xlu0.b32.cont [2/16] 0, 128
    %2145 = vxpose.xlu0.b32.cont [3/16] 0, 128
    %2146 = vxpose.xlu0.b32.cont [4/16] 0, 128
    %2147 = vxpose.xlu0.b32.cont [5/16] 0, 128
    %2148 = vxpose.xlu0.b32.cont [6/16] 0, 128
    %2149 = vxpose.xlu0.b32.cont [7/16] 0, 128
    %2150 = vxpose.xlu0.b32.cont [8/16] 0, 128
    %2151 = vxpose.xlu0.b32.cont [9/16] 0, 128
    %2152 = vxpose.xlu0.b32.cont [10/16] 0, 128
    %2153 = vxpose.xlu0.b32.cont [11/16] 0, 128
    %2154 = vxpose.xlu0.b32.cont [12/16] 0, 128
    %2155 = vxpose.xlu0.b32.cont [13/16] 0, 128
    %2156 = vxpose.xlu0.b32.cont [14/16] 0, 128
    %2157 = vxpose.xlu0.b32.cont [15/16] 0, 128
    %2158 = vxpose.xlu0.b32.end [16/16] 0, 128
    %v2159 = vpop.trf.xlu0
    %v2160 = vpop.trf.xlu0
    %v2161 = vpop.trf.xlu0
    %v2162 = vpop.trf.xlu0
    %v2163 = vpop.trf.xlu0
    %v2164 = vpop.trf.xlu0
    %v2165 = vpop.trf.xlu0
    %v2166 = vpop.trf.xlu0
    %v2167 = vpop.trf.xlu0
    %v2168 = vpop.trf.xlu0
    %v2169 = vpop.trf.xlu0
    %v2170 = vpop.trf.xlu0
    %v2171 = vpop.trf.xlu0
    %v2172 = vpop.trf.xlu0
    %v2173 = vpop.trf.xlu0
    %v2174 = vpop.trf.xlu0
    %v2175 = vmul.u32 %v2096, %v2159
    %vm2176 = vcmask 64512
    %2177 = vst.msk [vmem:[#allocation11] sm:$0xff] %vm2176, %v2175
    // Predicated region
    $region54: #{tpu_custom_call.1} parent=1 // pred_check
      _
    $region55: #{tpu_custom_call.1} parent=1 // pred_check_branch
      %2179 = sbr.rel (0) target = $region57
    $region56: #{tpu_custom_call.1} parent=1 // pred_region
      %s2181 = ssub.s32 128, 128
      %2182 = vsyncadd [#allocation8], %s2181
      %s2184 = sshll.u32 [#allocation11], 4
      %s2185 = int_to_ptr.vmem [resolvable:$true] %s2184
      %2187 = dma.vmem_to_hbm [thread:$0]  %s2185, 128, %s11, [#allocation8]
    $region57: #{tpu_custom_call.1} parent=1 // pred_fallthru
      _
    // Predicated region
    $region58: #{tpu_custom_call.1} parent=1 // pred_check
      _
    $region59: #{tpu_custom_call.1} parent=1 // pred_check_branch
      %2189 = sbr.rel (0) target = $region61
    $region60: #{tpu_custom_call.1} parent=1 // pred_region
      %2190 = dma.done [#allocation8], 128
    $region61: #{tpu_custom_call.1} parent=1 // pred_fallthru
      _
    %2191 = vsyncpa [#allocation7], 1
    %2192 = vsyncpa [#allocation10], 1
    %2193 = vsyncpa [#allocation8], 1

</llo_original>
